<compile_context>
chip_gen: v6e
topology: v6e:2x2x1
jax: 0.10.0
libtpu: 0.0.40
codegen_flags: <defaults>
</compile_context>

<pallas_src>
import jax
import jax.numpy as jnp
from jax.experimental import pallas as pl
from jax.experimental.pallas import tpu as pltpu

D_MODEL = 32
NHEAD = 4
HEAD_DIM = D_MODEL // NHEAD
LN_EPS = 1e-5

# Column offsets inside the packed [C, 8C] input-weight slab.
COL_SA_QKV = 0                 # width 3C : self-attn fused q|k|v (q pre-scaled)
COL_CA_Q = 3 * D_MODEL         # width  C : cross-attn q (pre-scaled)
COL_CA_KV = 4 * D_MODEL        # width 2C : cross-attn fused k|v
COL_W1 = 6 * D_MODEL           # width 2C : MLP first linear
W_IN_COLS = 8 * D_MODEL        # = 256, lane-dense (multiple of 128)


# ---------------------------------------------------------------- kernel math --


def _layernorm(x, gamma, beta):
    mu = jnp.mean(x, axis=-1, keepdims=True)
    xc = x - mu
    var = jnp.mean(xc * xc, axis=-1, keepdims=True)
    return xc * jax.lax.rsqrt(var + LN_EPS) * gamma + beta


def _attention_heads(q, k, v, wm3):
    """Head-batched softmax attention.

    q: [L, C] (1/sqrt(head_dim) already folded into the projection),
    k, v: [S, C], wm3: [H, D, C] merge weight.  Returns [L, C].
    """
    L = q.shape[0]
    S = k.shape[0]
    qh = q.reshape(L, NHEAD, HEAD_DIM)
    kh = k.reshape(S, NHEAD, HEAD_DIM)
    vh = v.reshape(S, NHEAD, HEAD_DIM)
    # Scores / softmax / context, batched over heads (no per-head Python loop).
    s = jnp.einsum("lhd,shd->hls", qh, kh, preferred_element_type=jnp.float32)
    s = s - jnp.max(s, axis=-1, keepdims=True)          # stability
    p = jnp.exp(s)
    denom = jnp.sum(p, axis=-1, keepdims=True)
    p = p * pl.reciprocal(denom, approx=True)            # EUP, not VALU divide
    ctx = jnp.einsum("hls,shd->hld", p, vh, preferred_element_type=jnp.float32)
    # Merge projection as batched einsum + head-sum (replaces concat + matmul).
    merged = jnp.einsum("hld,hdc->hlc", ctx, wm3,
                        preferred_element_type=jnp.float32)
    return jnp.sum(merged, axis=0)                        # [L, C]


# -------------------------------------------------------------------- kernel --


def decoder_layer_kernel(tgt_ref, mem_ref, ln_ref, w_in_ref, wm_ref, w2_ref,
                         out_ref):
    C = D_MODEL
    # Shared parameters — loaded once, reused across the (unrolled) batch loop.
    ln = ln_ref[...].astype(jnp.float32)        # [6, C]
    w_in = w_in_ref[...].astype(jnp.float32)    # [C, 8C]
    wm = wm_ref[...].astype(jnp.float32)        # [2, H, D, C]
    w2 = w2_ref[...].astype(jnp.float32)        # [2C, C]

    g1, b1 = ln[0:1, :], ln[1:2, :]
    g2, b2 = ln[2:3, :], ln[3:4, :]
    g3, b3 = ln[4:5, :], ln[5:6, :]

    bN = tgt_ref.shape[0]
    for b in range(bN):                          # static (tiny) batch unroll
        t = tgt_ref[b].astype(jnp.float32)       # [L, C]
        m = mem_ref[b].astype(jnp.float32)       # [S, C]

        # --- self-attention block (dropout1 = identity) ----------------------
        t2 = _layernorm(t, g1, b1)
        qkv = jnp.dot(t2, w_in[:, COL_SA_QKV:COL_SA_QKV + 3 * C],
                      preferred_element_type=jnp.float32)        # [L, 3C]
        t = t + _attention_heads(qkv[:, 0:C], qkv[:, C:2 * C],
                                 qkv[:, 2 * C:3 * C], wm[0])

        # --- cross-attention block (dropout2 = identity) ---------------------
        t2 = _layernorm(t, g2, b2)
        q = jnp.dot(t2, w_in[:, COL_CA_Q:COL_CA_Q + C],
                    preferred_element_type=jnp.float32)          # [L, C]
        kv = jnp.dot(m, w_in[:, COL_CA_KV:COL_CA_KV + 2 * C],
                     preferred_element_type=jnp.float32)         # [S, 2C]
        t = t + _attention_heads(q, kv[:, 0:C], kv[:, C:2 * C], wm[1])

        # --- MLP block (dropout3 = identity) ---------------------------------
        t2 = _layernorm(t, g3, b3)
        h = jnp.maximum(jnp.dot(t2, w_in[:, COL_W1:COL_W1 + 2 * C],
                                preferred_element_type=jnp.float32), 0.0)
        t = t + jnp.dot(h, w2, preferred_element_type=jnp.float32)

        out_ref[b] = t.astype(out_ref.dtype)


# ----------------------------------------------------------- packing & wrapper --


def pack_params(params):
    """Pack the 16 module parameters into 4 lane-dense slabs for the kernel."""
    (g1, b1, g2, b2, g3, b3,
     saq, sak, sav, sam,
     caq, cak, cav, cam,
     w1, w2) = params
    C = D_MODEL
    scale = 1.0 / (HEAD_DIM ** 0.5)
    ln_slab = jnp.concatenate([g1, b1, g2, b2, g3, b3], axis=0)        # [6, C]
    # q weights pre-scaled by 1/sqrt(head_dim) — mathematically identical to
    # scaling the score matrix, but free at runtime.
    w_in = jnp.concatenate([saq * scale, sak, sav,
                            caq * scale, cak, cav, w1], axis=1)        # [C, 8C]
    wm_stack = jnp.stack([sam.reshape(NHEAD, HEAD_DIM, C),
                          cam.reshape(NHEAD, HEAD_DIM, C)], axis=0)    # [2,H,D,C]
    return ln_slab, w_in, wm_stack, w2


def _batch_block(n):
    """Batch rows handled per grid step (chip-aware)."""
    try:
        kind = jax.devices()[0].device_kind.lower()
    except Exception:  # pragma: no cover - defensive
        kind = ""
    if "v7" in kind or "7x" in kind:
        return 1    # v7x: 2 TensorCores -> shard the batch axis across cores
    return n        # v5e/v6e: single TC -> fold batch into one grid step


def decoder_layer(tgt, memory, params):
    N, L, C = tgt.shape
    _, S, _ = memory.shape
    ln_slab, w_in, wm_stack, w2 = pack_params(params)

    bN = _batch_block(N)
    grid = (N // bN,)

    def fixed(shape):
        nd = len(shape)
        return pl.BlockSpec(shape, lambda b, _nd=nd: (0,) * _nd)

    in_specs = [
        pl.BlockSpec((bN, L, C), lambda b: (b, 0, 0)),
        pl.BlockSpec((bN, S, C), lambda b: (b, 0, 0)),
        fixed(ln_slab.shape),
        fixed(w_in.shape),
        fixed(wm_stack.shape),
        fixed(w2.shape),
    ]

    return pl.pallas_call(
        decoder_layer_kernel,
        out_shape=jax.ShapeDtypeStruct((N, L, C), tgt.dtype),
        grid_spec=pltpu.PrefetchScalarGridSpec(
            num_scalar_prefetch=0,
            grid=grid,
            in_specs=in_specs,
            out_specs=pl.BlockSpec((bN, L, C), lambda b: (b, 0, 0)),
        ),
        compiler_params=pltpu.CompilerParams(
            dimension_semantics=("parallel",)),   # enables megacore on v7x
    )(tgt, memory, ln_slab, w_in, wm_stack, w2)


# -------------------------------------------------------- params & reference --


def init_params(key):
    """Deterministic parameter init mirroring the PyTorch module's shapes."""
    ks = jax.random.split(key, 10)

    def lin(k, fan_in, fan_out):
        # nn.Linear default U(-1/sqrt(fan_in), 1/sqrt(fan_in)); stored
        # pre-transposed as [in, out].
        bound = 1.0 / (fan_in ** 0.5)
        return jax.random.uniform(k, (fan_in, fan_out), jnp.float32,
                                  -bound, bound)

    C = D_MODEL
    ones = jnp.ones((1, C), jnp.float32)
    zeros = jnp.zeros((1, C), jnp.float32)
    params = [
        ones, zeros,            # norm1
        ones, zeros,            # norm2
        ones, zeros,            # norm3
        lin(ks[0], C, C), lin(ks[1], C, C), lin(ks[2], C, C), lin(ks[3], C, C),  # self_attn q/k/v/merge
        lin(ks[4], C, C), lin(ks[5], C, C), lin(ks[6], C, C), lin(ks[7], C, C),  # multihead_attn q/k/v/merge
        lin(ks[8], C, 2 * C), lin(ks[9], 2 * C, C),                              # mlp
    ]
    return params


def _ref_mha(q_in, k_in, v_in, wq, wk, wv, wm):
    """Plain per-head reference attention (independent of kernel packing)."""
    q = jnp.dot(q_in, wq)
    k = jnp.dot(k_in, wk)
    v = jnp.dot(v_in, wv)
    scale = 1.0 / (HEAD_DIM ** 0.5)
    outs = []
    for h in range(NHEAD):
        lo, hi = h * HEAD_DIM, (h + 1) * HEAD_DIM
        s = jnp.dot(q[:, lo:hi], k[:, lo:hi].T) * scale
        p = jax.nn.softmax(s, axis=-1)
        outs.append(jnp.dot(p, v[:, lo:hi]))
    return jnp.dot(jnp.concatenate(outs, axis=-1), wm)


def reference(tgt, memory, params):
    (g1, b1, g2, b2, g3, b3,
     saq, sak, sav, sam,
     caq, cak, cav, cam,
     w1, w2) = params

    def one(t, m):
        t2 = _layernorm(t, g1, b1)
        t = t + _ref_mha(t2, t2, t2, saq, sak, sav, sam)
        t2 = _layernorm(t, g2, b2)
        t = t + _ref_mha(t2, m, m, caq, cak, cav, cam)
        t2 = _layernorm(t, g3, b3)
        h = jnp.maximum(jnp.dot(t2, w1), 0.0)
        return t + jnp.dot(h, w2)

    return jax.vmap(one)(tgt, memory)


# ---------------------------------------------------------------------- main --

if __name__ == "__main__":
    N, L, S, C = 2, 8, 16, D_MODEL
    key = jax.random.PRNGKey(0)
    k_tgt, k_mem, k_w = jax.random.split(key, 3)
    tgt = jax.random.normal(k_tgt, (N, L, C), jnp.float32)
    memory = jax.random.normal(k_mem, (N, S, C), jnp.float32)
    params = init_params(k_w)

    out = decoder_layer(tgt, memory, params)
    out = jax.block_until_ready(out)

    ref = reference(tgt, memory, params)
    assert out.shape == (N, L, C)
    # Tolerance relaxed vs. an exact-divide softmax because the kernel uses the
    # EUP approximate reciprocal for the softmax denominator (per perf review).
    if not jnp.allclose(out, ref, atol=5e-3, rtol=5e-3):
        max_err = float(jnp.max(jnp.abs(out - ref)))
        raise AssertionError(
            f"Pallas kernel does not match JAX reference (max abs err {max_err})")
    print("KERNEL_OK")
</pallas_src>

<mosaic_0001>
module attributes {stable_mosaic.version = 11 : i64} {
  func.func @decoder_layer_kernel(%arg0: i32, %arg1: memref<2x8x32xf32, #tpu.memory_space<vmem>>, %arg2: memref<2x16x32xf32, #tpu.memory_space<vmem>>, %arg3: memref<6x32xf32, #tpu.memory_space<vmem>>, %arg4: memref<32x256xf32, #tpu.memory_space<vmem>>, %arg5: memref<2x4x8x32xf32, #tpu.memory_space<vmem>>, %arg6: memref<64x32xf32, #tpu.memory_space<vmem>>, %arg7: memref<2x8x32xf32, #tpu.memory_space<vmem>>) attributes {dimension_semantics = [#tpu.dimension_semantics<parallel>], iteration_bounds = array<i64: 1>, scalar_prefetch = 0 : i64, scratch_operands = 0 : i64, tpu.core_type = #tpu.core_type<tc>, window_params = [{transform_indices = @transform_0, window_bounds = array<i64: 2, 8, 32>}, {transform_indices = @transform_1, window_bounds = array<i64: 2, 16, 32>}, {pipeline_mode = #tpu.pipeline_mode<synchronous>, transform_indices = @transform_2, window_bounds = array<i64: 6, 32>}, {pipeline_mode = #tpu.pipeline_mode<synchronous>, transform_indices = @transform_3, window_bounds = array<i64: 32, 256>}, {pipeline_mode = #tpu.pipeline_mode<synchronous>, transform_indices = @transform_4, window_bounds = array<i64: 2, 4, 8, 32>}, {pipeline_mode = #tpu.pipeline_mode<synchronous>, transform_indices = @transform_5, window_bounds = array<i64: 64, 32>}, {transform_indices = @transform_6, window_bounds = array<i64: 2, 8, 32>}]} {
    %c0 = arith.constant 0 : index
    %c0_0 = arith.constant 0 : index
    %0 = vector.load %arg3[%c0, %c0_0] : memref<6x32xf32, #tpu.memory_space<vmem>>, vector<6x32xf32>
    %c0_1 = arith.constant 0 : index
    %c0_2 = arith.constant 0 : index
    %1 = vector.load %arg4[%c0_1, %c0_2] : memref<32x256xf32, #tpu.memory_space<vmem>>, vector<32x256xf32>
    %c0_3 = arith.constant 0 : index
    %c0_4 = arith.constant 0 : index
    %c0_5 = arith.constant 0 : index
    %c0_6 = arith.constant 0 : index
    %2 = vector.load %arg5[%c0_3, %c0_4, %c0_5, %c0_6] : memref<2x4x8x32xf32, #tpu.memory_space<vmem>>, vector<2x4x8x32xf32>
    %c0_7 = arith.constant 0 : index
    %c0_8 = arith.constant 0 : index
    %3 = vector.load %arg6[%c0_7, %c0_8] : memref<64x32xf32, #tpu.memory_space<vmem>>, vector<64x32xf32>
    %4 = vector.extract_strided_slice %0 {offsets = [0, 0], sizes = [1, 32], strides = [1, 1]} : vector<6x32xf32> to vector<1x32xf32>
    %5 = vector.extract_strided_slice %0 {offsets = [1, 0], sizes = [1, 32], strides = [1, 1]} : vector<6x32xf32> to vector<1x32xf32>
    %6 = vector.extract_strided_slice %0 {offsets = [2, 0], sizes = [1, 32], strides = [1, 1]} : vector<6x32xf32> to vector<1x32xf32>
    %7 = vector.extract_strided_slice %0 {offsets = [3, 0], sizes = [1, 32], strides = [1, 1]} : vector<6x32xf32> to vector<1x32xf32>
    %8 = vector.extract_strided_slice %0 {offsets = [4, 0], sizes = [1, 32], strides = [1, 1]} : vector<6x32xf32> to vector<1x32xf32>
    %9 = vector.extract_strided_slice %0 {offsets = [5, 0], sizes = [1, 32], strides = [1, 1]} : vector<6x32xf32> to vector<1x32xf32>
    %c0_9 = arith.constant 0 : index
    %c0_10 = arith.constant 0 : index
    %c0_11 = arith.constant 0 : index
    %10 = vector.load %arg1[%c0_9, %c0_10, %c0_11] : memref<2x8x32xf32, #tpu.memory_space<vmem>>, vector<1x8x32xf32>
    %11 = vector.shape_cast %10 : vector<1x8x32xf32> to vector<8x32xf32>
    %c0_12 = arith.constant 0 : index
    %c0_13 = arith.constant 0 : index
    %c0_14 = arith.constant 0 : index
    %12 = vector.load %arg2[%c0_12, %c0_13, %c0_14] : memref<2x16x32xf32, #tpu.memory_space<vmem>>, vector<1x16x32xf32>
    %13 = vector.shape_cast %12 : vector<1x16x32xf32> to vector<16x32xf32>
    %cst = arith.constant dense<0.000000e+00> : vector<8xf32>
    %14 = vector.multi_reduction <add>, %11, %cst [1] : vector<8x32xf32> to vector<8xf32>
    %15 = vector.shape_cast %14 : vector<8xf32> to vector<8x1xf32>
    %cst_15 = arith.constant 3.200000e+01 : f32
    %16 = vector.broadcast %cst_15 : f32 to vector<8x1xf32>
    %17 = arith.divf %15, %16 : vector<8x1xf32>
    %18 = vector.broadcast %17 : vector<8x1xf32> to vector<8x32xf32>
    %19 = arith.subf %11, %18 : vector<8x32xf32>
    %20 = arith.mulf %19, %19 : vector<8x32xf32>
    %cst_16 = arith.constant dense<0.000000e+00> : vector<8xf32>
    %21 = vector.multi_reduction <add>, %20, %cst_16 [1] : vector<8x32xf32> to vector<8xf32>
    %22 = vector.shape_cast %21 : vector<8xf32> to vector<8x1xf32>
    %cst_17 = arith.constant 3.200000e+01 : f32
    %23 = vector.broadcast %cst_17 : f32 to vector<8x1xf32>
    %24 = arith.divf %22, %23 : vector<8x1xf32>
    %cst_18 = arith.constant 9.99999974E-6 : f32
    %25 = vector.broadcast %cst_18 : f32 to vector<8x1xf32>
    %26 = arith.addf %24, %25 : vector<8x1xf32>
    %27 = math.rsqrt %26 : vector<8x1xf32>
    %28 = vector.broadcast %27 : vector<8x1xf32> to vector<8x32xf32>
    %29 = arith.mulf %19, %28 : vector<8x32xf32>
    %30 = vector.broadcast %4 : vector<1x32xf32> to vector<8x32xf32>
    %31 = arith.mulf %29, %30 : vector<8x32xf32>
    %32 = vector.broadcast %5 : vector<1x32xf32> to vector<8x32xf32>
    %33 = arith.addf %31, %32 : vector<8x32xf32>
    %34 = vector.extract_strided_slice %1 {offsets = [0, 0], sizes = [32, 96], strides = [1, 1]} : vector<32x256xf32> to vector<32x96xf32>
    %cst_19 = arith.constant dense<0.000000e+00> : vector<8x96xf32>
    %35 = tpu.matmul %33, %34, %cst_19 {dimension_numbers = #tpu.dot_dimension_numbers<[1], [0], [0], [1], [0, 0, 1, 1], [], []>} : vector<8x32xf32>, vector<32x96xf32>, vector<8x96xf32> -> vector<8x96xf32>
    %36 = vector.extract_strided_slice %35 {offsets = [0, 0], sizes = [8, 32], strides = [1, 1]} : vector<8x96xf32> to vector<8x32xf32>
    %37 = vector.extract_strided_slice %35 {offsets = [0, 32], sizes = [8, 32], strides = [1, 1]} : vector<8x96xf32> to vector<8x32xf32>
    %38 = vector.extract_strided_slice %35 {offsets = [0, 64], sizes = [8, 32], strides = [1, 1]} : vector<8x96xf32> to vector<8x32xf32>
    %39 = vector.extract_strided_slice %2 {offsets = [0, 0, 0, 0], sizes = [1, 4, 8, 32], strides = [1, 1, 1, 1]} : vector<2x4x8x32xf32> to vector<1x4x8x32xf32>
    %40 = vector.shape_cast %39 : vector<1x4x8x32xf32> to vector<4x8x32xf32>
    %41 = vector.shape_cast %36 : vector<8x32xf32> to vector<8x4x8xf32>
    %42 = vector.shape_cast %37 : vector<8x32xf32> to vector<8x4x8xf32>
    %43 = vector.shape_cast %38 : vector<8x32xf32> to vector<8x4x8xf32>
    "tpu.trace_start"() <{level = 10 : i32, message = "lhd,shd->hls"}> : () -> ()
    %cst_20 = arith.constant dense<0.000000e+00> : vector<4x8x8xf32>
    %44 = tpu.matmul %41, %42, %cst_20 {dimension_numbers = #tpu.dot_dimension_numbers<[2], [2], [0], [0], [0, 1, 0, 0, 1, 0], [1], [1]>} : vector<8x4x8xf32>, vector<8x4x8xf32>, vector<4x8x8xf32> -> vector<4x8x8xf32>
    "tpu.trace_stop"() : () -> ()
    %cst_21 = arith.constant dense<0xFF800000> : vector<4x8xf32>
    %45 = vector.multi_reduction <maximumf>, %44, %cst_21 [2] : vector<4x8x8xf32> to vector<4x8xf32>
    %46 = vector.shape_cast %45 : vector<4x8xf32> to vector<4x8x1xf32>
    %47 = vector.broadcast %46 : vector<4x8x1xf32> to vector<4x8x8xf32>
    %48 = arith.subf %44, %47 : vector<4x8x8xf32>
    %49 = math.exp %48 : vector<4x8x8xf32>
    %cst_22 = arith.constant dense<0.000000e+00> : vector<4x8xf32>
    %50 = vector.multi_reduction <add>, %49, %cst_22 [2] : vector<4x8x8xf32> to vector<4x8xf32>
    %51 = vector.shape_cast %50 : vector<4x8xf32> to vector<4x8x1xf32>
    %52 = tpu.reciprocal %51 {approx = true} : vector<4x8x1xf32> -> vector<4x8x1xf32>
    %53 = vector.broadcast %52 : vector<4x8x1xf32> to vector<4x8x8xf32>
    %54 = arith.mulf %49, %53 : vector<4x8x8xf32>
    "tpu.trace_start"() <{level = 10 : i32, message = "hls,shd->hld"}> : () -> ()
    %cst_23 = arith.constant dense<0.000000e+00> : vector<4x8x8xf32>
    %55 = tpu.matmul %54, %43, %cst_23 {dimension_numbers = #tpu.dot_dimension_numbers<[2], [0], [1], [2], [0, 0, 0, 1, 1, 2], [0], [1]>} : vector<4x8x8xf32>, vector<8x4x8xf32>, vector<4x8x8xf32> -> vector<4x8x8xf32>
    "tpu.trace_stop"() : () -> ()
    "tpu.trace_start"() <{level = 10 : i32, message = "hld,hdc->hlc"}> : () -> ()
    %cst_24 = arith.constant dense<0.000000e+00> : vector<4x8x32xf32>
    %56 = tpu.matmul %55, %40, %cst_24 {dimension_numbers = #tpu.dot_dimension_numbers<[2], [1], [1], [2], [0, 0, 0, 1, 1, 2], [0], [0]>} : vector<4x8x8xf32>, vector<4x8x32xf32>, vector<4x8x32xf32> -> vector<4x8x32xf32>
    "tpu.trace_stop"() : () -> ()
    %cst_25 = arith.constant dense<0.000000e+00> : vector<8x32xf32>
    %57 = vector.multi_reduction <add>, %56, %cst_25 [0] : vector<4x8x32xf32> to vector<8x32xf32>
    %58 = arith.addf %11, %57 : vector<8x32xf32>
    %cst_26 = arith.constant dense<0.000000e+00> : vector<8xf32>
    %59 = vector.multi_reduction <add>, %58, %cst_26 [1] : vector<8x32xf32> to vector<8xf32>
    %60 = vector.shape_cast %59 : vector<8xf32> to vector<8x1xf32>
    %cst_27 = arith.constant 3.200000e+01 : f32
    %61 = vector.broadcast %cst_27 : f32 to vector<8x1xf32>
    %62 = arith.divf %60, %61 : vector<8x1xf32>
    %63 = vector.broadcast %62 : vector<8x1xf32> to vector<8x32xf32>
    %64 = arith.subf %58, %63 : vector<8x32xf32>
    %65 = arith.mulf %64, %64 : vector<8x32xf32>
    %cst_28 = arith.constant dense<0.000000e+00> : vector<8xf32>
    %66 = vector.multi_reduction <add>, %65, %cst_28 [1] : vector<8x32xf32> to vector<8xf32>
    %67 = vector.shape_cast %66 : vector<8xf32> to vector<8x1xf32>
    %cst_29 = arith.constant 3.200000e+01 : f32
    %68 = vector.broadcast %cst_29 : f32 to vector<8x1xf32>
    %69 = arith.divf %67, %68 : vector<8x1xf32>
    %cst_30 = arith.constant 9.99999974E-6 : f32
    %70 = vector.broadcast %cst_30 : f32 to vector<8x1xf32>
    %71 = arith.addf %69, %70 : vector<8x1xf32>
    %72 = math.rsqrt %71 : vector<8x1xf32>
    %73 = vector.broadcast %72 : vector<8x1xf32> to vector<8x32xf32>
    %74 = arith.mulf %64, %73 : vector<8x32xf32>
    %75 = vector.broadcast %6 : vector<1x32xf32> to vector<8x32xf32>
    %76 = arith.mulf %74, %75 : vector<8x32xf32>
    %77 = vector.broadcast %7 : vector<1x32xf32> to vector<8x32xf32>
    %78 = arith.addf %76, %77 : vector<8x32xf32>
    %79 = vector.extract_strided_slice %1 {offsets = [0, 96], sizes = [32, 32], strides = [1, 1]} : vector<32x256xf32> to vector<32x32xf32>
    %cst_31 = arith.constant dense<0.000000e+00> : vector<8x32xf32>
    %80 = tpu.matmul %78, %79, %cst_31 {dimension_numbers = #tpu.dot_dimension_numbers<[1], [0], [0], [1], [0, 0, 1, 1], [], []>} : vector<8x32xf32>, vector<32x32xf32>, vector<8x32xf32> -> vector<8x32xf32>
    %81 = vector.extract_strided_slice %1 {offsets = [0, 128], sizes = [32, 64], strides = [1, 1]} : vector<32x256xf32> to vector<32x64xf32>
    %cst_32 = arith.constant dense<0.000000e+00> : vector<16x64xf32>
    %82 = tpu.matmul %13, %81, %cst_32 {dimension_numbers = #tpu.dot_dimension_numbers<[1], [0], [0], [1], [0, 0, 1, 1], [], []>} : vector<16x32xf32>, vector<32x64xf32>, vector<16x64xf32> -> vector<16x64xf32>
    %83 = vector.extract_strided_slice %82 {offsets = [0, 0], sizes = [16, 32], strides = [1, 1]} : vector<16x64xf32> to vector<16x32xf32>
    %84 = vector.extract_strided_slice %82 {offsets = [0, 32], sizes = [16, 32], strides = [1, 1]} : vector<16x64xf32> to vector<16x32xf32>
    %85 = vector.extract_strided_slice %2 {offsets = [1, 0, 0, 0], sizes = [1, 4, 8, 32], strides = [1, 1, 1, 1]} : vector<2x4x8x32xf32> to vector<1x4x8x32xf32>
    %86 = vector.shape_cast %85 : vector<1x4x8x32xf32> to vector<4x8x32xf32>
    %87 = vector.shape_cast %80 : vector<8x32xf32> to vector<8x4x8xf32>
    %88 = vector.shape_cast %83 : vector<16x32xf32> to vector<16x4x8xf32>
    %89 = vector.shape_cast %84 : vector<16x32xf32> to vector<16x4x8xf32>
    "tpu.trace_start"() <{level = 10 : i32, message = "lhd,shd->hls"}> : () -> ()
    %cst_33 = arith.constant dense<0.000000e+00> : vector<4x8x16xf32>
    %90 = tpu.matmul %87, %88, %cst_33 {dimension_numbers = #tpu.dot_dimension_numbers<[2], [2], [0], [0], [0, 1, 0, 0, 1, 0], [1], [1]>} : vector<8x4x8xf32>, vector<16x4x8xf32>, vector<4x8x16xf32> -> vector<4x8x16xf32>
    "tpu.trace_stop"() : () -> ()
    %cst_34 = arith.constant dense<0xFF800000> : vector<4x8xf32>
    %91 = vector.multi_reduction <maximumf>, %90, %cst_34 [2] : vector<4x8x16xf32> to vector<4x8xf32>
    %92 = vector.shape_cast %91 : vector<4x8xf32> to vector<4x8x1xf32>
    %93 = vector.broadcast %92 : vector<4x8x1xf32> to vector<4x8x16xf32>
    %94 = arith.subf %90, %93 : vector<4x8x16xf32>
    %95 = math.exp %94 : vector<4x8x16xf32>
    %cst_35 = arith.constant dense<0.000000e+00> : vector<4x8xf32>
    %96 = vector.multi_reduction <add>, %95, %cst_35 [2] : vector<4x8x16xf32> to vector<4x8xf32>
    %97 = vector.shape_cast %96 : vector<4x8xf32> to vector<4x8x1xf32>
    %98 = tpu.reciprocal %97 {approx = true} : vector<4x8x1xf32> -> vector<4x8x1xf32>
    %99 = vector.broadcast %98 : vector<4x8x1xf32> to vector<4x8x16xf32>
    %100 = arith.mulf %95, %99 : vector<4x8x16xf32>
    "tpu.trace_start"() <{level = 10 : i32, message = "hls,shd->hld"}> : () -> ()
    %cst_36 = arith.constant dense<0.000000e+00> : vector<4x8x8xf32>
    %101 = tpu.matmul %100, %89, %cst_36 {dimension_numbers = #tpu.dot_dimension_numbers<[2], [0], [1], [2], [0, 0, 0, 1, 1, 2], [0], [1]>} : vector<4x8x16xf32>, vector<16x4x8xf32>, vector<4x8x8xf32> -> vector<4x8x8xf32>
    "tpu.trace_stop"() : () -> ()
    "tpu.trace_start"() <{level = 10 : i32, message = "hld,hdc->hlc"}> : () -> ()
    %cst_37 = arith.constant dense<0.000000e+00> : vector<4x8x32xf32>
    %102 = tpu.matmul %101, %86, %cst_37 {dimension_numbers = #tpu.dot_dimension_numbers<[2], [1], [1], [2], [0, 0, 0, 1, 1, 2], [0], [0]>} : vector<4x8x8xf32>, vector<4x8x32xf32>, vector<4x8x32xf32> -> vector<4x8x32xf32>
    "tpu.trace_stop"() : () -> ()
    %cst_38 = arith.constant dense<0.000000e+00> : vector<8x32xf32>
    %103 = vector.multi_reduction <add>, %102, %cst_38 [0] : vector<4x8x32xf32> to vector<8x32xf32>
    %104 = arith.addf %58, %103 : vector<8x32xf32>
    %cst_39 = arith.constant dense<0.000000e+00> : vector<8xf32>
    %105 = vector.multi_reduction <add>, %104, %cst_39 [1] : vector<8x32xf32> to vector<8xf32>
    %106 = vector.shape_cast %105 : vector<8xf32> to vector<8x1xf32>
    %cst_40 = arith.constant 3.200000e+01 : f32
    %107 = vector.broadcast %cst_40 : f32 to vector<8x1xf32>
    %108 = arith.divf %106, %107 : vector<8x1xf32>
    %109 = vector.broadcast %108 : vector<8x1xf32> to vector<8x32xf32>
    %110 = arith.subf %104, %109 : vector<8x32xf32>
    %111 = arith.mulf %110, %110 : vector<8x32xf32>
    %cst_41 = arith.constant dense<0.000000e+00> : vector<8xf32>
    %112 = vector.multi_reduction <add>, %111, %cst_41 [1] : vector<8x32xf32> to vector<8xf32>
    %113 = vector.shape_cast %112 : vector<8xf32> to vector<8x1xf32>
    %cst_42 = arith.constant 3.200000e+01 : f32
    %114 = vector.broadcast %cst_42 : f32 to vector<8x1xf32>
    %115 = arith.divf %113, %114 : vector<8x1xf32>
    %cst_43 = arith.constant 9.99999974E-6 : f32
    %116 = vector.broadcast %cst_43 : f32 to vector<8x1xf32>
    %117 = arith.addf %115, %116 : vector<8x1xf32>
    %118 = math.rsqrt %117 : vector<8x1xf32>
    %119 = vector.broadcast %118 : vector<8x1xf32> to vector<8x32xf32>
    %120 = arith.mulf %110, %119 : vector<8x32xf32>
    %121 = vector.broadcast %8 : vector<1x32xf32> to vector<8x32xf32>
    %122 = arith.mulf %120, %121 : vector<8x32xf32>
    %123 = vector.broadcast %9 : vector<1x32xf32> to vector<8x32xf32>
    %124 = arith.addf %122, %123 : vector<8x32xf32>
    %125 = vector.extract_strided_slice %1 {offsets = [0, 192], sizes = [32, 64], strides = [1, 1]} : vector<32x256xf32> to vector<32x64xf32>
    %cst_44 = arith.constant dense<0.000000e+00> : vector<8x64xf32>
    %126 = tpu.matmul %124, %125, %cst_44 {dimension_numbers = #tpu.dot_dimension_numbers<[1], [0], [0], [1], [0, 0, 1, 1], [], []>} : vector<8x32xf32>, vector<32x64xf32>, vector<8x64xf32> -> vector<8x64xf32>
    %cst_45 = arith.constant 0.000000e+00 : f32
    %127 = vector.broadcast %cst_45 : f32 to vector<8x64xf32>
    %128 = arith.maximumf %126, %127 : vector<8x64xf32>
    %cst_46 = arith.constant dense<0.000000e+00> : vector<8x32xf32>
    %129 = tpu.matmul %128, %3, %cst_46 {dimension_numbers = #tpu.dot_dimension_numbers<[1], [0], [0], [1], [0, 0, 1, 1], [], []>} : vector<8x64xf32>, vector<64x32xf32>, vector<8x32xf32> -> vector<8x32xf32>
    %130 = arith.addf %104, %129 : vector<8x32xf32>
    %c0_47 = arith.constant 0 : index
    %c0_48 = arith.constant 0 : index
    %c0_49 = arith.constant 0 : index
    %131 = vector.load %arg7[%c0_47, %c0_48, %c0_49] : memref<2x8x32xf32, #tpu.memory_space<vmem>>, vector<1x8x32xf32>
    %132 = vector.shape_cast %131 : vector<1x8x32xf32> to vector<8x32xf32>
    %133 = vector.shape_cast %130 : vector<8x32xf32> to vector<1x8x32xf32>
    tpu.vector_store %arg7[%c0_47, %c0_48, %c0_49], %133 {strides = array<i32>} : memref<2x8x32xf32, #tpu.memory_space<vmem>>, vector<1x8x32xf32>,
    %c1 = arith.constant 1 : index
    %c0_50 = arith.constant 0 : index
    %c0_51 = arith.constant 0 : index
    %134 = vector.load %arg1[%c1, %c0_50, %c0_51] : memref<2x8x32xf32, #tpu.memory_space<vmem>>, vector<1x8x32xf32>
    %135 = vector.shape_cast %134 : vector<1x8x32xf32> to vector<8x32xf32>
    %c1_52 = arith.constant 1 : index
    %c0_53 = arith.constant 0 : index
    %c0_54 = arith.constant 0 : index
    %136 = vector.load %arg2[%c1_52, %c0_53, %c0_54] : memref<2x16x32xf32, #tpu.memory_space<vmem>>, vector<1x16x32xf32>
    %137 = vector.shape_cast %136 : vector<1x16x32xf32> to vector<16x32xf32>
    %cst_55 = arith.constant dense<0.000000e+00> : vector<8xf32>
    %138 = vector.multi_reduction <add>, %135, %cst_55 [1] : vector<8x32xf32> to vector<8xf32>
    %139 = vector.shape_cast %138 : vector<8xf32> to vector<8x1xf32>
    %cst_56 = arith.constant 3.200000e+01 : f32
    %140 = vector.broadcast %cst_56 : f32 to vector<8x1xf32>
    %141 = arith.divf %139, %140 : vector<8x1xf32>
    %142 = vector.broadcast %141 : vector<8x1xf32> to vector<8x32xf32>
    %143 = arith.subf %135, %142 : vector<8x32xf32>
    %144 = arith.mulf %143, %143 : vector<8x32xf32>
    %cst_57 = arith.constant dense<0.000000e+00> : vector<8xf32>
    %145 = vector.multi_reduction <add>, %144, %cst_57 [1] : vector<8x32xf32> to vector<8xf32>
    %146 = vector.shape_cast %145 : vector<8xf32> to vector<8x1xf32>
    %cst_58 = arith.constant 3.200000e+01 : f32
    %147 = vector.broadcast %cst_58 : f32 to vector<8x1xf32>
    %148 = arith.divf %146, %147 : vector<8x1xf32>
    %cst_59 = arith.constant 9.99999974E-6 : f32
    %149 = vector.broadcast %cst_59 : f32 to vector<8x1xf32>
    %150 = arith.addf %148, %149 : vector<8x1xf32>
    %151 = math.rsqrt %150 : vector<8x1xf32>
    %152 = vector.broadcast %151 : vector<8x1xf32> to vector<8x32xf32>
    %153 = arith.mulf %143, %152 : vector<8x32xf32>
    %154 = vector.broadcast %4 : vector<1x32xf32> to vector<8x32xf32>
    %155 = arith.mulf %153, %154 : vector<8x32xf32>
    %156 = vector.broadcast %5 : vector<1x32xf32> to vector<8x32xf32>
    %157 = arith.addf %155, %156 : vector<8x32xf32>
    %158 = vector.extract_strided_slice %1 {offsets = [0, 0], sizes = [32, 96], strides = [1, 1]} : vector<32x256xf32> to vector<32x96xf32>
    %cst_60 = arith.constant dense<0.000000e+00> : vector<8x96xf32>
    %159 = tpu.matmul %157, %158, %cst_60 {dimension_numbers = #tpu.dot_dimension_numbers<[1], [0], [0], [1], [0, 0, 1, 1], [], []>} : vector<8x32xf32>, vector<32x96xf32>, vector<8x96xf32> -> vector<8x96xf32>
    %160 = vector.extract_strided_slice %159 {offsets = [0, 0], sizes = [8, 32], strides = [1, 1]} : vector<8x96xf32> to vector<8x32xf32>
    %161 = vector.extract_strided_slice %159 {offsets = [0, 32], sizes = [8, 32], strides = [1, 1]} : vector<8x96xf32> to vector<8x32xf32>
    %162 = vector.extract_strided_slice %159 {offsets = [0, 64], sizes = [8, 32], strides = [1, 1]} : vector<8x96xf32> to vector<8x32xf32>
    %163 = vector.extract_strided_slice %2 {offsets = [0, 0, 0, 0], sizes = [1, 4, 8, 32], strides = [1, 1, 1, 1]} : vector<2x4x8x32xf32> to vector<1x4x8x32xf32>
    %164 = vector.shape_cast %163 : vector<1x4x8x32xf32> to vector<4x8x32xf32>
    %165 = vector.shape_cast %160 : vector<8x32xf32> to vector<8x4x8xf32>
    %166 = vector.shape_cast %161 : vector<8x32xf32> to vector<8x4x8xf32>
    %167 = vector.shape_cast %162 : vector<8x32xf32> to vector<8x4x8xf32>
    "tpu.trace_start"() <{level = 10 : i32, message = "lhd,shd->hls"}> : () -> ()
    %cst_61 = arith.constant dense<0.000000e+00> : vector<4x8x8xf32>
    %168 = tpu.matmul %165, %166, %cst_61 {dimension_numbers = #tpu.dot_dimension_numbers<[2], [2], [0], [0], [0, 1, 0, 0, 1, 0], [1], [1]>} : vector<8x4x8xf32>, vector<8x4x8xf32>, vector<4x8x8xf32> -> vector<4x8x8xf32>
    "tpu.trace_stop"() : () -> ()
    %cst_62 = arith.constant dense<0xFF800000> : vector<4x8xf32>
    %169 = vector.multi_reduction <maximumf>, %168, %cst_62 [2] : vector<4x8x8xf32> to vector<4x8xf32>
    %170 = vector.shape_cast %169 : vector<4x8xf32> to vector<4x8x1xf32>
    %171 = vector.broadcast %170 : vector<4x8x1xf32> to vector<4x8x8xf32>
    %172 = arith.subf %168, %171 : vector<4x8x8xf32>
    %173 = math.exp %172 : vector<4x8x8xf32>
    %cst_63 = arith.constant dense<0.000000e+00> : vector<4x8xf32>
    %174 = vector.multi_reduction <add>, %173, %cst_63 [2] : vector<4x8x8xf32> to vector<4x8xf32>
    %175 = vector.shape_cast %174 : vector<4x8xf32> to vector<4x8x1xf32>
    %176 = tpu.reciprocal %175 {approx = true} : vector<4x8x1xf32> -> vector<4x8x1xf32>
    %177 = vector.broadcast %176 : vector<4x8x1xf32> to vector<4x8x8xf32>
    %178 = arith.mulf %173, %177 : vector<4x8x8xf32>
    "tpu.trace_start"() <{level = 10 : i32, message = "hls,shd->hld"}> : () -> ()
    %cst_64 = arith.constant dense<0.000000e+00> : vector<4x8x8xf32>
    %179 = tpu.matmul %178, %167, %cst_64 {dimension_numbers = #tpu.dot_dimension_numbers<[2], [0], [1], [2], [0, 0, 0, 1, 1, 2], [0], [1]>} : vector<4x8x8xf32>, vector<8x4x8xf32>, vector<4x8x8xf32> -> vector<4x8x8xf32>
    "tpu.trace_stop"() : () -> ()
    "tpu.trace_start"() <{level = 10 : i32, message = "hld,hdc->hlc"}> : () -> ()
    %cst_65 = arith.constant dense<0.000000e+00> : vector<4x8x32xf32>
    %180 = tpu.matmul %179, %164, %cst_65 {dimension_numbers = #tpu.dot_dimension_numbers<[2], [1], [1], [2], [0, 0, 0, 1, 1, 2], [0], [0]>} : vector<4x8x8xf32>, vector<4x8x32xf32>, vector<4x8x32xf32> -> vector<4x8x32xf32>
    "tpu.trace_stop"() : () -> ()
    %cst_66 = arith.constant dense<0.000000e+00> : vector<8x32xf32>
    %181 = vector.multi_reduction <add>, %180, %cst_66 [0] : vector<4x8x32xf32> to vector<8x32xf32>
    %182 = arith.addf %135, %181 : vector<8x32xf32>
    %cst_67 = arith.constant dense<0.000000e+00> : vector<8xf32>
    %183 = vector.multi_reduction <add>, %182, %cst_67 [1] : vector<8x32xf32> to vector<8xf32>
    %184 = vector.shape_cast %183 : vector<8xf32> to vector<8x1xf32>
    %cst_68 = arith.constant 3.200000e+01 : f32
    %185 = vector.broadcast %cst_68 : f32 to vector<8x1xf32>
    %186 = arith.divf %184, %185 : vector<8x1xf32>
    %187 = vector.broadcast %186 : vector<8x1xf32> to vector<8x32xf32>
    %188 = arith.subf %182, %187 : vector<8x32xf32>
    %189 = arith.mulf %188, %188 : vector<8x32xf32>
    %cst_69 = arith.constant dense<0.000000e+00> : vector<8xf32>
    %190 = vector.multi_reduction <add>, %189, %cst_69 [1] : vector<8x32xf32> to vector<8xf32>
    %191 = vector.shape_cast %190 : vector<8xf32> to vector<8x1xf32>
    %cst_70 = arith.constant 3.200000e+01 : f32
    %192 = vector.broadcast %cst_70 : f32 to vector<8x1xf32>
    %193 = arith.divf %191, %192 : vector<8x1xf32>
    %cst_71 = arith.constant 9.99999974E-6 : f32
    %194 = vector.broadcast %cst_71 : f32 to vector<8x1xf32>
    %195 = arith.addf %193, %194 : vector<8x1xf32>
    %196 = math.rsqrt %195 : vector<8x1xf32>
    %197 = vector.broadcast %196 : vector<8x1xf32> to vector<8x32xf32>
    %198 = arith.mulf %188, %197 : vector<8x32xf32>
    %199 = vector.broadcast %6 : vector<1x32xf32> to vector<8x32xf32>
    %200 = arith.mulf %198, %199 : vector<8x32xf32>
    %201 = vector.broadcast %7 : vector<1x32xf32> to vector<8x32xf32>
    %202 = arith.addf %200, %201 : vector<8x32xf32>
    %203 = vector.extract_strided_slice %1 {offsets = [0, 96], sizes = [32, 32], strides = [1, 1]} : vector<32x256xf32> to vector<32x32xf32>
    %cst_72 = arith.constant dense<0.000000e+00> : vector<8x32xf32>
    %204 = tpu.matmul %202, %203, %cst_72 {dimension_numbers = #tpu.dot_dimension_numbers<[1], [0], [0], [1], [0, 0, 1, 1], [], []>} : vector<8x32xf32>, vector<32x32xf32>, vector<8x32xf32> -> vector<8x32xf32>
    %205 = vector.extract_strided_slice %1 {offsets = [0, 128], sizes = [32, 64], strides = [1, 1]} : vector<32x256xf32> to vector<32x64xf32>
    %cst_73 = arith.constant dense<0.000000e+00> : vector<16x64xf32>
    %206 = tpu.matmul %137, %205, %cst_73 {dimension_numbers = #tpu.dot_dimension_numbers<[1], [0], [0], [1], [0, 0, 1, 1], [], []>} : vector<16x32xf32>, vector<32x64xf32>, vector<16x64xf32> -> vector<16x64xf32>
    %207 = vector.extract_strided_slice %206 {offsets = [0, 0], sizes = [16, 32], strides = [1, 1]} : vector<16x64xf32> to vector<16x32xf32>
    %208 = vector.extract_strided_slice %206 {offsets = [0, 32], sizes = [16, 32], strides = [1, 1]} : vector<16x64xf32> to vector<16x32xf32>
    %209 = vector.extract_strided_slice %2 {offsets = [1, 0, 0, 0], sizes = [1, 4, 8, 32], strides = [1, 1, 1, 1]} : vector<2x4x8x32xf32> to vector<1x4x8x32xf32>
    %210 = vector.shape_cast %209 : vector<1x4x8x32xf32> to vector<4x8x32xf32>
    %211 = vector.shape_cast %204 : vector<8x32xf32> to vector<8x4x8xf32>
    %212 = vector.shape_cast %207 : vector<16x32xf32> to vector<16x4x8xf32>
    %213 = vector.shape_cast %208 : vector<16x32xf32> to vector<16x4x8xf32>
    "tpu.trace_start"() <{level = 10 : i32, message = "lhd,shd->hls"}> : () -> ()
    %cst_74 = arith.constant dense<0.000000e+00> : vector<4x8x16xf32>
    %214 = tpu.matmul %211, %212, %cst_74 {dimension_numbers = #tpu.dot_dimension_numbers<[2], [2], [0], [0], [0, 1, 0, 0, 1, 0], [1], [1]>} : vector<8x4x8xf32>, vector<16x4x8xf32>, vector<4x8x16xf32> -> vector<4x8x16xf32>
    "tpu.trace_stop"() : () -> ()
    %cst_75 = arith.constant dense<0xFF800000> : vector<4x8xf32>
    %215 = vector.multi_reduction <maximumf>, %214, %cst_75 [2] : vector<4x8x16xf32> to vector<4x8xf32>
    %216 = vector.shape_cast %215 : vector<4x8xf32> to vector<4x8x1xf32>
    %217 = vector.broadcast %216 : vector<4x8x1xf32> to vector<4x8x16xf32>
    %218 = arith.subf %214, %217 : vector<4x8x16xf32>
    %219 = math.exp %218 : vector<4x8x16xf32>
    %cst_76 = arith.constant dense<0.000000e+00> : vector<4x8xf32>
    %220 = vector.multi_reduction <add>, %219, %cst_76 [2] : vector<4x8x16xf32> to vector<4x8xf32>
    %221 = vector.shape_cast %220 : vector<4x8xf32> to vector<4x8x1xf32>
    %222 = tpu.reciprocal %221 {approx = true} : vector<4x8x1xf32> -> vector<4x8x1xf32>
    %223 = vector.broadcast %222 : vector<4x8x1xf32> to vector<4x8x16xf32>
    %224 = arith.mulf %219, %223 : vector<4x8x16xf32>
    "tpu.trace_start"() <{level = 10 : i32, message = "hls,shd->hld"}> : () -> ()
    %cst_77 = arith.constant dense<0.000000e+00> : vector<4x8x8xf32>
    %225 = tpu.matmul %224, %213, %cst_77 {dimension_numbers = #tpu.dot_dimension_numbers<[2], [0], [1], [2], [0, 0, 0, 1, 1, 2], [0], [1]>} : vector<4x8x16xf32>, vector<16x4x8xf32>, vector<4x8x8xf32> -> vector<4x8x8xf32>
    "tpu.trace_stop"() : () -> ()
    "tpu.trace_start"() <{level = 10 : i32, message = "hld,hdc->hlc"}> : () -> ()
    %cst_78 = arith.constant dense<0.000000e+00> : vector<4x8x32xf32>
    %226 = tpu.matmul %225, %210, %cst_78 {dimension_numbers = #tpu.dot_dimension_numbers<[2], [1], [1], [2], [0, 0, 0, 1, 1, 2], [0], [0]>} : vector<4x8x8xf32>, vector<4x8x32xf32>, vector<4x8x32xf32> -> vector<4x8x32xf32>
    "tpu.trace_stop"() : () -> ()
    %cst_79 = arith.constant dense<0.000000e+00> : vector<8x32xf32>
    %227 = vector.multi_reduction <add>, %226, %cst_79 [0] : vector<4x8x32xf32> to vector<8x32xf32>
    %228 = arith.addf %182, %227 : vector<8x32xf32>
    %cst_80 = arith.constant dense<0.000000e+00> : vector<8xf32>
    %229 = vector.multi_reduction <add>, %228, %cst_80 [1] : vector<8x32xf32> to vector<8xf32>
    %230 = vector.shape_cast %229 : vector<8xf32> to vector<8x1xf32>
    %cst_81 = arith.constant 3.200000e+01 : f32
    %231 = vector.broadcast %cst_81 : f32 to vector<8x1xf32>
    %232 = arith.divf %230, %231 : vector<8x1xf32>
    %233 = vector.broadcast %232 : vector<8x1xf32> to vector<8x32xf32>
    %234 = arith.subf %228, %233 : vector<8x32xf32>
    %235 = arith.mulf %234, %234 : vector<8x32xf32>
    %cst_82 = arith.constant dense<0.000000e+00> : vector<8xf32>
    %236 = vector.multi_reduction <add>, %235, %cst_82 [1] : vector<8x32xf32> to vector<8xf32>
    %237 = vector.shape_cast %236 : vector<8xf32> to vector<8x1xf32>
    %cst_83 = arith.constant 3.200000e+01 : f32
    %238 = vector.broadcast %cst_83 : f32 to vector<8x1xf32>
    %239 = arith.divf %237, %238 : vector<8x1xf32>
    %cst_84 = arith.constant 9.99999974E-6 : f32
    %240 = vector.broadcast %cst_84 : f32 to vector<8x1xf32>
    %241 = arith.addf %239, %240 : vector<8x1xf32>
    %242 = math.rsqrt %241 : vector<8x1xf32>
    %243 = vector.broadcast %242 : vector<8x1xf32> to vector<8x32xf32>
    %244 = arith.mulf %234, %243 : vector<8x32xf32>
    %245 = vector.broadcast %8 : vector<1x32xf32> to vector<8x32xf32>
    %246 = arith.mulf %244, %245 : vector<8x32xf32>
    %247 = vector.broadcast %9 : vector<1x32xf32> to vector<8x32xf32>
    %248 = arith.addf %246, %247 : vector<8x32xf32>
    %249 = vector.extract_strided_slice %1 {offsets = [0, 192], sizes = [32, 64], strides = [1, 1]} : vector<32x256xf32> to vector<32x64xf32>
    %cst_85 = arith.constant dense<0.000000e+00> : vector<8x64xf32>
    %250 = tpu.matmul %248, %249, %cst_85 {dimension_numbers = #tpu.dot_dimension_numbers<[1], [0], [0], [1], [0, 0, 1, 1], [], []>} : vector<8x32xf32>, vector<32x64xf32>, vector<8x64xf32> -> vector<8x64xf32>
    %cst_86 = arith.constant 0.000000e+00 : f32
    %251 = vector.broadcast %cst_86 : f32 to vector<8x64xf32>
    %252 = arith.maximumf %250, %251 : vector<8x64xf32>
    %cst_87 = arith.constant dense<0.000000e+00> : vector<8x32xf32>
    %253 = tpu.matmul %252, %3, %cst_87 {dimension_numbers = #tpu.dot_dimension_numbers<[1], [0], [0], [1], [0, 0, 1, 1], [], []>} : vector<8x64xf32>, vector<64x32xf32>, vector<8x32xf32> -> vector<8x32xf32>
    %254 = arith.addf %228, %253 : vector<8x32xf32>
    %c1_88 = arith.constant 1 : index
    %c0_89 = arith.constant 0 : index
    %c0_90 = arith.constant 0 : index
    %255 = vector.load %arg7[%c1_88, %c0_89, %c0_90] : memref<2x8x32xf32, #tpu.memory_space<vmem>>, vector<1x8x32xf32>
    %256 = vector.shape_cast %255 : vector<1x8x32xf32> to vector<8x32xf32>
    %257 = vector.shape_cast %254 : vector<8x32xf32> to vector<1x8x32xf32>
    tpu.vector_store %arg7[%c1_88, %c0_89, %c0_90], %257 {strides = array<i32>} : memref<2x8x32xf32, #tpu.memory_space<vmem>>, vector<1x8x32xf32>,
    return
  }
  func.func @transform_0(%arg0: i32) -> (i32, i32, i32) {
    %c0_i32 = arith.constant 0 : i32
    %c0_i32_0 = arith.constant 0 : i32
    %c0_i32_1 = arith.constant 0 : i32
    return %arg0, %c0_i32, %c0_i32_0 : i32, i32, i32
  }
  func.func @transform_1(%arg0: i32) -> (i32, i32, i32) {
    %c0_i32 = arith.constant 0 : i32
    %c0_i32_0 = arith.constant 0 : i32
    %c0_i32_1 = arith.constant 0 : i32
    return %arg0, %c0_i32, %c0_i32_0 : i32, i32, i32
  }
  func.func @transform_2(%arg0: i32) -> (i32, i32) {
    %c0_i32 = arith.constant 0 : i32
    %c0_i32_0 = arith.constant 0 : i32
    %c0_i32_1 = arith.constant 0 : i32
    return %c0_i32, %c0_i32_0 : i32, i32
  }
  func.func @transform_3(%arg0: i32) -> (i32, i32) {
    %c0_i32 = arith.constant 0 : i32
    %c0_i32_0 = arith.constant 0 : i32
    %c0_i32_1 = arith.constant 0 : i32
    return %c0_i32, %c0_i32_0 : i32, i32
  }
  func.func @transform_4(%arg0: i32) -> (i32, i32, i32, i32) {
    %c0_i32 = arith.constant 0 : i32
    %c0_i32_0 = arith.constant 0 : i32
    %c0_i32_1 = arith.constant 0 : i32
    %c0_i32_2 = arith.constant 0 : i32
    %c0_i32_3 = arith.constant 0 : i32
    return %c0_i32, %c0_i32_0, %c0_i32_1, %c0_i32_2 : i32, i32, i32, i32
  }
  func.func @transform_5(%arg0: i32) -> (i32, i32) {
    %c0_i32 = arith.constant 0 : i32
    %c0_i32_0 = arith.constant 0 : i32
    %c0_i32_1 = arith.constant 0 : i32
    return %c0_i32, %c0_i32_0 : i32, i32
  }
  func.func @transform_6(%arg0: i32) -> (i32, i32, i32) {
    %c0_i32 = arith.constant 0 : i32
    %c0_i32_0 = arith.constant 0 : i32
    %c0_i32_1 = arith.constant 0 : i32
    return %arg0, %c0_i32, %c0_i32_0 : i32, i32, i32
  }
}

</mosaic_0001>

<llo_original>
// kernel: tpu_custom_call.1
$region0: #{tpu_custom_call.1}
  #allocation0 [shape = 'u32[]', space=smem, size = 0x4, offset = 0x4, fixed_abs, tag = 'smem constant byte address 0x4 - core index']
  #allocation1 [shape = 'u32[144,128]{1,0:T(1,128)}', space=vmem, size = 0x12000, scoped, tag = 'internal scratch']
  %s0 = inlined_call_operand.hbm [shape: f32[2,8,32], index: 0, kind: input, shape index: {}]
  %s1 = inlined_call_operand.vmem [shape: f32[2,16,32], index: 1, kind: input, shape index: {}]
  %s2 = inlined_call_operand.hbm [shape: f32[6,32], index: 2, kind: input, shape index: {}]
  %s3 = inlined_call_operand.vmem [shape: f32[32,256], index: 3, kind: input, shape index: {}]
  %s4 = inlined_call_operand.hbm [shape: f32[2,4,8,32], index: 4, kind: input, shape index: {}]
  %s5 = inlined_call_operand.vmem [shape: f32[64,32], index: 5, kind: input, shape index: {}]
  %s6 = inlined_call_operand.hbm [shape: f32[2,8,32], index: 6, kind: output, shape index: {}]
  %s7 = sld [smem:[#allocation0]]
  $region46: #{tpu_custom_call.1} parent=0
    _
  %s9 = ssub.s32 1, %s7
  %s10 = scalar_select 0, %s9, %s7
  $region1: #{tpu_custom_call.1} parent=0
    #allocation2 [shape = 'u8[8192]{0}', space=vmem, size = 0x2000, scoped, tag = 'input window, operand 0, single buffered']
    #allocation3 [shape = 's32[1]{0}', space=sflag, size = 0x4, scoped, tag = 'scoped memory for tpu_custom_call.1']
    #allocation4 [shape = 's32[1]{0}', space=sflag, size = 0x4, scoped, tag = 'scoped memory for tpu_custom_call.1']
    #allocation5 [shape = 'u8[4096]{0}', space=vmem, size = 0x1000, scoped, tag = 'input window, operand 2, single buffered']
    #allocation6 [shape = 's32[1]{0}', space=sflag, size = 0x4, scoped, tag = 'scoped memory for tpu_custom_call.1']
    #allocation7 [shape = 'u8[32768]{0}', space=vmem, size = 0x8000, scoped, tag = 'input window, operand 4, single buffered']
    #allocation8 [shape = 'u8[8192]{0}', space=vmem, size = 0x2000, scoped, tag = 'output window, operand 0, single buffered']
    %11 = vsyncpa [#allocation3], 0
    %12 = vsyncpa [#allocation6], 0
    %13 = vsyncpa [#allocation4], 0
    // Predicated region
    $region2: #{tpu_custom_call.1} parent=1 // pred_check
      _
    $region3: #{tpu_custom_call.1} parent=1 // pred_check_branch
      %15 = sbr.rel (0) target = $region5
    $region4: #{tpu_custom_call.1} parent=1 // pred_region
      %s17 = ssub.s32 256, 256
      %18 = vsyncadd [#allocation3], %s17
      %s19 = sshll.u32 [#allocation2], 4
      %s20 = int_to_ptr.vmem [resolvable:$true] %s19
      %25 = dma.hbm_to_vmem [thread:$0]  %s0, 256, %s20, [#allocation3], 128, 128, 8
    $region5: #{tpu_custom_call.1} parent=1 // pred_fallthru
      _
    // Predicated region
    $region6: #{tpu_custom_call.1} parent=1 // pred_check
      _
    $region7: #{tpu_custom_call.1} parent=1 // pred_check_branch
      %27 = sbr.rel (0) target = $region9
    $region8: #{tpu_custom_call.1} parent=1 // pred_region
      _
    $region9: #{tpu_custom_call.1} parent=1 // pred_fallthru
      _
    // Predicated region
    $region10: #{tpu_custom_call.1} parent=1 // pred_check
      _
    $region11: #{tpu_custom_call.1} parent=1 // pred_check_branch
      %29 = sbr.rel (0) target = $region13
    $region12: #{tpu_custom_call.1} parent=1 // pred_region
      %s31 = ssub.s32 128, 128
      %32 = vsyncadd [#allocation6], %s31
      %s34 = sshll.u32 [#allocation5], 4
      %s35 = int_to_ptr.vmem [resolvable:$true] %s34
      %37 = dma.hbm_to_vmem [thread:$0]  %s2, 128, %s35, [#allocation6]
    $region13: #{tpu_custom_call.1} parent=1 // pred_fallthru
      _
    // Predicated region
    $region14: #{tpu_custom_call.1} parent=1 // pred_check
      _
    $region15: #{tpu_custom_call.1} parent=1 // pred_check_branch
      %39 = sbr.rel (0) target = $region17
    $region16: #{tpu_custom_call.1} parent=1 // pred_region
      _
    $region17: #{tpu_custom_call.1} parent=1 // pred_fallthru
      _
    // Predicated region
    $region18: #{tpu_custom_call.1} parent=1 // pred_check
      _
    $region19: #{tpu_custom_call.1} parent=1 // pred_check_branch
      %41 = sbr.rel (0) target = $region21
    $region20: #{tpu_custom_call.1} parent=1 // pred_region
      %s43 = ssub.s32 1024, 1024
      %44 = vsyncadd [#allocation6], %s43
      %s45 = sshll.u32 [#allocation7], 4
      %s46 = int_to_ptr.vmem [resolvable:$true] %s45
      %51 = dma.hbm_to_vmem [thread:$0]  %s4, 1024, %s46, [#allocation6], 128, 128, 8
    $region21: #{tpu_custom_call.1} parent=1 // pred_fallthru
      _
    // Predicated region
    $region22: #{tpu_custom_call.1} parent=1 // pred_check
      _
    $region23: #{tpu_custom_call.1} parent=1 // pred_check_branch
      %53 = sbr.rel (0) target = $region25
    $region24: #{tpu_custom_call.1} parent=1 // pred_region
      _
    $region25: #{tpu_custom_call.1} parent=1 // pred_fallthru
      _
    // Predicated region
    $region26: #{tpu_custom_call.1} parent=1 // pred_check
      _
    $region27: #{tpu_custom_call.1} parent=1 // pred_check_branch
      %55 = sbr.rel (0) target = $region29
    $region28: #{tpu_custom_call.1} parent=1 // pred_region
      %56 = dma.done [#allocation3], 256
    $region29: #{tpu_custom_call.1} parent=1 // pred_fallthru
      _
    // Predicated region
    $region30: #{tpu_custom_call.1} parent=1 // pred_check
      _
    $region31: #{tpu_custom_call.1} parent=1 // pred_check_branch
      %58 = sbr.rel (0) target = $region33
    $region32: #{tpu_custom_call.1} parent=1 // pred_region
      %59 = dma.done [#allocation6], 128
    $region33: #{tpu_custom_call.1} parent=1 // pred_fallthru
      _
    // Predicated region
    $region34: #{tpu_custom_call.1} parent=1 // pred_check
      _
    $region35: #{tpu_custom_call.1} parent=1 // pred_check_branch
      %61 = sbr.rel (0) target = $region37
    $region36: #{tpu_custom_call.1} parent=1 // pred_region
      %62 = dma.done [#allocation6], 1024
    $region37: #{tpu_custom_call.1} parent=1 // pred_fallthru
      _
    %v63 = vld [vmem:[#allocation5] sm:$0x3f]
    %v64 = vld [vmem:[%s3] sm:$0xff]
    %v65 = vld [vmem:[%s3 + $0x8] sm:$0xff]
    %v66 = vld [vmem:[%s3 + $0x10] sm:$0xff]
    %v67 = vld [vmem:[%s3 + $0x18] sm:$0xff]
    %v68 = vld [vmem:[%s3 + $0x20] sm:$0xff]
    %v69 = vld [vmem:[%s3 + $0x28] sm:$0xff]
    %v70 = vld [vmem:[%s3 + $0x30] sm:$0xff]
    %v71 = vld [vmem:[%s3 + $0x38] sm:$0xff]
    %v72 = vld [vmem:[#allocation7] sm:$0xff]
    %v73 = vld [vmem:[#allocation7 + $0x8] sm:$0xff]
    %v74 = vld [vmem:[#allocation7 + $0x10] sm:$0xff]
    %v75 = vld [vmem:[#allocation7 + $0x18] sm:$0xff]
    %v76 = vld [vmem:[#allocation7 + $0x20] sm:$0xff]
    %v77 = vld [vmem:[#allocation7 + $0x28] sm:$0xff]
    %v78 = vld [vmem:[#allocation7 + $0x30] sm:$0xff]
    %v79 = vld [vmem:[#allocation7 + $0x38] sm:$0xff]
    %v80 = vld [vmem:[%s5] sm:$0xff]
    %v81 = vld [vmem:[%s5 + $0x8] sm:$0xff]
    %v82 = vld [vmem:[%s5 + $0x10] sm:$0xff]
    %v83 = vld [vmem:[%s5 + $0x18] sm:$0xff]
    %v84 = vld [vmem:[%s5 + $0x20] sm:$0xff]
    %v85 = vld [vmem:[%s5 + $0x28] sm:$0xff]
    %v86 = vld [vmem:[%s5 + $0x30] sm:$0xff]
    %v87 = vld [vmem:[%s5 + $0x38] sm:$0xff]
    %v88 = vld [vmem:[#allocation2] sm:$0xff]
    %v89 = vld [vmem:[%s1] sm:$0xff]
    %v90 = vld [vmem:[%s1 + $0x8] sm:$0xff]
    %vm91 = vcmask 261120
    %v92 = vsel %vm91, %v88, 0.0
    %93 = vadd.xlane.f32.xlu0 %v92
    %v94 = vpop.xlane.xlu0 %93
    %v95 = vrcp.pop 32.0
    %v96 = vmul.f32 %v94, %v95
    %v97 = vsub.f32 %v88, %v96
    %v98 = vmul.f32 %v97, %v97
    %v99 = vsel %vm91, %v98, 0.0
    %100 = vadd.xlane.f32.xlu0 %v99
    %v101 = vpop.xlane.xlu0 %100
    %v102 = vmul.f32 %v101, %v95
    %v103 = vadd.f32 %v102, 1e-05
    %v104 = vrsqrt.pop %v103
    %v105 = vmul.f32 %v97, %v104
    %v106 = vlaneseq
    %v107 = vshrl.u32 %v106, 7
    %v108 = vsub.s32 0, %v107
    %v109 = vrot.slane %v63, %v108
    %v110 = vmul.f32 %v105, %v109
    %v111 = vlaneseq
    %v112 = vshrl.u32 %v111, 7
    %v113 = vsub.s32 1, %v112
    %v114 = vrot.slane %v63, %v113
    %v115 = vadd.f32 %v110, %v114
    %v117 = vsel %vm91, %v115, 0
    %119 = vmatprep.subr.mxu0 0.0
    %120 = vmatpush1.msra.mxu0 0.0
    %121 = vmatprep.subr.mxu0 0.0
    %122 = vmatpush1.msra.mxu0 0.0
    %123 = vmatprep.subr.mxu0 0.0
    %124 = vmatpush1.msra.mxu0 0.0
    %125 = vmatprep.subr.mxu0 0.0
    %126 = vmatpush1.msra.mxu0 0.0
    %127 = vmatprep.subr.mxu0 0.0
    %128 = vmatpush1.msra.mxu0 0.0
    %129 = vmatprep.subr.mxu0 0.0
    %130 = vmatpush1.msra.mxu0 0.0
    %131 = vmatprep.subr.mxu0 0.0
    %132 = vmatpush1.msra.mxu0 0.0
    %133 = vmatprep.subr.mxu0 0.0
    %134 = vmatpush1.msra.mxu0 0.0
    %135 = vmatprep.subr.mxu0 0.0
    %136 = vmatpush1.msra.mxu0 0.0
    %137 = vmatprep.subr.mxu0 0.0
    %138 = vmatpush1.msra.mxu0 0.0
    %139 = vmatprep.subr.mxu0 0.0
    %140 = vmatpush1.msra.mxu0 0.0
    %141 = vmatprep.subr.mxu0 0.0
    %142 = vmatpush1.msra.mxu0 0.0
    %143 = vmatprep.subr.mxu0 0.0
    %144 = vmatpush1.msra.mxu0 %v70
    %145 = vmatprep.subr.mxu0 0.0
    %146 = vmatpush1.msra.mxu0 %v68
    %147 = vmatprep.subr.mxu0 0.0
    %148 = vmatpush1.msra.mxu0 %v66
    %149 = vmatprep.subr.mxu0 0.0
    %150 = vmatpush1.msra.mxu0 %v64
    %151 = vmatprep.subr.mxu0 0.0
    %152 = vmatpush2.msra.mxu0 0.0
    %153 = vmatprep.subr.mxu0 0.0
    %154 = vmatpush2.msra.mxu0 0.0
    %155 = vmatprep.subr.mxu0 0.0
    %156 = vmatpush2.msra.mxu0 0.0
    %157 = vmatprep.subr.mxu0 0.0
    %158 = vmatpush2.msra.mxu0 0.0
    %159 = vmatprep.subr.mxu0 0.0
    %160 = vmatpush2.msra.mxu0 0.0
    %161 = vmatprep.subr.mxu0 0.0
    %162 = vmatpush2.msra.mxu0 0.0
    %163 = vmatprep.subr.mxu0 0.0
    %164 = vmatpush2.msra.mxu0 0.0
    %165 = vmatprep.subr.mxu0 0.0
    %166 = vmatpush2.msra.mxu0 0.0
    %167 = vmatprep.subr.mxu0 0.0
    %168 = vmatpush2.msra.mxu0 0.0
    %169 = vmatprep.subr.mxu0 0.0
    %170 = vmatpush2.msra.mxu0 0.0
    %171 = vmatprep.subr.mxu0 0.0
    %172 = vmatpush2.msra.mxu0 0.0
    %173 = vmatprep.subr.mxu0 0.0
    %174 = vmatpush2.msra.mxu0 0.0
    %175 = vmatprep.subr.mxu0 0.0
    %176 = vmatpush2.msra.mxu0 0.0
    %177 = vmatprep.subr.mxu0 0.0
    %178 = vmatpush2.msra.mxu0 0.0
    %179 = vmatprep.subr.mxu0 0.0
    %180 = vmatpush2.msra.mxu0 0.0
    %181 = vmatprep.subr.mxu0 0.0
    %182 = vmatpush2.msra.mxu0 0.0
    %183 = vmatprep.mubr.f32.mxu0 0.0
    %184 = vmatmul.mubr.f32.gmra.mxu0 %v117
    %v185 = vpop.f32.mrf.mxu0
    %v186 = vadd.f32 0.0, %v185
    %v187 = vpop.f32.mrf.mxu0
    %188 = vdwg.mxu0
    %190 = vrot.lane.b32.xlu0 %v186, 120
    %v191 = vpop.permute.xlu0 %190
    %192 = vrot.lane.b32.xlu0 %v186, 112
    %v193 = vpop.permute.xlu0 %192
    %194 = vrot.lane.b32.xlu0 %v186, 104
    %v195 = vpop.permute.xlu0 %194
    %196 = vrot.lane.b32.xlu0 %v186, 96
    %v197 = vpop.permute.xlu0 %196
    %198 = vrot.lane.b32.xlu0 %v191, 96
    %v199 = vpop.permute.xlu0 %198
    %200 = vrot.lane.b32.xlu0 %v193, 96
    %v201 = vpop.permute.xlu0 %200
    %202 = vrot.lane.b32.xlu0 %v195, 96
    %v203 = vpop.permute.xlu0 %202
    %208 = vxpose.xlu0.b32.start [1/16] %v197, 128
    %209 = vxpose.xlu0.b32.cont [2/16] 0.0, 128
    %210 = vxpose.xlu0.b32.cont [3/16] 0.0, 128
    %211 = vxpose.xlu0.b32.cont [4/16] 0.0, 128
    %212 = vxpose.xlu0.b32.cont [5/16] 0.0, 128
    %213 = vxpose.xlu0.b32.cont [6/16] 0.0, 128
    %214 = vxpose.xlu0.b32.cont [7/16] 0.0, 128
    %215 = vxpose.xlu0.b32.cont [8/16] 0.0, 128
    %216 = vxpose.xlu0.b32.cont [9/16] 0.0, 128
    %217 = vxpose.xlu0.b32.cont [10/16] 0.0, 128
    %218 = vxpose.xlu0.b32.cont [11/16] 0.0, 128
    %219 = vxpose.xlu0.b32.cont [12/16] 0.0, 128
    %220 = vxpose.xlu0.b32.cont [13/16] 0.0, 128
    %221 = vxpose.xlu0.b32.cont [14/16] 0.0, 128
    %222 = vxpose.xlu0.b32.cont [15/16] 0.0, 128
    %223 = vxpose.xlu0.b32.end [16/16] 0.0, 128
    %v224 = vpop.trf.xlu0
    %v225 = vpop.trf.xlu0
    %v226 = vpop.trf.xlu0
    %v227 = vpop.trf.xlu0
    %v228 = vpop.trf.xlu0
    %v229 = vpop.trf.xlu0
    %v230 = vpop.trf.xlu0
    %v231 = vpop.trf.xlu0
    %v232 = vpop.trf.xlu0
    %v233 = vpop.trf.xlu0
    %v234 = vpop.trf.xlu0
    %v235 = vpop.trf.xlu0
    %v236 = vpop.trf.xlu0
    %v237 = vpop.trf.xlu0
    %v238 = vpop.trf.xlu0
    %v239 = vpop.trf.xlu0
    %240 = vxpose.xlu0.b32.start [1/16] %v199, 128
    %241 = vxpose.xlu0.b32.cont [2/16] 0.0, 128
    %242 = vxpose.xlu0.b32.cont [3/16] 0.0, 128
    %243 = vxpose.xlu0.b32.cont [4/16] 0.0, 128
    %244 = vxpose.xlu0.b32.cont [5/16] 0.0, 128
    %245 = vxpose.xlu0.b32.cont [6/16] 0.0, 128
    %246 = vxpose.xlu0.b32.cont [7/16] 0.0, 128
    %247 = vxpose.xlu0.b32.cont [8/16] 0.0, 128
    %248 = vxpose.xlu0.b32.cont [9/16] 0.0, 128
    %249 = vxpose.xlu0.b32.cont [10/16] 0.0, 128
    %250 = vxpose.xlu0.b32.cont [11/16] 0.0, 128
    %251 = vxpose.xlu0.b32.cont [12/16] 0.0, 128
    %252 = vxpose.xlu0.b32.cont [13/16] 0.0, 128
    %253 = vxpose.xlu0.b32.cont [14/16] 0.0, 128
    %254 = vxpose.xlu0.b32.cont [15/16] 0.0, 128
    %255 = vxpose.xlu0.b32.end [16/16] 0.0, 128
    %v256 = vpop.trf.xlu0
    %v257 = vpop.trf.xlu0
    %v258 = vpop.trf.xlu0
    %v259 = vpop.trf.xlu0
    %v260 = vpop.trf.xlu0
    %v261 = vpop.trf.xlu0
    %v262 = vpop.trf.xlu0
    %v263 = vpop.trf.xlu0
    %v264 = vpop.trf.xlu0
    %v265 = vpop.trf.xlu0
    %v266 = vpop.trf.xlu0
    %v267 = vpop.trf.xlu0
    %v268 = vpop.trf.xlu0
    %v269 = vpop.trf.xlu0
    %v270 = vpop.trf.xlu0
    %v271 = vpop.trf.xlu0
    %272 = vxpose.xlu0.b32.start [1/16] %v201, 128
    %273 = vxpose.xlu0.b32.cont [2/16] 0.0, 128
    %274 = vxpose.xlu0.b32.cont [3/16] 0.0, 128
    %275 = vxpose.xlu0.b32.cont [4/16] 0.0, 128
    %276 = vxpose.xlu0.b32.cont [5/16] 0.0, 128
    %277 = vxpose.xlu0.b32.cont [6/16] 0.0, 128
    %278 = vxpose.xlu0.b32.cont [7/16] 0.0, 128
    %279 = vxpose.xlu0.b32.cont [8/16] 0.0, 128
    %280 = vxpose.xlu0.b32.cont [9/16] 0.0, 128
    %281 = vxpose.xlu0.b32.cont [10/16] 0.0, 128
    %282 = vxpose.xlu0.b32.cont [11/16] 0.0, 128
    %283 = vxpose.xlu0.b32.cont [12/16] 0.0, 128
    %284 = vxpose.xlu0.b32.cont [13/16] 0.0, 128
    %285 = vxpose.xlu0.b32.cont [14/16] 0.0, 128
    %286 = vxpose.xlu0.b32.cont [15/16] 0.0, 128
    %287 = vxpose.xlu0.b32.end [16/16] 0.0, 128
    %v288 = vpop.trf.xlu0
    %v289 = vpop.trf.xlu0
    %v290 = vpop.trf.xlu0
    %v291 = vpop.trf.xlu0
    %v292 = vpop.trf.xlu0
    %v293 = vpop.trf.xlu0
    %v294 = vpop.trf.xlu0
    %v295 = vpop.trf.xlu0
    %v296 = vpop.trf.xlu0
    %v297 = vpop.trf.xlu0
    %v298 = vpop.trf.xlu0
    %v299 = vpop.trf.xlu0
    %v300 = vpop.trf.xlu0
    %v301 = vpop.trf.xlu0
    %v302 = vpop.trf.xlu0
    %v303 = vpop.trf.xlu0
    %304 = vxpose.xlu0.b32.start [1/16] %v203, 128
    %305 = vxpose.xlu0.b32.cont [2/16] 0.0, 128
    %306 = vxpose.xlu0.b32.cont [3/16] 0.0, 128
    %307 = vxpose.xlu0.b32.cont [4/16] 0.0, 128
    %308 = vxpose.xlu0.b32.cont [5/16] 0.0, 128
    %309 = vxpose.xlu0.b32.cont [6/16] 0.0, 128
    %310 = vxpose.xlu0.b32.cont [7/16] 0.0, 128
    %311 = vxpose.xlu0.b32.cont [8/16] 0.0, 128
    %312 = vxpose.xlu0.b32.cont [9/16] 0.0, 128
    %313 = vxpose.xlu0.b32.cont [10/16] 0.0, 128
    %314 = vxpose.xlu0.b32.cont [11/16] 0.0, 128
    %315 = vxpose.xlu0.b32.cont [12/16] 0.0, 128
    %316 = vxpose.xlu0.b32.cont [13/16] 0.0, 128
    %317 = vxpose.xlu0.b32.cont [14/16] 0.0, 128
    %318 = vxpose.xlu0.b32.cont [15/16] 0.0, 128
    %319 = vxpose.xlu0.b32.end [16/16] 0.0, 128
    %v320 = vpop.trf.xlu0
    %v321 = vpop.trf.xlu0
    %v322 = vpop.trf.xlu0
    %v323 = vpop.trf.xlu0
    %v324 = vpop.trf.xlu0
    %v325 = vpop.trf.xlu0
    %v326 = vpop.trf.xlu0
    %v327 = vpop.trf.xlu0
    %v328 = vpop.trf.xlu0
    %v329 = vpop.trf.xlu0
    %v330 = vpop.trf.xlu0
    %v331 = vpop.trf.xlu0
    %v332 = vpop.trf.xlu0
    %v333 = vpop.trf.xlu0
    %v334 = vpop.trf.xlu0
    %v335 = vpop.trf.xlu0
    %vm336 = vcmask 64512
    %v337 = vsel %vm336, %v186, 0
    %339 = vmatprep.subr.mxu0 0.0
    %340 = vmatpush1.msra.mxu0 0.0
    %341 = vmatprep.subr.mxu0 0.0
    %342 = vmatpush1.msra.mxu0 0.0
    %343 = vmatprep.subr.mxu0 0.0
    %344 = vmatpush1.msra.mxu0 0.0
    %345 = vmatprep.subr.mxu0 0.0
    %346 = vmatpush1.msra.mxu0 0.0
    %347 = vmatprep.subr.mxu0 0.0
    %348 = vmatpush1.msra.mxu0 0.0
    %349 = vmatprep.subr.mxu0 0.0
    %350 = vmatpush1.msra.mxu0 0.0
    %351 = vmatprep.subr.mxu0 0.0
    %352 = vmatpush1.msra.mxu0 0.0
    %353 = vmatprep.subr.mxu0 0.0
    %354 = vmatpush1.msra.mxu0 0.0
    %355 = vmatprep.subr.mxu0 0.0
    %356 = vmatpush1.msra.mxu0 0.0
    %357 = vmatprep.subr.mxu0 0.0
    %358 = vmatpush1.msra.mxu0 0.0
    %359 = vmatprep.subr.mxu0 0.0
    %360 = vmatpush1.msra.mxu0 0.0
    %361 = vmatprep.subr.mxu0 0.0
    %362 = vmatpush1.msra.mxu0 0.0
    %363 = vmatprep.subr.mxu0 0.0
    %364 = vmatpush1.msra.mxu0 0.0
    %365 = vmatprep.subr.mxu0 0.0
    %366 = vmatpush1.msra.mxu0 0.0
    %367 = vmatprep.subr.mxu0 0.0
    %368 = vmatpush1.msra.mxu0 0.0
    %369 = vmatprep.subr.mxu0 0.0
    %370 = vmatpush1.msra.mxu0 %v224
    %371 = vmatprep.subr.mxu0 0.0
    %372 = vmatpush2.msra.mxu0 0.0
    %373 = vmatprep.subr.mxu0 0.0
    %374 = vmatpush2.msra.mxu0 0.0
    %375 = vmatprep.subr.mxu0 0.0
    %376 = vmatpush2.msra.mxu0 0.0
    %377 = vmatprep.subr.mxu0 0.0
    %378 = vmatpush2.msra.mxu0 0.0
    %379 = vmatprep.subr.mxu0 0.0
    %380 = vmatpush2.msra.mxu0 0.0
    %381 = vmatprep.subr.mxu0 0.0
    %382 = vmatpush2.msra.mxu0 0.0
    %383 = vmatprep.subr.mxu0 0.0
    %384 = vmatpush2.msra.mxu0 0.0
    %385 = vmatprep.subr.mxu0 0.0
    %386 = vmatpush2.msra.mxu0 0.0
    %387 = vmatprep.subr.mxu0 0.0
    %388 = vmatpush2.msra.mxu0 0.0
    %389 = vmatprep.subr.mxu0 0.0
    %390 = vmatpush2.msra.mxu0 0.0
    %391 = vmatprep.subr.mxu0 0.0
    %392 = vmatpush2.msra.mxu0 0.0
    %393 = vmatprep.subr.mxu0 0.0
    %394 = vmatpush2.msra.mxu0 0.0
    %395 = vmatprep.subr.mxu0 0.0
    %396 = vmatpush2.msra.mxu0 0.0
    %397 = vmatprep.subr.mxu0 0.0
    %398 = vmatpush2.msra.mxu0 0.0
    %399 = vmatprep.subr.mxu0 0.0
    %400 = vmatpush2.msra.mxu0 0.0
    %401 = vmatprep.subr.mxu0 0.0
    %402 = vmatpush2.msra.mxu0 0.0
    %403 = vmatprep.mubr.f32.mxu0 0.0
    %404 = vmatmul.mubr.f32.gmra.mxu0 %v337
    %v405 = vpop.f32.mrf.mxu0
    %v406 = vadd.f32 0.0, %v405
    %v407 = vpop.f32.mrf.mxu0
    %408 = vdwg.mxu0
    %v409 = vsel %vm336, %v191, 0
    %411 = vmatprep.subr.mxu0 0.0
    %412 = vmatpush1.msra.mxu0 0.0
    %413 = vmatprep.subr.mxu0 0.0
    %414 = vmatpush1.msra.mxu0 0.0
    %415 = vmatprep.subr.mxu0 0.0
    %416 = vmatpush1.msra.mxu0 0.0
    %417 = vmatprep.subr.mxu0 0.0
    %418 = vmatpush1.msra.mxu0 0.0
    %419 = vmatprep.subr.mxu0 0.0
    %420 = vmatpush1.msra.mxu0 0.0
    %421 = vmatprep.subr.mxu0 0.0
    %422 = vmatpush1.msra.mxu0 0.0
    %423 = vmatprep.subr.mxu0 0.0
    %424 = vmatpush1.msra.mxu0 0.0
    %425 = vmatprep.subr.mxu0 0.0
    %426 = vmatpush1.msra.mxu0 0.0
    %427 = vmatprep.subr.mxu0 0.0
    %428 = vmatpush1.msra.mxu0 0.0
    %429 = vmatprep.subr.mxu0 0.0
    %430 = vmatpush1.msra.mxu0 0.0
    %431 = vmatprep.subr.mxu0 0.0
    %432 = vmatpush1.msra.mxu0 0.0
    %433 = vmatprep.subr.mxu0 0.0
    %434 = vmatpush1.msra.mxu0 0.0
    %435 = vmatprep.subr.mxu0 0.0
    %436 = vmatpush1.msra.mxu0 0.0
    %437 = vmatprep.subr.mxu0 0.0
    %438 = vmatpush1.msra.mxu0 0.0
    %439 = vmatprep.subr.mxu0 0.0
    %440 = vmatpush1.msra.mxu0 0.0
    %441 = vmatprep.subr.mxu0 0.0
    %442 = vmatpush1.msra.mxu0 %v256
    %443 = vmatprep.subr.mxu0 0.0
    %444 = vmatpush2.msra.mxu0 0.0
    %445 = vmatprep.subr.mxu0 0.0
    %446 = vmatpush2.msra.mxu0 0.0
    %447 = vmatprep.subr.mxu0 0.0
    %448 = vmatpush2.msra.mxu0 0.0
    %449 = vmatprep.subr.mxu0 0.0
    %450 = vmatpush2.msra.mxu0 0.0
    %451 = vmatprep.subr.mxu0 0.0
    %452 = vmatpush2.msra.mxu0 0.0
    %453 = vmatprep.subr.mxu0 0.0
    %454 = vmatpush2.msra.mxu0 0.0
    %455 = vmatprep.subr.mxu0 0.0
    %456 = vmatpush2.msra.mxu0 0.0
    %457 = vmatprep.subr.mxu0 0.0
    %458 = vmatpush2.msra.mxu0 0.0
    %459 = vmatprep.subr.mxu0 0.0
    %460 = vmatpush2.msra.mxu0 0.0
    %461 = vmatprep.subr.mxu0 0.0
    %462 = vmatpush2.msra.mxu0 0.0
    %463 = vmatprep.subr.mxu0 0.0
    %464 = vmatpush2.msra.mxu0 0.0
    %465 = vmatprep.subr.mxu0 0.0
    %466 = vmatpush2.msra.mxu0 0.0
    %467 = vmatprep.subr.mxu0 0.0
    %468 = vmatpush2.msra.mxu0 0.0
    %469 = vmatprep.subr.mxu0 0.0
    %470 = vmatpush2.msra.mxu0 0.0
    %471 = vmatprep.subr.mxu0 0.0
    %472 = vmatpush2.msra.mxu0 0.0
    %473 = vmatprep.subr.mxu0 0.0
    %474 = vmatpush2.msra.mxu0 0.0
    %475 = vmatprep.mubr.f32.mxu0 0.0
    %476 = vmatmul.mubr.f32.gmra.mxu0 %v409
    %v477 = vpop.f32.mrf.mxu0
    %v478 = vadd.f32 0.0, %v477
    %v479 = vpop.f32.mrf.mxu0
    %480 = vdwg.mxu0
    %v481 = vsel %vm336, %v193, 0
    %483 = vmatprep.subr.mxu0 0.0
    %484 = vmatpush1.msra.mxu0 0.0
    %485 = vmatprep.subr.mxu0 0.0
    %486 = vmatpush1.msra.mxu0 0.0
    %487 = vmatprep.subr.mxu0 0.0
    %488 = vmatpush1.msra.mxu0 0.0
    %489 = vmatprep.subr.mxu0 0.0
    %490 = vmatpush1.msra.mxu0 0.0
    %491 = vmatprep.subr.mxu0 0.0
    %492 = vmatpush1.msra.mxu0 0.0
    %493 = vmatprep.subr.mxu0 0.0
    %494 = vmatpush1.msra.mxu0 0.0
    %495 = vmatprep.subr.mxu0 0.0
    %496 = vmatpush1.msra.mxu0 0.0
    %497 = vmatprep.subr.mxu0 0.0
    %498 = vmatpush1.msra.mxu0 0.0
    %499 = vmatprep.subr.mxu0 0.0
    %500 = vmatpush1.msra.mxu0 0.0
    %501 = vmatprep.subr.mxu0 0.0
    %502 = vmatpush1.msra.mxu0 0.0
    %503 = vmatprep.subr.mxu0 0.0
    %504 = vmatpush1.msra.mxu0 0.0
    %505 = vmatprep.subr.mxu0 0.0
    %506 = vmatpush1.msra.mxu0 0.0
    %507 = vmatprep.subr.mxu0 0.0
    %508 = vmatpush1.msra.mxu0 0.0
    %509 = vmatprep.subr.mxu0 0.0
    %510 = vmatpush1.msra.mxu0 0.0
    %511 = vmatprep.subr.mxu0 0.0
    %512 = vmatpush1.msra.mxu0 0.0
    %513 = vmatprep.subr.mxu0 0.0
    %514 = vmatpush1.msra.mxu0 %v288
    %515 = vmatprep.subr.mxu0 0.0
    %516 = vmatpush2.msra.mxu0 0.0
    %517 = vmatprep.subr.mxu0 0.0
    %518 = vmatpush2.msra.mxu0 0.0
    %519 = vmatprep.subr.mxu0 0.0
    %520 = vmatpush2.msra.mxu0 0.0
    %521 = vmatprep.subr.mxu0 0.0
    %522 = vmatpush2.msra.mxu0 0.0
    %523 = vmatprep.subr.mxu0 0.0
    %524 = vmatpush2.msra.mxu0 0.0
    %525 = vmatprep.subr.mxu0 0.0
    %526 = vmatpush2.msra.mxu0 0.0
    %527 = vmatprep.subr.mxu0 0.0
    %528 = vmatpush2.msra.mxu0 0.0
    %529 = vmatprep.subr.mxu0 0.0
    %530 = vmatpush2.msra.mxu0 0.0
    %531 = vmatprep.subr.mxu0 0.0
    %532 = vmatpush2.msra.mxu0 0.0
    %533 = vmatprep.subr.mxu0 0.0
    %534 = vmatpush2.msra.mxu0 0.0
    %535 = vmatprep.subr.mxu0 0.0
    %536 = vmatpush2.msra.mxu0 0.0
    %537 = vmatprep.subr.mxu0 0.0
    %538 = vmatpush2.msra.mxu0 0.0
    %539 = vmatprep.subr.mxu0 0.0
    %540 = vmatpush2.msra.mxu0 0.0
    %541 = vmatprep.subr.mxu0 0.0
    %542 = vmatpush2.msra.mxu0 0.0
    %543 = vmatprep.subr.mxu0 0.0
    %544 = vmatpush2.msra.mxu0 0.0
    %545 = vmatprep.subr.mxu0 0.0
    %546 = vmatpush2.msra.mxu0 0.0
    %547 = vmatprep.mubr.f32.mxu0 0.0
    %548 = vmatmul.mubr.f32.gmra.mxu0 %v481
    %v549 = vpop.f32.mrf.mxu0
    %v550 = vadd.f32 0.0, %v549
    %v551 = vpop.f32.mrf.mxu0
    %552 = vdwg.mxu0
    %v553 = vsel %vm336, %v195, 0
    %555 = vmatprep.subr.mxu0 0.0
    %556 = vmatpush1.msra.mxu0 0.0
    %557 = vmatprep.subr.mxu0 0.0
    %558 = vmatpush1.msra.mxu0 0.0
    %559 = vmatprep.subr.mxu0 0.0
    %560 = vmatpush1.msra.mxu0 0.0
    %561 = vmatprep.subr.mxu0 0.0
    %562 = vmatpush1.msra.mxu0 0.0
    %563 = vmatprep.subr.mxu0 0.0
    %564 = vmatpush1.msra.mxu0 0.0
    %565 = vmatprep.subr.mxu0 0.0
    %566 = vmatpush1.msra.mxu0 0.0
    %567 = vmatprep.subr.mxu0 0.0
    %568 = vmatpush1.msra.mxu0 0.0
    %569 = vmatprep.subr.mxu0 0.0
    %570 = vmatpush1.msra.mxu0 0.0
    %571 = vmatprep.subr.mxu0 0.0
    %572 = vmatpush1.msra.mxu0 0.0
    %573 = vmatprep.subr.mxu0 0.0
    %574 = vmatpush1.msra.mxu0 0.0
    %575 = vmatprep.subr.mxu0 0.0
    %576 = vmatpush1.msra.mxu0 0.0
    %577 = vmatprep.subr.mxu0 0.0
    %578 = vmatpush1.msra.mxu0 0.0
    %579 = vmatprep.subr.mxu0 0.0
    %580 = vmatpush1.msra.mxu0 0.0
    %581 = vmatprep.subr.mxu0 0.0
    %582 = vmatpush1.msra.mxu0 0.0
    %583 = vmatprep.subr.mxu0 0.0
    %584 = vmatpush1.msra.mxu0 0.0
    %585 = vmatprep.subr.mxu0 0.0
    %586 = vmatpush1.msra.mxu0 %v320
    %587 = vmatprep.subr.mxu0 0.0
    %588 = vmatpush2.msra.mxu0 0.0
    %589 = vmatprep.subr.mxu0 0.0
    %590 = vmatpush2.msra.mxu0 0.0
    %591 = vmatprep.subr.mxu0 0.0
    %592 = vmatpush2.msra.mxu0 0.0
    %593 = vmatprep.subr.mxu0 0.0
    %594 = vmatpush2.msra.mxu0 0.0
    %595 = vmatprep.subr.mxu0 0.0
    %596 = vmatpush2.msra.mxu0 0.0
    %597 = vmatprep.subr.mxu0 0.0
    %598 = vmatpush2.msra.mxu0 0.0
    %599 = vmatprep.subr.mxu0 0.0
    %600 = vmatpush2.msra.mxu0 0.0
    %601 = vmatprep.subr.mxu0 0.0
    %602 = vmatpush2.msra.mxu0 0.0
    %603 = vmatprep.subr.mxu0 0.0
    %604 = vmatpush2.msra.mxu0 0.0
    %605 = vmatprep.subr.mxu0 0.0
    %606 = vmatpush2.msra.mxu0 0.0
    %607 = vmatprep.subr.mxu0 0.0
    %608 = vmatpush2.msra.mxu0 0.0
    %609 = vmatprep.subr.mxu0 0.0
    %610 = vmatpush2.msra.mxu0 0.0
    %611 = vmatprep.subr.mxu0 0.0
    %612 = vmatpush2.msra.mxu0 0.0
    %613 = vmatprep.subr.mxu0 0.0
    %614 = vmatpush2.msra.mxu0 0.0
    %615 = vmatprep.subr.mxu0 0.0
    %616 = vmatpush2.msra.mxu0 0.0
    %617 = vmatprep.subr.mxu0 0.0
    %618 = vmatpush2.msra.mxu0 0.0
    %619 = vmatprep.mubr.f32.mxu0 0.0
    %620 = vmatmul.mubr.f32.gmra.mxu0 %v553
    %v621 = vpop.f32.mrf.mxu0
    %v622 = vadd.f32 0.0, %v621
    %v623 = vpop.f32.mrf.mxu0
    %624 = vdwg.mxu0
    %v625 = vsel %vm336, %v406, -inf
    %626 = vmax.xlane.f32.xlu0 %v625
    %v627 = vpop.xlane.xlu0 %626
    %v628 = vsel %vm336, %v478, -inf
    %629 = vmax.xlane.f32.xlu0 %v628
    %v630 = vpop.xlane.xlu0 %629
    %v631 = vsel %vm336, %v550, -inf
    %632 = vmax.xlane.f32.xlu0 %v631
    %v633 = vpop.xlane.xlu0 %632
    %v634 = vsel %vm336, %v622, -inf
    %635 = vmax.xlane.f32.xlu0 %v634
    %v636 = vpop.xlane.xlu0 %635
    %v637 = vsub.f32 %v406, %v627
    %v638 = vsub.f32 %v478, %v630
    %v639 = vsub.f32 %v550, %v633
    %v640 = vsub.f32 %v622, %v636
    %v641 = vmul.f32 %v637, 1.442695
    %v642 = vpow.pop %v641
    %v643 = vmul.f32 %v638, 1.442695
    %v644 = vpow.pop %v643
    %v645 = vmul.f32 %v639, 1.442695
    %v646 = vpow.pop %v645
    %v647 = vmul.f32 %v640, 1.442695
    %v648 = vpow.pop %v647
    %v649 = vsel %vm336, %v642, 0.0
    %650 = vadd.xlane.f32.xlu0 %v649
    %v651 = vpop.xlane.xlu0 %650
    %v652 = vsel %vm336, %v644, 0.0
    %653 = vadd.xlane.f32.xlu0 %v652
    %v654 = vpop.xlane.xlu0 %653
    %v655 = vsel %vm336, %v646, 0.0
    %656 = vadd.xlane.f32.xlu0 %v655
    %v657 = vpop.xlane.xlu0 %656
    %v658 = vsel %vm336, %v648, 0.0
    %659 = vadd.xlane.f32.xlu0 %v658
    %v660 = vpop.xlane.xlu0 %659
    %v661 = vrcp.pop %v651
    %v662 = vrcp.pop %v654
    %v663 = vrcp.pop %v657
    %v664 = vrcp.pop %v660
    %v665 = vmul.f32 %v642, %v661
    %v666 = vmul.f32 %v644, %v662
    %v667 = vmul.f32 %v646, %v663
    %v668 = vmul.f32 %v648, %v664
    %669 = vrot.lane.b32.xlu0 %v186, 64
    %v670 = vpop.permute.xlu0 %669
    %v673 = vsel %vm336, %v665, 0
    %675 = vmatprep.subr.mxu0 0.0
    %676 = vmatpush1.msra.mxu0 0.0
    %677 = vmatprep.subr.mxu0 0.0
    %678 = vmatpush1.msra.mxu0 0.0
    %679 = vmatprep.subr.mxu0 0.0
    %680 = vmatpush1.msra.mxu0 0.0
    %681 = vmatprep.subr.mxu0 0.0
    %682 = vmatpush1.msra.mxu0 0.0
    %683 = vmatprep.subr.mxu0 0.0
    %684 = vmatpush1.msra.mxu0 0.0
    %685 = vmatprep.subr.mxu0 0.0
    %686 = vmatpush1.msra.mxu0 0.0
    %687 = vmatprep.subr.mxu0 0.0
    %688 = vmatpush1.msra.mxu0 0.0
    %689 = vmatprep.subr.mxu0 0.0
    %690 = vmatpush1.msra.mxu0 0.0
    %691 = vmatprep.subr.mxu0 0.0
    %692 = vmatpush1.msra.mxu0 0.0
    %693 = vmatprep.subr.mxu0 0.0
    %694 = vmatpush1.msra.mxu0 0.0
    %695 = vmatprep.subr.mxu0 0.0
    %696 = vmatpush1.msra.mxu0 0.0
    %697 = vmatprep.subr.mxu0 0.0
    %698 = vmatpush1.msra.mxu0 0.0
    %699 = vmatprep.subr.mxu0 0.0
    %700 = vmatpush1.msra.mxu0 0.0
    %701 = vmatprep.subr.mxu0 0.0
    %702 = vmatpush1.msra.mxu0 0.0
    %703 = vmatprep.subr.mxu0 0.0
    %704 = vmatpush1.msra.mxu0 0.0
    %705 = vmatprep.subr.mxu0 0.0
    %706 = vmatpush1.msra.mxu0 %v670
    %707 = vmatprep.subr.mxu0 0.0
    %708 = vmatpush2.msra.mxu0 0.0
    %709 = vmatprep.subr.mxu0 0.0
    %710 = vmatpush2.msra.mxu0 0.0
    %711 = vmatprep.subr.mxu0 0.0
    %712 = vmatpush2.msra.mxu0 0.0
    %713 = vmatprep.subr.mxu0 0.0
    %714 = vmatpush2.msra.mxu0 0.0
    %715 = vmatprep.subr.mxu0 0.0
    %716 = vmatpush2.msra.mxu0 0.0
    %717 = vmatprep.subr.mxu0 0.0
    %718 = vmatpush2.msra.mxu0 0.0
    %719 = vmatprep.subr.mxu0 0.0
    %720 = vmatpush2.msra.mxu0 0.0
    %721 = vmatprep.subr.mxu0 0.0
    %722 = vmatpush2.msra.mxu0 0.0
    %723 = vmatprep.subr.mxu0 0.0
    %724 = vmatpush2.msra.mxu0 0.0
    %725 = vmatprep.subr.mxu0 0.0
    %726 = vmatpush2.msra.mxu0 0.0
    %727 = vmatprep.subr.mxu0 0.0
    %728 = vmatpush2.msra.mxu0 0.0
    %729 = vmatprep.subr.mxu0 0.0
    %730 = vmatpush2.msra.mxu0 0.0
    %731 = vmatprep.subr.mxu0 0.0
    %732 = vmatpush2.msra.mxu0 0.0
    %733 = vmatprep.subr.mxu0 0.0
    %734 = vmatpush2.msra.mxu0 0.0
    %735 = vmatprep.subr.mxu0 0.0
    %736 = vmatpush2.msra.mxu0 0.0
    %737 = vmatprep.subr.mxu0 0.0
    %738 = vmatpush2.msra.mxu0 0.0
    %739 = vmatprep.mubr.f32.mxu0 0.0
    %740 = vmatmul.mubr.f32.gmra.mxu0 %v673
    %v741 = vpop.f32.mrf.mxu0
    %v742 = vadd.f32 0.0, %v741
    %v743 = vpop.f32.mrf.mxu0
    %744 = vdwg.mxu0
    %745 = vrot.lane.b32.xlu0 %v191, 64
    %v746 = vpop.permute.xlu0 %745
    %v749 = vsel %vm336, %v666, 0
    %751 = vmatprep.subr.mxu0 0.0
    %752 = vmatpush1.msra.mxu0 0.0
    %753 = vmatprep.subr.mxu0 0.0
    %754 = vmatpush1.msra.mxu0 0.0
    %755 = vmatprep.subr.mxu0 0.0
    %756 = vmatpush1.msra.mxu0 0.0
    %757 = vmatprep.subr.mxu0 0.0
    %758 = vmatpush1.msra.mxu0 0.0
    %759 = vmatprep.subr.mxu0 0.0
    %760 = vmatpush1.msra.mxu0 0.0
    %761 = vmatprep.subr.mxu0 0.0
    %762 = vmatpush1.msra.mxu0 0.0
    %763 = vmatprep.subr.mxu0 0.0
    %764 = vmatpush1.msra.mxu0 0.0
    %765 = vmatprep.subr.mxu0 0.0
    %766 = vmatpush1.msra.mxu0 0.0
    %767 = vmatprep.subr.mxu0 0.0
    %768 = vmatpush1.msra.mxu0 0.0
    %769 = vmatprep.subr.mxu0 0.0
    %770 = vmatpush1.msra.mxu0 0.0
    %771 = vmatprep.subr.mxu0 0.0
    %772 = vmatpush1.msra.mxu0 0.0
    %773 = vmatprep.subr.mxu0 0.0
    %774 = vmatpush1.msra.mxu0 0.0
    %775 = vmatprep.subr.mxu0 0.0
    %776 = vmatpush1.msra.mxu0 0.0
    %777 = vmatprep.subr.mxu0 0.0
    %778 = vmatpush1.msra.mxu0 0.0
    %779 = vmatprep.subr.mxu0 0.0
    %780 = vmatpush1.msra.mxu0 0.0
    %781 = vmatprep.subr.mxu0 0.0
    %782 = vmatpush1.msra.mxu0 %v746
    %783 = vmatprep.subr.mxu0 0.0
    %784 = vmatpush2.msra.mxu0 0.0
    %785 = vmatprep.subr.mxu0 0.0
    %786 = vmatpush2.msra.mxu0 0.0
    %787 = vmatprep.subr.mxu0 0.0
    %788 = vmatpush2.msra.mxu0 0.0
    %789 = vmatprep.subr.mxu0 0.0
    %790 = vmatpush2.msra.mxu0 0.0
    %791 = vmatprep.subr.mxu0 0.0
    %792 = vmatpush2.msra.mxu0 0.0
    %793 = vmatprep.subr.mxu0 0.0
    %794 = vmatpush2.msra.mxu0 0.0
    %795 = vmatprep.subr.mxu0 0.0
    %796 = vmatpush2.msra.mxu0 0.0
    %797 = vmatprep.subr.mxu0 0.0
    %798 = vmatpush2.msra.mxu0 0.0
    %799 = vmatprep.subr.mxu0 0.0
    %800 = vmatpush2.msra.mxu0 0.0
    %801 = vmatprep.subr.mxu0 0.0
    %802 = vmatpush2.msra.mxu0 0.0
    %803 = vmatprep.subr.mxu0 0.0
    %804 = vmatpush2.msra.mxu0 0.0
    %805 = vmatprep.subr.mxu0 0.0
    %806 = vmatpush2.msra.mxu0 0.0
    %807 = vmatprep.subr.mxu0 0.0
    %808 = vmatpush2.msra.mxu0 0.0
    %809 = vmatprep.subr.mxu0 0.0
    %810 = vmatpush2.msra.mxu0 0.0
    %811 = vmatprep.subr.mxu0 0.0
    %812 = vmatpush2.msra.mxu0 0.0
    %813 = vmatprep.subr.mxu0 0.0
    %814 = vmatpush2.msra.mxu0 0.0
    %815 = vmatprep.mubr.f32.mxu0 0.0
    %816 = vmatmul.mubr.f32.gmra.mxu0 %v749
    %v817 = vpop.f32.mrf.mxu0
    %v818 = vadd.f32 0.0, %v817
    %v819 = vpop.f32.mrf.mxu0
    %820 = vdwg.mxu0
    %821 = vrot.lane.b32.xlu0 %v193, 64
    %v822 = vpop.permute.xlu0 %821
    %v825 = vsel %vm336, %v667, 0
    %827 = vmatprep.subr.mxu0 0.0
    %828 = vmatpush1.msra.mxu0 0.0
    %829 = vmatprep.subr.mxu0 0.0
    %830 = vmatpush1.msra.mxu0 0.0
    %831 = vmatprep.subr.mxu0 0.0
    %832 = vmatpush1.msra.mxu0 0.0
    %833 = vmatprep.subr.mxu0 0.0
    %834 = vmatpush1.msra.mxu0 0.0
    %835 = vmatprep.subr.mxu0 0.0
    %836 = vmatpush1.msra.mxu0 0.0
    %837 = vmatprep.subr.mxu0 0.0
    %838 = vmatpush1.msra.mxu0 0.0
    %839 = vmatprep.subr.mxu0 0.0
    %840 = vmatpush1.msra.mxu0 0.0
    %841 = vmatprep.subr.mxu0 0.0
    %842 = vmatpush1.msra.mxu0 0.0
    %843 = vmatprep.subr.mxu0 0.0
    %844 = vmatpush1.msra.mxu0 0.0
    %845 = vmatprep.subr.mxu0 0.0
    %846 = vmatpush1.msra.mxu0 0.0
    %847 = vmatprep.subr.mxu0 0.0
    %848 = vmatpush1.msra.mxu0 0.0
    %849 = vmatprep.subr.mxu0 0.0
    %850 = vmatpush1.msra.mxu0 0.0
    %851 = vmatprep.subr.mxu0 0.0
    %852 = vmatpush1.msra.mxu0 0.0
    %853 = vmatprep.subr.mxu0 0.0
    %854 = vmatpush1.msra.mxu0 0.0
    %855 = vmatprep.subr.mxu0 0.0
    %856 = vmatpush1.msra.mxu0 0.0
    %857 = vmatprep.subr.mxu0 0.0
    %858 = vmatpush1.msra.mxu0 %v822
    %859 = vmatprep.subr.mxu0 0.0
    %860 = vmatpush2.msra.mxu0 0.0
    %861 = vmatprep.subr.mxu0 0.0
    %862 = vmatpush2.msra.mxu0 0.0
    %863 = vmatprep.subr.mxu0 0.0
    %864 = vmatpush2.msra.mxu0 0.0
    %865 = vmatprep.subr.mxu0 0.0
    %866 = vmatpush2.msra.mxu0 0.0
    %867 = vmatprep.subr.mxu0 0.0
    %868 = vmatpush2.msra.mxu0 0.0
    %869 = vmatprep.subr.mxu0 0.0
    %870 = vmatpush2.msra.mxu0 0.0
    %871 = vmatprep.subr.mxu0 0.0
    %872 = vmatpush2.msra.mxu0 0.0
    %873 = vmatprep.subr.mxu0 0.0
    %874 = vmatpush2.msra.mxu0 0.0
    %875 = vmatprep.subr.mxu0 0.0
    %876 = vmatpush2.msra.mxu0 0.0
    %877 = vmatprep.subr.mxu0 0.0
    %878 = vmatpush2.msra.mxu0 0.0
    %879 = vmatprep.subr.mxu0 0.0
    %880 = vmatpush2.msra.mxu0 0.0
    %881 = vmatprep.subr.mxu0 0.0
    %882 = vmatpush2.msra.mxu0 0.0
    %883 = vmatprep.subr.mxu0 0.0
    %884 = vmatpush2.msra.mxu0 0.0
    %885 = vmatprep.subr.mxu0 0.0
    %886 = vmatpush2.msra.mxu0 0.0
    %887 = vmatprep.subr.mxu0 0.0
    %888 = vmatpush2.msra.mxu0 0.0
    %889 = vmatprep.subr.mxu0 0.0
    %890 = vmatpush2.msra.mxu0 0.0
    %891 = vmatprep.mubr.f32.mxu0 0.0
    %892 = vmatmul.mubr.f32.gmra.mxu0 %v825
    %v893 = vpop.f32.mrf.mxu0
    %v894 = vadd.f32 0.0, %v893
    %v895 = vpop.f32.mrf.mxu0
    %896 = vdwg.mxu0
    %897 = vrot.lane.b32.xlu0 %v195, 64
    %v898 = vpop.permute.xlu0 %897
    %v901 = vsel %vm336, %v668, 0
    %903 = vmatprep.subr.mxu0 0.0
    %904 = vmatpush1.msra.mxu0 0.0
    %905 = vmatprep.subr.mxu0 0.0
    %906 = vmatpush1.msra.mxu0 0.0
    %907 = vmatprep.subr.mxu0 0.0
    %908 = vmatpush1.msra.mxu0 0.0
    %909 = vmatprep.subr.mxu0 0.0
    %910 = vmatpush1.msra.mxu0 0.0
    %911 = vmatprep.subr.mxu0 0.0
    %912 = vmatpush1.msra.mxu0 0.0
    %913 = vmatprep.subr.mxu0 0.0
    %914 = vmatpush1.msra.mxu0 0.0
    %915 = vmatprep.subr.mxu0 0.0
    %916 = vmatpush1.msra.mxu0 0.0
    %917 = vmatprep.subr.mxu0 0.0
    %918 = vmatpush1.msra.mxu0 0.0
    %919 = vmatprep.subr.mxu0 0.0
    %920 = vmatpush1.msra.mxu0 0.0
    %921 = vmatprep.subr.mxu0 0.0
    %922 = vmatpush1.msra.mxu0 0.0
    %923 = vmatprep.subr.mxu0 0.0
    %924 = vmatpush1.msra.mxu0 0.0
    %925 = vmatprep.subr.mxu0 0.0
    %926 = vmatpush1.msra.mxu0 0.0
    %927 = vmatprep.subr.mxu0 0.0
    %928 = vmatpush1.msra.mxu0 0.0
    %929 = vmatprep.subr.mxu0 0.0
    %930 = vmatpush1.msra.mxu0 0.0
    %931 = vmatprep.subr.mxu0 0.0
    %932 = vmatpush1.msra.mxu0 0.0
    %933 = vmatprep.subr.mxu0 0.0
    %934 = vmatpush1.msra.mxu0 %v898
    %935 = vmatprep.subr.mxu0 0.0
    %936 = vmatpush2.msra.mxu0 0.0
    %937 = vmatprep.subr.mxu0 0.0
    %938 = vmatpush2.msra.mxu0 0.0
    %939 = vmatprep.subr.mxu0 0.0
    %940 = vmatpush2.msra.mxu0 0.0
    %941 = vmatprep.subr.mxu0 0.0
    %942 = vmatpush2.msra.mxu0 0.0
    %943 = vmatprep.subr.mxu0 0.0
    %944 = vmatpush2.msra.mxu0 0.0
    %945 = vmatprep.subr.mxu0 0.0
    %946 = vmatpush2.msra.mxu0 0.0
    %947 = vmatprep.subr.mxu0 0.0
    %948 = vmatpush2.msra.mxu0 0.0
    %949 = vmatprep.subr.mxu0 0.0
    %950 = vmatpush2.msra.mxu0 0.0
    %951 = vmatprep.subr.mxu0 0.0
    %952 = vmatpush2.msra.mxu0 0.0
    %953 = vmatprep.subr.mxu0 0.0
    %954 = vmatpush2.msra.mxu0 0.0
    %955 = vmatprep.subr.mxu0 0.0
    %956 = vmatpush2.msra.mxu0 0.0
    %957 = vmatprep.subr.mxu0 0.0
    %958 = vmatpush2.msra.mxu0 0.0
    %959 = vmatprep.subr.mxu0 0.0
    %960 = vmatpush2.msra.mxu0 0.0
    %961 = vmatprep.subr.mxu0 0.0
    %962 = vmatpush2.msra.mxu0 0.0
    %963 = vmatprep.subr.mxu0 0.0
    %964 = vmatpush2.msra.mxu0 0.0
    %965 = vmatprep.subr.mxu0 0.0
    %966 = vmatpush2.msra.mxu0 0.0
    %967 = vmatprep.mubr.f32.mxu0 0.0
    %968 = vmatmul.mubr.f32.gmra.mxu0 %v901
    %v969 = vpop.f32.mrf.mxu0
    %v970 = vadd.f32 0.0, %v969
    %v971 = vpop.f32.mrf.mxu0
    %972 = vdwg.mxu0
    %v974 = vsel %vm336, %v742, 0
    %976 = vmatprep.subr.mxu0 0.0
    %977 = vmatpush1.msra.mxu0 0.0
    %978 = vmatprep.subr.mxu0 0.0
    %979 = vmatpush1.msra.mxu0 0.0
    %980 = vmatprep.subr.mxu0 0.0
    %981 = vmatpush1.msra.mxu0 0.0
    %982 = vmatprep.subr.mxu0 0.0
    %983 = vmatpush1.msra.mxu0 0.0
    %984 = vmatprep.subr.mxu0 0.0
    %985 = vmatpush1.msra.mxu0 0.0
    %986 = vmatprep.subr.mxu0 0.0
    %987 = vmatpush1.msra.mxu0 0.0
    %988 = vmatprep.subr.mxu0 0.0
    %989 = vmatpush1.msra.mxu0 0.0
    %990 = vmatprep.subr.mxu0 0.0
    %991 = vmatpush1.msra.mxu0 0.0
    %992 = vmatprep.subr.mxu0 0.0
    %993 = vmatpush1.msra.mxu0 0.0
    %994 = vmatprep.subr.mxu0 0.0
    %995 = vmatpush1.msra.mxu0 0.0
    %996 = vmatprep.subr.mxu0 0.0
    %997 = vmatpush1.msra.mxu0 0.0
    %998 = vmatprep.subr.mxu0 0.0
    %999 = vmatpush1.msra.mxu0 0.0
    %1000 = vmatprep.subr.mxu0 0.0
    %1001 = vmatpush1.msra.mxu0 0.0
    %1002 = vmatprep.subr.mxu0 0.0
    %1003 = vmatpush1.msra.mxu0 0.0
    %1004 = vmatprep.subr.mxu0 0.0
    %1005 = vmatpush1.msra.mxu0 0.0
    %1006 = vmatprep.subr.mxu0 0.0
    %1007 = vmatpush1.msra.mxu0 %v72
    %1008 = vmatprep.subr.mxu0 0.0
    %1009 = vmatpush2.msra.mxu0 0.0
    %1010 = vmatprep.subr.mxu0 0.0
    %1011 = vmatpush2.msra.mxu0 0.0
    %1012 = vmatprep.subr.mxu0 0.0
    %1013 = vmatpush2.msra.mxu0 0.0
    %1014 = vmatprep.subr.mxu0 0.0
    %1015 = vmatpush2.msra.mxu0 0.0
    %1016 = vmatprep.subr.mxu0 0.0
    %1017 = vmatpush2.msra.mxu0 0.0
    %1018 = vmatprep.subr.mxu0 0.0
    %1019 = vmatpush2.msra.mxu0 0.0
    %1020 = vmatprep.subr.mxu0 0.0
    %1021 = vmatpush2.msra.mxu0 0.0
    %1022 = vmatprep.subr.mxu0 0.0
    %1023 = vmatpush2.msra.mxu0 0.0
    %1024 = vmatprep.subr.mxu0 0.0
    %1025 = vmatpush2.msra.mxu0 0.0
    %1026 = vmatprep.subr.mxu0 0.0
    %1027 = vmatpush2.msra.mxu0 0.0
    %1028 = vmatprep.subr.mxu0 0.0
    %1029 = vmatpush2.msra.mxu0 0.0
    %1030 = vmatprep.subr.mxu0 0.0
    %1031 = vmatpush2.msra.mxu0 0.0
    %1032 = vmatprep.subr.mxu0 0.0
    %1033 = vmatpush2.msra.mxu0 0.0
    %1034 = vmatprep.subr.mxu0 0.0
    %1035 = vmatpush2.msra.mxu0 0.0
    %1036 = vmatprep.subr.mxu0 0.0
    %1037 = vmatpush2.msra.mxu0 0.0
    %1038 = vmatprep.subr.mxu0 0.0
    %1039 = vmatpush2.msra.mxu0 0.0
    %1040 = vmatprep.mubr.f32.mxu0 0.0
    %1041 = vmatmul.mubr.f32.gmra.mxu0 %v974
    %v1042 = vpop.f32.mrf.mxu0
    %v1043 = vadd.f32 0.0, %v1042
    %v1044 = vpop.f32.mrf.mxu0
    %1045 = vdwg.mxu0
    %v1047 = vsel %vm336, %v818, 0
    %1049 = vmatprep.subr.mxu0 0.0
    %1050 = vmatpush1.msra.mxu0 0.0
    %1051 = vmatprep.subr.mxu0 0.0
    %1052 = vmatpush1.msra.mxu0 0.0
    %1053 = vmatprep.subr.mxu0 0.0
    %1054 = vmatpush1.msra.mxu0 0.0
    %1055 = vmatprep.subr.mxu0 0.0
    %1056 = vmatpush1.msra.mxu0 0.0
    %1057 = vmatprep.subr.mxu0 0.0
    %1058 = vmatpush1.msra.mxu0 0.0
    %1059 = vmatprep.subr.mxu0 0.0
    %1060 = vmatpush1.msra.mxu0 0.0
    %1061 = vmatprep.subr.mxu0 0.0
    %1062 = vmatpush1.msra.mxu0 0.0
    %1063 = vmatprep.subr.mxu0 0.0
    %1064 = vmatpush1.msra.mxu0 0.0
    %1065 = vmatprep.subr.mxu0 0.0
    %1066 = vmatpush1.msra.mxu0 0.0
    %1067 = vmatprep.subr.mxu0 0.0
    %1068 = vmatpush1.msra.mxu0 0.0
    %1069 = vmatprep.subr.mxu0 0.0
    %1070 = vmatpush1.msra.mxu0 0.0
    %1071 = vmatprep.subr.mxu0 0.0
    %1072 = vmatpush1.msra.mxu0 0.0
    %1073 = vmatprep.subr.mxu0 0.0
    %1074 = vmatpush1.msra.mxu0 0.0
    %1075 = vmatprep.subr.mxu0 0.0
    %1076 = vmatpush1.msra.mxu0 0.0
    %1077 = vmatprep.subr.mxu0 0.0
    %1078 = vmatpush1.msra.mxu0 0.0
    %1079 = vmatprep.subr.mxu0 0.0
    %1080 = vmatpush1.msra.mxu0 %v73
    %1081 = vmatprep.subr.mxu0 0.0
    %1082 = vmatpush2.msra.mxu0 0.0
    %1083 = vmatprep.subr.mxu0 0.0
    %1084 = vmatpush2.msra.mxu0 0.0
    %1085 = vmatprep.subr.mxu0 0.0
    %1086 = vmatpush2.msra.mxu0 0.0
    %1087 = vmatprep.subr.mxu0 0.0
    %1088 = vmatpush2.msra.mxu0 0.0
    %1089 = vmatprep.subr.mxu0 0.0
    %1090 = vmatpush2.msra.mxu0 0.0
    %1091 = vmatprep.subr.mxu0 0.0
    %1092 = vmatpush2.msra.mxu0 0.0
    %1093 = vmatprep.subr.mxu0 0.0
    %1094 = vmatpush2.msra.mxu0 0.0
    %1095 = vmatprep.subr.mxu0 0.0
    %1096 = vmatpush2.msra.mxu0 0.0
    %1097 = vmatprep.subr.mxu0 0.0
    %1098 = vmatpush2.msra.mxu0 0.0
    %1099 = vmatprep.subr.mxu0 0.0
    %1100 = vmatpush2.msra.mxu0 0.0
    %1101 = vmatprep.subr.mxu0 0.0
    %1102 = vmatpush2.msra.mxu0 0.0
    %1103 = vmatprep.subr.mxu0 0.0
    %1104 = vmatpush2.msra.mxu0 0.0
    %1105 = vmatprep.subr.mxu0 0.0
    %1106 = vmatpush2.msra.mxu0 0.0
    %1107 = vmatprep.subr.mxu0 0.0
    %1108 = vmatpush2.msra.mxu0 0.0
    %1109 = vmatprep.subr.mxu0 0.0
    %1110 = vmatpush2.msra.mxu0 0.0
    %1111 = vmatprep.subr.mxu0 0.0
    %1112 = vmatpush2.msra.mxu0 0.0
    %1113 = vmatprep.mubr.f32.mxu0 0.0
    %1114 = vmatmul.mubr.f32.gmra.mxu0 %v1047
    %v1115 = vpop.f32.mrf.mxu0
    %v1116 = vadd.f32 0.0, %v1115
    %v1117 = vpop.f32.mrf.mxu0
    %1118 = vdwg.mxu0
    %v1120 = vsel %vm336, %v894, 0
    %1122 = vmatprep.subr.mxu0 0.0
    %1123 = vmatpush1.msra.mxu0 0.0
    %1124 = vmatprep.subr.mxu0 0.0
    %1125 = vmatpush1.msra.mxu0 0.0
    %1126 = vmatprep.subr.mxu0 0.0
    %1127 = vmatpush1.msra.mxu0 0.0
    %1128 = vmatprep.subr.mxu0 0.0
    %1129 = vmatpush1.msra.mxu0 0.0
    %1130 = vmatprep.subr.mxu0 0.0
    %1131 = vmatpush1.msra.mxu0 0.0
    %1132 = vmatprep.subr.mxu0 0.0
    %1133 = vmatpush1.msra.mxu0 0.0
    %1134 = vmatprep.subr.mxu0 0.0
    %1135 = vmatpush1.msra.mxu0 0.0
    %1136 = vmatprep.subr.mxu0 0.0
    %1137 = vmatpush1.msra.mxu0 0.0
    %1138 = vmatprep.subr.mxu0 0.0
    %1139 = vmatpush1.msra.mxu0 0.0
    %1140 = vmatprep.subr.mxu0 0.0
    %1141 = vmatpush1.msra.mxu0 0.0
    %1142 = vmatprep.subr.mxu0 0.0
    %1143 = vmatpush1.msra.mxu0 0.0
    %1144 = vmatprep.subr.mxu0 0.0
    %1145 = vmatpush1.msra.mxu0 0.0
    %1146 = vmatprep.subr.mxu0 0.0
    %1147 = vmatpush1.msra.mxu0 0.0
    %1148 = vmatprep.subr.mxu0 0.0
    %1149 = vmatpush1.msra.mxu0 0.0
    %1150 = vmatprep.subr.mxu0 0.0
    %1151 = vmatpush1.msra.mxu0 0.0
    %1152 = vmatprep.subr.mxu0 0.0
    %1153 = vmatpush1.msra.mxu0 %v74
    %1154 = vmatprep.subr.mxu0 0.0
    %1155 = vmatpush2.msra.mxu0 0.0
    %1156 = vmatprep.subr.mxu0 0.0
    %1157 = vmatpush2.msra.mxu0 0.0
    %1158 = vmatprep.subr.mxu0 0.0
    %1159 = vmatpush2.msra.mxu0 0.0
    %1160 = vmatprep.subr.mxu0 0.0
    %1161 = vmatpush2.msra.mxu0 0.0
    %1162 = vmatprep.subr.mxu0 0.0
    %1163 = vmatpush2.msra.mxu0 0.0
    %1164 = vmatprep.subr.mxu0 0.0
    %1165 = vmatpush2.msra.mxu0 0.0
    %1166 = vmatprep.subr.mxu0 0.0
    %1167 = vmatpush2.msra.mxu0 0.0
    %1168 = vmatprep.subr.mxu0 0.0
    %1169 = vmatpush2.msra.mxu0 0.0
    %1170 = vmatprep.subr.mxu0 0.0
    %1171 = vmatpush2.msra.mxu0 0.0
    %1172 = vmatprep.subr.mxu0 0.0
    %1173 = vmatpush2.msra.mxu0 0.0
    %1174 = vmatprep.subr.mxu0 0.0
    %1175 = vmatpush2.msra.mxu0 0.0
    %1176 = vmatprep.subr.mxu0 0.0
    %1177 = vmatpush2.msra.mxu0 0.0
    %1178 = vmatprep.subr.mxu0 0.0
    %1179 = vmatpush2.msra.mxu0 0.0
    %1180 = vmatprep.subr.mxu0 0.0
    %1181 = vmatpush2.msra.mxu0 0.0
    %1182 = vmatprep.subr.mxu0 0.0
    %1183 = vmatpush2.msra.mxu0 0.0
    %1184 = vmatprep.subr.mxu0 0.0
    %1185 = vmatpush2.msra.mxu0 0.0
    %1186 = vmatprep.mubr.f32.mxu0 0.0
    %1187 = vmatmul.mubr.f32.gmra.mxu0 %v1120
    %v1188 = vpop.f32.mrf.mxu0
    %v1189 = vadd.f32 0.0, %v1188
    %v1190 = vpop.f32.mrf.mxu0
    %1191 = vdwg.mxu0
    %v1193 = vsel %vm336, %v970, 0
    %1195 = vmatprep.subr.mxu0 0.0
    %1196 = vmatpush1.msra.mxu0 0.0
    %1197 = vmatprep.subr.mxu0 0.0
    %1198 = vmatpush1.msra.mxu0 0.0
    %1199 = vmatprep.subr.mxu0 0.0
    %1200 = vmatpush1.msra.mxu0 0.0
    %1201 = vmatprep.subr.mxu0 0.0
    %1202 = vmatpush1.msra.mxu0 0.0
    %1203 = vmatprep.subr.mxu0 0.0
    %1204 = vmatpush1.msra.mxu0 0.0
    %1205 = vmatprep.subr.mxu0 0.0
    %1206 = vmatpush1.msra.mxu0 0.0
    %1207 = vmatprep.subr.mxu0 0.0
    %1208 = vmatpush1.msra.mxu0 0.0
    %1209 = vmatprep.subr.mxu0 0.0
    %1210 = vmatpush1.msra.mxu0 0.0
    %1211 = vmatprep.subr.mxu0 0.0
    %1212 = vmatpush1.msra.mxu0 0.0
    %1213 = vmatprep.subr.mxu0 0.0
    %1214 = vmatpush1.msra.mxu0 0.0
    %1215 = vmatprep.subr.mxu0 0.0
    %1216 = vmatpush1.msra.mxu0 0.0
    %1217 = vmatprep.subr.mxu0 0.0
    %1218 = vmatpush1.msra.mxu0 0.0
    %1219 = vmatprep.subr.mxu0 0.0
    %1220 = vmatpush1.msra.mxu0 0.0
    %1221 = vmatprep.subr.mxu0 0.0
    %1222 = vmatpush1.msra.mxu0 0.0
    %1223 = vmatprep.subr.mxu0 0.0
    %1224 = vmatpush1.msra.mxu0 0.0
    %1225 = vmatprep.subr.mxu0 0.0
    %1226 = vmatpush1.msra.mxu0 %v75
    %1227 = vmatprep.subr.mxu0 0.0
    %1228 = vmatpush2.msra.mxu0 0.0
    %1229 = vmatprep.subr.mxu0 0.0
    %1230 = vmatpush2.msra.mxu0 0.0
    %1231 = vmatprep.subr.mxu0 0.0
    %1232 = vmatpush2.msra.mxu0 0.0
    %1233 = vmatprep.subr.mxu0 0.0
    %1234 = vmatpush2.msra.mxu0 0.0
    %1235 = vmatprep.subr.mxu0 0.0
    %1236 = vmatpush2.msra.mxu0 0.0
    %1237 = vmatprep.subr.mxu0 0.0
    %1238 = vmatpush2.msra.mxu0 0.0
    %1239 = vmatprep.subr.mxu0 0.0
    %1240 = vmatpush2.msra.mxu0 0.0
    %1241 = vmatprep.subr.mxu0 0.0
    %1242 = vmatpush2.msra.mxu0 0.0
    %1243 = vmatprep.subr.mxu0 0.0
    %1244 = vmatpush2.msra.mxu0 0.0
    %1245 = vmatprep.subr.mxu0 0.0
    %1246 = vmatpush2.msra.mxu0 0.0
    %1247 = vmatprep.subr.mxu0 0.0
    %1248 = vmatpush2.msra.mxu0 0.0
    %1249 = vmatprep.subr.mxu0 0.0
    %1250 = vmatpush2.msra.mxu0 0.0
    %1251 = vmatprep.subr.mxu0 0.0
    %1252 = vmatpush2.msra.mxu0 0.0
    %1253 = vmatprep.subr.mxu0 0.0
    %1254 = vmatpush2.msra.mxu0 0.0
    %1255 = vmatprep.subr.mxu0 0.0
    %1256 = vmatpush2.msra.mxu0 0.0
    %1257 = vmatprep.subr.mxu0 0.0
    %1258 = vmatpush2.msra.mxu0 0.0
    %1259 = vmatprep.mubr.f32.mxu0 0.0
    %1260 = vmatmul.mubr.f32.gmra.mxu0 %v1193
    %v1261 = vpop.f32.mrf.mxu0
    %v1262 = vadd.f32 0.0, %v1261
    %v1263 = vpop.f32.mrf.mxu0
    %1264 = vdwg.mxu0
    %v1265 = vsel %vm91, %v1043, 0.0
    %v1266 = vsel %vm91, %v1116, 0.0
    %v1267 = vadd.f32 %v1265, %v1266
    %v1268 = vsel %vm91, %v1189, 0.0
    %v1269 = vadd.f32 %v1267, %v1268
    %v1270 = vsel %vm91, %v1262, 0.0
    %v1271 = vadd.f32 %v1269, %v1270
    %v1272 = vadd.f32 %v88, %v1271
    %v1273 = vsel %vm91, %v1272, 0.0
    %1274 = vadd.xlane.f32.xlu0 %v1273
    %v1275 = vpop.xlane.xlu0 %1274
    %v1276 = vmul.f32 %v1275, %v95
    %v1277 = vsub.f32 %v1272, %v1276
    %v1278 = vmul.f32 %v1277, %v1277
    %v1279 = vsel %vm91, %v1278, 0.0
    %1280 = vadd.xlane.f32.xlu0 %v1279
    %v1281 = vpop.xlane.xlu0 %1280
    %v1282 = vmul.f32 %v1281, %v95
    %v1283 = vadd.f32 %v1282, 1e-05
    %v1284 = vrsqrt.pop %v1283
    %v1285 = vmul.f32 %v1277, %v1284
    %v1286 = vlaneseq
    %v1287 = vshrl.u32 %v1286, 7
    %v1288 = vsub.s32 2, %v1287
    %v1289 = vrot.slane %v63, %v1288
    %v1290 = vmul.f32 %v1285, %v1289
    %v1291 = vlaneseq
    %v1292 = vshrl.u32 %v1291, 7
    %v1293 = vsub.s32 3, %v1292
    %v1294 = vrot.slane %v63, %v1293
    %v1295 = vadd.f32 %v1290, %v1294
    %1300 = vrot.lane.b32.xlu0 %v64, 32
    %v1301 = vpop.permute.xlu0 %1300
    %1302 = vrot.lane.b32.xlu0 %v66, 32
    %v1303 = vpop.permute.xlu0 %1302
    %1304 = vrot.lane.b32.xlu0 %v68, 32
    %v1305 = vpop.permute.xlu0 %1304
    %1306 = vrot.lane.b32.xlu0 %v70, 32
    %v1307 = vpop.permute.xlu0 %1306
    %v1313 = vsel %vm91, %v1295, 0
    %1315 = vmatprep.subr.mxu0 0.0
    %1316 = vmatpush1.msra.mxu0 0.0
    %1317 = vmatprep.subr.mxu0 0.0
    %1318 = vmatpush1.msra.mxu0 0.0
    %1319 = vmatprep.subr.mxu0 0.0
    %1320 = vmatpush1.msra.mxu0 0.0
    %1321 = vmatprep.subr.mxu0 0.0
    %1322 = vmatpush1.msra.mxu0 0.0
    %1323 = vmatprep.subr.mxu0 0.0
    %1324 = vmatpush1.msra.mxu0 0.0
    %1325 = vmatprep.subr.mxu0 0.0
    %1326 = vmatpush1.msra.mxu0 0.0
    %1327 = vmatprep.subr.mxu0 0.0
    %1328 = vmatpush1.msra.mxu0 0.0
    %1329 = vmatprep.subr.mxu0 0.0
    %1330 = vmatpush1.msra.mxu0 0.0
    %1331 = vmatprep.subr.mxu0 0.0
    %1332 = vmatpush1.msra.mxu0 0.0
    %1333 = vmatprep.subr.mxu0 0.0
    %1334 = vmatpush1.msra.mxu0 0.0
    %1335 = vmatprep.subr.mxu0 0.0
    %1336 = vmatpush1.msra.mxu0 0.0
    %1337 = vmatprep.subr.mxu0 0.0
    %1338 = vmatpush1.msra.mxu0 0.0
    %1339 = vmatprep.subr.mxu0 0.0
    %1340 = vmatpush1.msra.mxu0 %v1307
    %1341 = vmatprep.subr.mxu0 0.0
    %1342 = vmatpush1.msra.mxu0 %v1305
    %1343 = vmatprep.subr.mxu0 0.0
    %1344 = vmatpush1.msra.mxu0 %v1303
    %1345 = vmatprep.subr.mxu0 0.0
    %1346 = vmatpush1.msra.mxu0 %v1301
    %1347 = vmatprep.subr.mxu0 0.0
    %1348 = vmatpush2.msra.mxu0 0.0
    %1349 = vmatprep.subr.mxu0 0.0
    %1350 = vmatpush2.msra.mxu0 0.0
    %1351 = vmatprep.subr.mxu0 0.0
    %1352 = vmatpush2.msra.mxu0 0.0
    %1353 = vmatprep.subr.mxu0 0.0
    %1354 = vmatpush2.msra.mxu0 0.0
    %1355 = vmatprep.subr.mxu0 0.0
    %1356 = vmatpush2.msra.mxu0 0.0
    %1357 = vmatprep.subr.mxu0 0.0
    %1358 = vmatpush2.msra.mxu0 0.0
    %1359 = vmatprep.subr.mxu0 0.0
    %1360 = vmatpush2.msra.mxu0 0.0
    %1361 = vmatprep.subr.mxu0 0.0
    %1362 = vmatpush2.msra.mxu0 0.0
    %1363 = vmatprep.subr.mxu0 0.0
    %1364 = vmatpush2.msra.mxu0 0.0
    %1365 = vmatprep.subr.mxu0 0.0
    %1366 = vmatpush2.msra.mxu0 0.0
    %1367 = vmatprep.subr.mxu0 0.0
    %1368 = vmatpush2.msra.mxu0 0.0
    %1369 = vmatprep.subr.mxu0 0.0
    %1370 = vmatpush2.msra.mxu0 0.0
    %1371 = vmatprep.subr.mxu0 0.0
    %1372 = vmatpush2.msra.mxu0 0.0
    %1373 = vmatprep.subr.mxu0 0.0
    %1374 = vmatpush2.msra.mxu0 0.0
    %1375 = vmatprep.subr.mxu0 0.0
    %1376 = vmatpush2.msra.mxu0 0.0
    %1377 = vmatprep.subr.mxu0 0.0
    %1378 = vmatpush2.msra.mxu0 0.0
    %1379 = vmatprep.mubr.f32.mxu0 0.0
    %1380 = vmatmul.mubr.f32.gmra.mxu0 %v1313
    %v1381 = vpop.f32.mrf.mxu0
    %v1382 = vadd.f32 0.0, %v1381
    %v1383 = vpop.f32.mrf.mxu0
    %1384 = vdwg.mxu0
    %v1386 = vsel %vm91, %v89, 0
    %v1389 = vsel %vm91, %v90, 0
    %1391 = vmatprep.subr.mxu0 0.0
    %1392 = vmatpush1.msra.mxu0 0.0
    %1393 = vmatprep.subr.mxu0 0.0
    %1394 = vmatpush1.msra.mxu0 0.0
    %1395 = vmatprep.subr.mxu0 0.0
    %1396 = vmatpush1.msra.mxu0 0.0
    %1397 = vmatprep.subr.mxu0 0.0
    %1398 = vmatpush1.msra.mxu0 0.0
    %1399 = vmatprep.subr.mxu0 0.0
    %1400 = vmatpush1.msra.mxu0 0.0
    %1401 = vmatprep.subr.mxu0 0.0
    %1402 = vmatpush1.msra.mxu0 0.0
    %1403 = vmatprep.subr.mxu0 0.0
    %1404 = vmatpush1.msra.mxu0 0.0
    %1405 = vmatprep.subr.mxu0 0.0
    %1406 = vmatpush1.msra.mxu0 0.0
    %1407 = vmatprep.subr.mxu0 0.0
    %1408 = vmatpush1.msra.mxu0 0.0
    %1409 = vmatprep.subr.mxu0 0.0
    %1410 = vmatpush1.msra.mxu0 0.0
    %1411 = vmatprep.subr.mxu0 0.0
    %1412 = vmatpush1.msra.mxu0 0.0
    %1413 = vmatprep.subr.mxu0 0.0
    %1414 = vmatpush1.msra.mxu0 0.0
    %1415 = vmatprep.subr.mxu0 0.0
    %1416 = vmatpush1.msra.mxu0 %v71
    %1417 = vmatprep.subr.mxu0 0.0
    %1418 = vmatpush1.msra.mxu0 %v69
    %1419 = vmatprep.subr.mxu0 0.0
    %1420 = vmatpush1.msra.mxu0 %v67
    %1421 = vmatprep.subr.mxu0 0.0
    %1422 = vmatpush1.msra.mxu0 %v65
    %1423 = vmatprep.subr.mxu0 0.0
    %1424 = vmatpush2.msra.mxu0 0.0
    %1425 = vmatprep.subr.mxu0 0.0
    %1426 = vmatpush2.msra.mxu0 0.0
    %1427 = vmatprep.subr.mxu0 0.0
    %1428 = vmatpush2.msra.mxu0 0.0
    %1429 = vmatprep.subr.mxu0 0.0
    %1430 = vmatpush2.msra.mxu0 0.0
    %1431 = vmatprep.subr.mxu0 0.0
    %1432 = vmatpush2.msra.mxu0 0.0
    %1433 = vmatprep.subr.mxu0 0.0
    %1434 = vmatpush2.msra.mxu0 0.0
    %1435 = vmatprep.subr.mxu0 0.0
    %1436 = vmatpush2.msra.mxu0 0.0
    %1437 = vmatprep.subr.mxu0 0.0
    %1438 = vmatpush2.msra.mxu0 0.0
    %1439 = vmatprep.subr.mxu0 0.0
    %1440 = vmatpush2.msra.mxu0 0.0
    %1441 = vmatprep.subr.mxu0 0.0
    %1442 = vmatpush2.msra.mxu0 0.0
    %1443 = vmatprep.subr.mxu0 0.0
    %1444 = vmatpush2.msra.mxu0 0.0
    %1445 = vmatprep.subr.mxu0 0.0
    %1446 = vmatpush2.msra.mxu0 0.0
    %1447 = vmatprep.subr.mxu0 0.0
    %1448 = vmatpush2.msra.mxu0 0.0
    %1449 = vmatprep.subr.mxu0 0.0
    %1450 = vmatpush2.msra.mxu0 0.0
    %1451 = vmatprep.subr.mxu0 0.0
    %1452 = vmatpush2.msra.mxu0 0.0
    %1453 = vmatprep.subr.mxu0 0.0
    %1454 = vmatpush2.msra.mxu0 0.0
    %1455 = vmatprep.mubr.f32.mxu0 0.0
    %1456 = vmatmul.mubr.f32.gmra.mxu0 %v1386
    %v1457 = vpop.f32.mrf.mxu0
    %v1458 = vadd.f32 0.0, %v1457
    %v1459 = vpop.f32.mrf.mxu0
    %1460 = vmatprep.mubr.f32.mxu0 0.0
    %1461 = vmatmul.mubr.f32.gmra.mxu0 %v1389
    %v1462 = vpop.f32.mrf.mxu0
    %v1463 = vadd.f32 0.0, %v1462
    %v1464 = vpop.f32.mrf.mxu0
    %1465 = vdwg.mxu0
    %1467 = vrot.lane.b32.xlu0 %v1382, 120
    %v1468 = vpop.permute.xlu0 %1467
    %1469 = vrot.lane.b32.xlu0 %v1382, 112
    %v1470 = vpop.permute.xlu0 %1469
    %1471 = vrot.lane.b32.xlu0 %v1382, 104
    %v1472 = vpop.permute.xlu0 %1471
    %1475 = vrot.lane.b32.xlu0 %v1458, 120
    %v1476 = vpop.permute.xlu0 %1475
    %1477 = vrot.lane.b32.xlu0 %v1463, 120
    %v1478 = vpop.permute.xlu0 %1477
    %1481 = vrot.lane.b32.xlu0 %v1458, 112
    %v1482 = vpop.permute.xlu0 %1481
    %1483 = vrot.lane.b32.xlu0 %v1463, 112
    %v1484 = vpop.permute.xlu0 %1483
    %1487 = vrot.lane.b32.xlu0 %v1458, 104
    %v1488 = vpop.permute.xlu0 %1487
    %1489 = vrot.lane.b32.xlu0 %v1463, 104
    %v1490 = vpop.permute.xlu0 %1489
    %1493 = vxpose.xlu0.b32.start [1/16] %v1458, 128
    %1494 = vxpose.xlu0.b32.cont [2/16] %v1463, 128
    %1495 = vxpose.xlu0.b32.cont [3/16] 0.0, 128
    %1496 = vxpose.xlu0.b32.cont [4/16] 0.0, 128
    %1497 = vxpose.xlu0.b32.cont [5/16] 0.0, 128
    %1498 = vxpose.xlu0.b32.cont [6/16] 0.0, 128
    %1499 = vxpose.xlu0.b32.cont [7/16] 0.0, 128
    %1500 = vxpose.xlu0.b32.cont [8/16] 0.0, 128
    %1501 = vxpose.xlu0.b32.cont [9/16] 0.0, 128
    %1502 = vxpose.xlu0.b32.cont [10/16] 0.0, 128
    %1503 = vxpose.xlu0.b32.cont [11/16] 0.0, 128
    %1504 = vxpose.xlu0.b32.cont [12/16] 0.0, 128
    %1505 = vxpose.xlu0.b32.cont [13/16] 0.0, 128
    %1506 = vxpose.xlu0.b32.cont [14/16] 0.0, 128
    %1507 = vxpose.xlu0.b32.cont [15/16] 0.0, 128
    %1508 = vxpose.xlu0.b32.end [16/16] 0.0, 128
    %v1509 = vpop.trf.xlu0
    %v1510 = vpop.trf.xlu0
    %v1511 = vpop.trf.xlu0
    %v1512 = vpop.trf.xlu0
    %v1513 = vpop.trf.xlu0
    %v1514 = vpop.trf.xlu0
    %v1515 = vpop.trf.xlu0
    %v1516 = vpop.trf.xlu0
    %v1517 = vpop.trf.xlu0
    %v1518 = vpop.trf.xlu0
    %v1519 = vpop.trf.xlu0
    %v1520 = vpop.trf.xlu0
    %v1521 = vpop.trf.xlu0
    %v1522 = vpop.trf.xlu0
    %v1523 = vpop.trf.xlu0
    %v1524 = vpop.trf.xlu0
    %1525 = vxpose.xlu0.b32.start [1/16] %v1476, 128
    %1526 = vxpose.xlu0.b32.cont [2/16] %v1478, 128
    %1527 = vxpose.xlu0.b32.cont [3/16] 0.0, 128
    %1528 = vxpose.xlu0.b32.cont [4/16] 0.0, 128
    %1529 = vxpose.xlu0.b32.cont [5/16] 0.0, 128
    %1530 = vxpose.xlu0.b32.cont [6/16] 0.0, 128
    %1531 = vxpose.xlu0.b32.cont [7/16] 0.0, 128
    %1532 = vxpose.xlu0.b32.cont [8/16] 0.0, 128
    %1533 = vxpose.xlu0.b32.cont [9/16] 0.0, 128
    %1534 = vxpose.xlu0.b32.cont [10/16] 0.0, 128
    %1535 = vxpose.xlu0.b32.cont [11/16] 0.0, 128
    %1536 = vxpose.xlu0.b32.cont [12/16] 0.0, 128
    %1537 = vxpose.xlu0.b32.cont [13/16] 0.0, 128
    %1538 = vxpose.xlu0.b32.cont [14/16] 0.0, 128
    %1539 = vxpose.xlu0.b32.cont [15/16] 0.0, 128
    %1540 = vxpose.xlu0.b32.end [16/16] 0.0, 128
    %v1541 = vpop.trf.xlu0
    %v1542 = vpop.trf.xlu0
    %v1543 = vpop.trf.xlu0
    %v1544 = vpop.trf.xlu0
    %v1545 = vpop.trf.xlu0
    %v1546 = vpop.trf.xlu0
    %v1547 = vpop.trf.xlu0
    %v1548 = vpop.trf.xlu0
    %v1549 = vpop.trf.xlu0
    %v1550 = vpop.trf.xlu0
    %v1551 = vpop.trf.xlu0
    %v1552 = vpop.trf.xlu0
    %v1553 = vpop.trf.xlu0
    %v1554 = vpop.trf.xlu0
    %v1555 = vpop.trf.xlu0
    %v1556 = vpop.trf.xlu0
    %1557 = vxpose.xlu0.b32.start [1/16] %v1482, 128
    %1558 = vxpose.xlu0.b32.cont [2/16] %v1484, 128
    %1559 = vxpose.xlu0.b32.cont [3/16] 0.0, 128
    %1560 = vxpose.xlu0.b32.cont [4/16] 0.0, 128
    %1561 = vxpose.xlu0.b32.cont [5/16] 0.0, 128
    %1562 = vxpose.xlu0.b32.cont [6/16] 0.0, 128
    %1563 = vxpose.xlu0.b32.cont [7/16] 0.0, 128
    %1564 = vxpose.xlu0.b32.cont [8/16] 0.0, 128
    %1565 = vxpose.xlu0.b32.cont [9/16] 0.0, 128
    %1566 = vxpose.xlu0.b32.cont [10/16] 0.0, 128
    %1567 = vxpose.xlu0.b32.cont [11/16] 0.0, 128
    %1568 = vxpose.xlu0.b32.cont [12/16] 0.0, 128
    %1569 = vxpose.xlu0.b32.cont [13/16] 0.0, 128
    %1570 = vxpose.xlu0.b32.cont [14/16] 0.0, 128
    %1571 = vxpose.xlu0.b32.cont [15/16] 0.0, 128
    %1572 = vxpose.xlu0.b32.end [16/16] 0.0, 128
    %v1573 = vpop.trf.xlu0
    %v1574 = vpop.trf.xlu0
    %v1575 = vpop.trf.xlu0
    %v1576 = vpop.trf.xlu0
    %v1577 = vpop.trf.xlu0
    %v1578 = vpop.trf.xlu0
    %v1579 = vpop.trf.xlu0
    %v1580 = vpop.trf.xlu0
    %v1581 = vpop.trf.xlu0
    %v1582 = vpop.trf.xlu0
    %v1583 = vpop.trf.xlu0
    %v1584 = vpop.trf.xlu0
    %v1585 = vpop.trf.xlu0
    %v1586 = vpop.trf.xlu0
    %v1587 = vpop.trf.xlu0
    %v1588 = vpop.trf.xlu0
    %1589 = vxpose.xlu0.b32.start [1/16] %v1488, 128
    %1590 = vxpose.xlu0.b32.cont [2/16] %v1490, 128
    %1591 = vxpose.xlu0.b32.cont [3/16] 0.0, 128
    %1592 = vxpose.xlu0.b32.cont [4/16] 0.0, 128
    %1593 = vxpose.xlu0.b32.cont [5/16] 0.0, 128
    %1594 = vxpose.xlu0.b32.cont [6/16] 0.0, 128
    %1595 = vxpose.xlu0.b32.cont [7/16] 0.0, 128
    %1596 = vxpose.xlu0.b32.cont [8/16] 0.0, 128
    %1597 = vxpose.xlu0.b32.cont [9/16] 0.0, 128
    %1598 = vxpose.xlu0.b32.cont [10/16] 0.0, 128
    %1599 = vxpose.xlu0.b32.cont [11/16] 0.0, 128
    %1600 = vxpose.xlu0.b32.cont [12/16] 0.0, 128
    %1601 = vxpose.xlu0.b32.cont [13/16] 0.0, 128
    %1602 = vxpose.xlu0.b32.cont [14/16] 0.0, 128
    %1603 = vxpose.xlu0.b32.cont [15/16] 0.0, 128
    %1604 = vxpose.xlu0.b32.end [16/16] 0.0, 128
    %v1605 = vpop.trf.xlu0
    %v1606 = vpop.trf.xlu0
    %v1607 = vpop.trf.xlu0
    %v1608 = vpop.trf.xlu0
    %v1609 = vpop.trf.xlu0
    %v1610 = vpop.trf.xlu0
    %v1611 = vpop.trf.xlu0
    %v1612 = vpop.trf.xlu0
    %v1613 = vpop.trf.xlu0
    %v1614 = vpop.trf.xlu0
    %v1615 = vpop.trf.xlu0
    %v1616 = vpop.trf.xlu0
    %v1617 = vpop.trf.xlu0
    %v1618 = vpop.trf.xlu0
    %v1619 = vpop.trf.xlu0
    %v1620 = vpop.trf.xlu0
    %v1621 = vsel %vm336, %v1382, 0
    %1623 = vmatprep.subr.mxu0 0.0
    %1624 = vmatpush1.msra.mxu0 0.0
    %1625 = vmatprep.subr.mxu0 0.0
    %1626 = vmatpush1.msra.mxu0 0.0
    %1627 = vmatprep.subr.mxu0 0.0
    %1628 = vmatpush1.msra.mxu0 0.0
    %1629 = vmatprep.subr.mxu0 0.0
    %1630 = vmatpush1.msra.mxu0 0.0
    %1631 = vmatprep.subr.mxu0 0.0
    %1632 = vmatpush1.msra.mxu0 0.0
    %1633 = vmatprep.subr.mxu0 0.0
    %1634 = vmatpush1.msra.mxu0 0.0
    %1635 = vmatprep.subr.mxu0 0.0
    %1636 = vmatpush1.msra.mxu0 0.0
    %1637 = vmatprep.subr.mxu0 0.0
    %1638 = vmatpush1.msra.mxu0 0.0
    %1639 = vmatprep.subr.mxu0 0.0
    %1640 = vmatpush1.msra.mxu0 0.0
    %1641 = vmatprep.subr.mxu0 0.0
    %1642 = vmatpush1.msra.mxu0 0.0
    %1643 = vmatprep.subr.mxu0 0.0
    %1644 = vmatpush1.msra.mxu0 0.0
    %1645 = vmatprep.subr.mxu0 0.0
    %1646 = vmatpush1.msra.mxu0 0.0
    %1647 = vmatprep.subr.mxu0 0.0
    %1648 = vmatpush1.msra.mxu0 0.0
    %1649 = vmatprep.subr.mxu0 0.0
    %1650 = vmatpush1.msra.mxu0 0.0
    %1651 = vmatprep.subr.mxu0 0.0
    %1652 = vmatpush1.msra.mxu0 0.0
    %1653 = vmatprep.subr.mxu0 0.0
    %1654 = vmatpush1.msra.mxu0 %v1509
    %1655 = vmatprep.subr.mxu0 0.0
    %1656 = vmatpush2.msra.mxu0 0.0
    %1657 = vmatprep.subr.mxu0 0.0
    %1658 = vmatpush2.msra.mxu0 0.0
    %1659 = vmatprep.subr.mxu0 0.0
    %1660 = vmatpush2.msra.mxu0 0.0
    %1661 = vmatprep.subr.mxu0 0.0
    %1662 = vmatpush2.msra.mxu0 0.0
    %1663 = vmatprep.subr.mxu0 0.0
    %1664 = vmatpush2.msra.mxu0 0.0
    %1665 = vmatprep.subr.mxu0 0.0
    %1666 = vmatpush2.msra.mxu0 0.0
    %1667 = vmatprep.subr.mxu0 0.0
    %1668 = vmatpush2.msra.mxu0 0.0
    %1669 = vmatprep.subr.mxu0 0.0
    %1670 = vmatpush2.msra.mxu0 0.0
    %1671 = vmatprep.subr.mxu0 0.0
    %1672 = vmatpush2.msra.mxu0 0.0
    %1673 = vmatprep.subr.mxu0 0.0
    %1674 = vmatpush2.msra.mxu0 0.0
    %1675 = vmatprep.subr.mxu0 0.0
    %1676 = vmatpush2.msra.mxu0 0.0
    %1677 = vmatprep.subr.mxu0 0.0
    %1678 = vmatpush2.msra.mxu0 0.0
    %1679 = vmatprep.subr.mxu0 0.0
    %1680 = vmatpush2.msra.mxu0 0.0
    %1681 = vmatprep.subr.mxu0 0.0
    %1682 = vmatpush2.msra.mxu0 0.0
    %1683 = vmatprep.subr.mxu0 0.0
    %1684 = vmatpush2.msra.mxu0 0.0
    %1685 = vmatprep.subr.mxu0 0.0
    %1686 = vmatpush2.msra.mxu0 0.0
    %1687 = vmatprep.mubr.f32.mxu0 0.0
    %1688 = vmatmul.mubr.f32.gmra.mxu0 %v1621
    %v1689 = vpop.f32.mrf.mxu0
    %v1690 = vadd.f32 0.0, %v1689
    %v1691 = vpop.f32.mrf.mxu0
    %1692 = vdwg.mxu0
    %v1693 = vsel %vm336, %v1468, 0
    %1695 = vmatprep.subr.mxu0 0.0
    %1696 = vmatpush1.msra.mxu0 0.0
    %1697 = vmatprep.subr.mxu0 0.0
    %1698 = vmatpush1.msra.mxu0 0.0
    %1699 = vmatprep.subr.mxu0 0.0
    %1700 = vmatpush1.msra.mxu0 0.0
    %1701 = vmatprep.subr.mxu0 0.0
    %1702 = vmatpush1.msra.mxu0 0.0
    %1703 = vmatprep.subr.mxu0 0.0
    %1704 = vmatpush1.msra.mxu0 0.0
    %1705 = vmatprep.subr.mxu0 0.0
    %1706 = vmatpush1.msra.mxu0 0.0
    %1707 = vmatprep.subr.mxu0 0.0
    %1708 = vmatpush1.msra.mxu0 0.0
    %1709 = vmatprep.subr.mxu0 0.0
    %1710 = vmatpush1.msra.mxu0 0.0
    %1711 = vmatprep.subr.mxu0 0.0
    %1712 = vmatpush1.msra.mxu0 0.0
    %1713 = vmatprep.subr.mxu0 0.0
    %1714 = vmatpush1.msra.mxu0 0.0
    %1715 = vmatprep.subr.mxu0 0.0
    %1716 = vmatpush1.msra.mxu0 0.0
    %1717 = vmatprep.subr.mxu0 0.0
    %1718 = vmatpush1.msra.mxu0 0.0
    %1719 = vmatprep.subr.mxu0 0.0
    %1720 = vmatpush1.msra.mxu0 0.0
    %1721 = vmatprep.subr.mxu0 0.0
    %1722 = vmatpush1.msra.mxu0 0.0
    %1723 = vmatprep.subr.mxu0 0.0
    %1724 = vmatpush1.msra.mxu0 0.0
    %1725 = vmatprep.subr.mxu0 0.0
    %1726 = vmatpush1.msra.mxu0 %v1541
    %1727 = vmatprep.subr.mxu0 0.0
    %1728 = vmatpush2.msra.mxu0 0.0
    %1729 = vmatprep.subr.mxu0 0.0
    %1730 = vmatpush2.msra.mxu0 0.0
    %1731 = vmatprep.subr.mxu0 0.0
    %1732 = vmatpush2.msra.mxu0 0.0
    %1733 = vmatprep.subr.mxu0 0.0
    %1734 = vmatpush2.msra.mxu0 0.0
    %1735 = vmatprep.subr.mxu0 0.0
    %1736 = vmatpush2.msra.mxu0 0.0
    %1737 = vmatprep.subr.mxu0 0.0
    %1738 = vmatpush2.msra.mxu0 0.0
    %1739 = vmatprep.subr.mxu0 0.0
    %1740 = vmatpush2.msra.mxu0 0.0
    %1741 = vmatprep.subr.mxu0 0.0
    %1742 = vmatpush2.msra.mxu0 0.0
    %1743 = vmatprep.subr.mxu0 0.0
    %1744 = vmatpush2.msra.mxu0 0.0
    %1745 = vmatprep.subr.mxu0 0.0
    %1746 = vmatpush2.msra.mxu0 0.0
    %1747 = vmatprep.subr.mxu0 0.0
    %1748 = vmatpush2.msra.mxu0 0.0
    %1749 = vmatprep.subr.mxu0 0.0
    %1750 = vmatpush2.msra.mxu0 0.0
    %1751 = vmatprep.subr.mxu0 0.0
    %1752 = vmatpush2.msra.mxu0 0.0
    %1753 = vmatprep.subr.mxu0 0.0
    %1754 = vmatpush2.msra.mxu0 0.0
    %1755 = vmatprep.subr.mxu0 0.0
    %1756 = vmatpush2.msra.mxu0 0.0
    %1757 = vmatprep.subr.mxu0 0.0
    %1758 = vmatpush2.msra.mxu0 0.0
    %1759 = vmatprep.mubr.f32.mxu0 0.0
    %1760 = vmatmul.mubr.f32.gmra.mxu0 %v1693
    %v1761 = vpop.f32.mrf.mxu0
    %v1762 = vadd.f32 0.0, %v1761
    %v1763 = vpop.f32.mrf.mxu0
    %1764 = vdwg.mxu0
    %v1765 = vsel %vm336, %v1470, 0
    %1767 = vmatprep.subr.mxu0 0.0
    %1768 = vmatpush1.msra.mxu0 0.0
    %1769 = vmatprep.subr.mxu0 0.0
    %1770 = vmatpush1.msra.mxu0 0.0
    %1771 = vmatprep.subr.mxu0 0.0
    %1772 = vmatpush1.msra.mxu0 0.0
    %1773 = vmatprep.subr.mxu0 0.0
    %1774 = vmatpush1.msra.mxu0 0.0
    %1775 = vmatprep.subr.mxu0 0.0
    %1776 = vmatpush1.msra.mxu0 0.0
    %1777 = vmatprep.subr.mxu0 0.0
    %1778 = vmatpush1.msra.mxu0 0.0
    %1779 = vmatprep.subr.mxu0 0.0
    %1780 = vmatpush1.msra.mxu0 0.0
    %1781 = vmatprep.subr.mxu0 0.0
    %1782 = vmatpush1.msra.mxu0 0.0
    %1783 = vmatprep.subr.mxu0 0.0
    %1784 = vmatpush1.msra.mxu0 0.0
    %1785 = vmatprep.subr.mxu0 0.0
    %1786 = vmatpush1.msra.mxu0 0.0
    %1787 = vmatprep.subr.mxu0 0.0
    %1788 = vmatpush1.msra.mxu0 0.0
    %1789 = vmatprep.subr.mxu0 0.0
    %1790 = vmatpush1.msra.mxu0 0.0
    %1791 = vmatprep.subr.mxu0 0.0
    %1792 = vmatpush1.msra.mxu0 0.0
    %1793 = vmatprep.subr.mxu0 0.0
    %1794 = vmatpush1.msra.mxu0 0.0
    %1795 = vmatprep.subr.mxu0 0.0
    %1796 = vmatpush1.msra.mxu0 0.0
    %1797 = vmatprep.subr.mxu0 0.0
    %1798 = vmatpush1.msra.mxu0 %v1573
    %1799 = vmatprep.subr.mxu0 0.0
    %1800 = vmatpush2.msra.mxu0 0.0
    %1801 = vmatprep.subr.mxu0 0.0
    %1802 = vmatpush2.msra.mxu0 0.0
    %1803 = vmatprep.subr.mxu0 0.0
    %1804 = vmatpush2.msra.mxu0 0.0
    %1805 = vmatprep.subr.mxu0 0.0
    %1806 = vmatpush2.msra.mxu0 0.0
    %1807 = vmatprep.subr.mxu0 0.0
    %1808 = vmatpush2.msra.mxu0 0.0
    %1809 = vmatprep.subr.mxu0 0.0
    %1810 = vmatpush2.msra.mxu0 0.0
    %1811 = vmatprep.subr.mxu0 0.0
    %1812 = vmatpush2.msra.mxu0 0.0
    %1813 = vmatprep.subr.mxu0 0.0
    %1814 = vmatpush2.msra.mxu0 0.0
    %1815 = vmatprep.subr.mxu0 0.0
    %1816 = vmatpush2.msra.mxu0 0.0
    %1817 = vmatprep.subr.mxu0 0.0
    %1818 = vmatpush2.msra.mxu0 0.0
    %1819 = vmatprep.subr.mxu0 0.0
    %1820 = vmatpush2.msra.mxu0 0.0
    %1821 = vmatprep.subr.mxu0 0.0
    %1822 = vmatpush2.msra.mxu0 0.0
    %1823 = vmatprep.subr.mxu0 0.0
    %1824 = vmatpush2.msra.mxu0 0.0
    %1825 = vmatprep.subr.mxu0 0.0
    %1826 = vmatpush2.msra.mxu0 0.0
    %1827 = vmatprep.subr.mxu0 0.0
    %1828 = vmatpush2.msra.mxu0 0.0
    %1829 = vmatprep.subr.mxu0 0.0
    %1830 = vmatpush2.msra.mxu0 0.0
    %1831 = vmatprep.mubr.f32.mxu0 0.0
    %1832 = vmatmul.mubr.f32.gmra.mxu0 %v1765
    %v1833 = vpop.f32.mrf.mxu0
    %v1834 = vadd.f32 0.0, %v1833
    %v1835 = vpop.f32.mrf.mxu0
    %1836 = vdwg.mxu0
    %v1837 = vsel %vm336, %v1472, 0
    %1839 = vmatprep.subr.mxu0 0.0
    %1840 = vmatpush1.msra.mxu0 0.0
    %1841 = vmatprep.subr.mxu0 0.0
    %1842 = vmatpush1.msra.mxu0 0.0
    %1843 = vmatprep.subr.mxu0 0.0
    %1844 = vmatpush1.msra.mxu0 0.0
    %1845 = vmatprep.subr.mxu0 0.0
    %1846 = vmatpush1.msra.mxu0 0.0
    %1847 = vmatprep.subr.mxu0 0.0
    %1848 = vmatpush1.msra.mxu0 0.0
    %1849 = vmatprep.subr.mxu0 0.0
    %1850 = vmatpush1.msra.mxu0 0.0
    %1851 = vmatprep.subr.mxu0 0.0
    %1852 = vmatpush1.msra.mxu0 0.0
    %1853 = vmatprep.subr.mxu0 0.0
    %1854 = vmatpush1.msra.mxu0 0.0
    %1855 = vmatprep.subr.mxu0 0.0
    %1856 = vmatpush1.msra.mxu0 0.0
    %1857 = vmatprep.subr.mxu0 0.0
    %1858 = vmatpush1.msra.mxu0 0.0
    %1859 = vmatprep.subr.mxu0 0.0
    %1860 = vmatpush1.msra.mxu0 0.0
    %1861 = vmatprep.subr.mxu0 0.0
    %1862 = vmatpush1.msra.mxu0 0.0
    %1863 = vmatprep.subr.mxu0 0.0
    %1864 = vmatpush1.msra.mxu0 0.0
    %1865 = vmatprep.subr.mxu0 0.0
    %1866 = vmatpush1.msra.mxu0 0.0
    %1867 = vmatprep.subr.mxu0 0.0
    %1868 = vmatpush1.msra.mxu0 0.0
    %1869 = vmatprep.subr.mxu0 0.0
    %1870 = vmatpush1.msra.mxu0 %v1605
    %1871 = vmatprep.subr.mxu0 0.0
    %1872 = vmatpush2.msra.mxu0 0.0
    %1873 = vmatprep.subr.mxu0 0.0
    %1874 = vmatpush2.msra.mxu0 0.0
    %1875 = vmatprep.subr.mxu0 0.0
    %1876 = vmatpush2.msra.mxu0 0.0
    %1877 = vmatprep.subr.mxu0 0.0
    %1878 = vmatpush2.msra.mxu0 0.0
    %1879 = vmatprep.subr.mxu0 0.0
    %1880 = vmatpush2.msra.mxu0 0.0
    %1881 = vmatprep.subr.mxu0 0.0
    %1882 = vmatpush2.msra.mxu0 0.0
    %1883 = vmatprep.subr.mxu0 0.0
    %1884 = vmatpush2.msra.mxu0 0.0
    %1885 = vmatprep.subr.mxu0 0.0
    %1886 = vmatpush2.msra.mxu0 0.0
    %1887 = vmatprep.subr.mxu0 0.0
    %1888 = vmatpush2.msra.mxu0 0.0
    %1889 = vmatprep.subr.mxu0 0.0
    %1890 = vmatpush2.msra.mxu0 0.0
    %1891 = vmatprep.subr.mxu0 0.0
    %1892 = vmatpush2.msra.mxu0 0.0
    %1893 = vmatprep.subr.mxu0 0.0
    %1894 = vmatpush2.msra.mxu0 0.0
    %1895 = vmatprep.subr.mxu0 0.0
    %1896 = vmatpush2.msra.mxu0 0.0
    %1897 = vmatprep.subr.mxu0 0.0
    %1898 = vmatpush2.msra.mxu0 0.0
    %1899 = vmatprep.subr.mxu0 0.0
    %1900 = vmatpush2.msra.mxu0 0.0
    %1901 = vmatprep.subr.mxu0 0.0
    %1902 = vmatpush2.msra.mxu0 0.0
    %1903 = vmatprep.mubr.f32.mxu0 0.0
    %1904 = vmatmul.mubr.f32.gmra.mxu0 %v1837
    %v1905 = vpop.f32.mrf.mxu0
    %v1906 = vadd.f32 0.0, %v1905
    %v1907 = vpop.f32.mrf.mxu0
    %1908 = vdwg.mxu0
    %vm1909 = vcmask 130048
    %v1910 = vsel %vm1909, %v1690, -inf
    %1911 = vmax.xlane.f32.xlu0 %v1910
    %v1912 = vpop.xlane.xlu0 %1911
    %v1913 = vsel %vm1909, %v1762, -inf
    %1914 = vmax.xlane.f32.xlu0 %v1913
    %v1915 = vpop.xlane.xlu0 %1914
    %v1916 = vsel %vm1909, %v1834, -inf
    %1917 = vmax.xlane.f32.xlu0 %v1916
    %v1918 = vpop.xlane.xlu0 %1917
    %v1919 = vsel %vm1909, %v1906, -inf
    %1920 = vmax.xlane.f32.xlu0 %v1919
    %v1921 = vpop.xlane.xlu0 %1920
    %v1922 = vsub.f32 %v1690, %v1912
    %v1923 = vsub.f32 %v1762, %v1915
    %v1924 = vsub.f32 %v1834, %v1918
    %v1925 = vsub.f32 %v1906, %v1921
    %v1926 = vmul.f32 %v1922, 1.442695
    %v1927 = vpow.pop %v1926
    %v1928 = vmul.f32 %v1923, 1.442695
    %v1929 = vpow.pop %v1928
    %v1930 = vmul.f32 %v1924, 1.442695
    %v1931 = vpow.pop %v1930
    %v1932 = vmul.f32 %v1925, 1.442695
    %v1933 = vpow.pop %v1932
    %v1934 = vsel %vm1909, %v1927, 0.0
    %1935 = vadd.xlane.f32.xlu0 %v1934
    %v1936 = vpop.xlane.xlu0 %1935
    %v1937 = vsel %vm1909, %v1929, 0.0
    %1938 = vadd.xlane.f32.xlu0 %v1937
    %v1939 = vpop.xlane.xlu0 %1938
    %v1940 = vsel %vm1909, %v1931, 0.0
    %1941 = vadd.xlane.f32.xlu0 %v1940
    %v1942 = vpop.xlane.xlu0 %1941
    %v1943 = vsel %vm1909, %v1933, 0.0
    %1944 = vadd.xlane.f32.xlu0 %v1943
    %v1945 = vpop.xlane.xlu0 %1944
    %v1946 = vrcp.pop %v1936
    %v1947 = vrcp.pop %v1939
    %v1948 = vrcp.pop %v1942
    %v1949 = vrcp.pop %v1945
    %v1950 = vmul.f32 %v1927, %v1946
    %v1951 = vmul.f32 %v1929, %v1947
    %v1952 = vmul.f32 %v1931, %v1948
    %v1953 = vmul.f32 %v1933, %v1949
    %1954 = vrot.lane.b32.xlu0 %v1458, 96
    %v1955 = vpop.permute.xlu0 %1954
    %1956 = vrot.lane.b32.xlu0 %v1463, 96
    %v1957 = vpop.permute.xlu0 %1956
    %v1961 = vsel %vm1909, %v1950, 0
    %1963 = vmatprep.subr.mxu0 0.0
    %1964 = vmatpush1.msra.mxu0 0.0
    %1965 = vmatprep.subr.mxu0 0.0
    %1966 = vmatpush1.msra.mxu0 0.0
    %1967 = vmatprep.subr.mxu0 0.0
    %1968 = vmatpush1.msra.mxu0 0.0
    %1969 = vmatprep.subr.mxu0 0.0
    %1970 = vmatpush1.msra.mxu0 0.0
    %1971 = vmatprep.subr.mxu0 0.0
    %1972 = vmatpush1.msra.mxu0 0.0
    %1973 = vmatprep.subr.mxu0 0.0
    %1974 = vmatpush1.msra.mxu0 0.0
    %1975 = vmatprep.subr.mxu0 0.0
    %1976 = vmatpush1.msra.mxu0 0.0
    %1977 = vmatprep.subr.mxu0 0.0
    %1978 = vmatpush1.msra.mxu0 0.0
    %1979 = vmatprep.subr.mxu0 0.0
    %1980 = vmatpush1.msra.mxu0 0.0
    %1981 = vmatprep.subr.mxu0 0.0
    %1982 = vmatpush1.msra.mxu0 0.0
    %1983 = vmatprep.subr.mxu0 0.0
    %1984 = vmatpush1.msra.mxu0 0.0
    %1985 = vmatprep.subr.mxu0 0.0
    %1986 = vmatpush1.msra.mxu0 0.0
    %1987 = vmatprep.subr.mxu0 0.0
    %1988 = vmatpush1.msra.mxu0 0.0
    %1989 = vmatprep.subr.mxu0 0.0
    %1990 = vmatpush1.msra.mxu0 0.0
    %1991 = vmatprep.subr.mxu0 0.0
    %1992 = vmatpush1.msra.mxu0 %v1957
    %1993 = vmatprep.subr.mxu0 0.0
    %1994 = vmatpush1.msra.mxu0 %v1955
    %1995 = vmatprep.subr.mxu0 0.0
    %1996 = vmatpush2.msra.mxu0 0.0
    %1997 = vmatprep.subr.mxu0 0.0
    %1998 = vmatpush2.msra.mxu0 0.0
    %1999 = vmatprep.subr.mxu0 0.0
    %2000 = vmatpush2.msra.mxu0 0.0
    %2001 = vmatprep.subr.mxu0 0.0
    %2002 = vmatpush2.msra.mxu0 0.0
    %2003 = vmatprep.subr.mxu0 0.0
    %2004 = vmatpush2.msra.mxu0 0.0
    %2005 = vmatprep.subr.mxu0 0.0
    %2006 = vmatpush2.msra.mxu0 0.0
    %2007 = vmatprep.subr.mxu0 0.0
    %2008 = vmatpush2.msra.mxu0 0.0
    %2009 = vmatprep.subr.mxu0 0.0
    %2010 = vmatpush2.msra.mxu0 0.0
    %2011 = vmatprep.subr.mxu0 0.0
    %2012 = vmatpush2.msra.mxu0 0.0
    %2013 = vmatprep.subr.mxu0 0.0
    %2014 = vmatpush2.msra.mxu0 0.0
    %2015 = vmatprep.subr.mxu0 0.0
    %2016 = vmatpush2.msra.mxu0 0.0
    %2017 = vmatprep.subr.mxu0 0.0
    %2018 = vmatpush2.msra.mxu0 0.0
    %2019 = vmatprep.subr.mxu0 0.0
    %2020 = vmatpush2.msra.mxu0 0.0
    %2021 = vmatprep.subr.mxu0 0.0
    %2022 = vmatpush2.msra.mxu0 0.0
    %2023 = vmatprep.subr.mxu0 0.0
    %2024 = vmatpush2.msra.mxu0 0.0
    %2025 = vmatprep.subr.mxu0 0.0
    %2026 = vmatpush2.msra.mxu0 0.0
    %2027 = vmatprep.mubr.f32.mxu0 0.0
    %2028 = vmatmul.mubr.f32.gmra.mxu0 %v1961
    %v2029 = vpop.f32.mrf.mxu0
    %v2030 = vadd.f32 0.0, %v2029
    %v2031 = vpop.f32.mrf.mxu0
    %2032 = vdwg.mxu0
    %2033 = vrot.lane.b32.xlu0 %v1476, 96
    %v2034 = vpop.permute.xlu0 %2033
    %2035 = vrot.lane.b32.xlu0 %v1478, 96
    %v2036 = vpop.permute.xlu0 %2035
    %v2040 = vsel %vm1909, %v1951, 0
    %2042 = vmatprep.subr.mxu0 0.0
    %2043 = vmatpush1.msra.mxu0 0.0
    %2044 = vmatprep.subr.mxu0 0.0
    %2045 = vmatpush1.msra.mxu0 0.0
    %2046 = vmatprep.subr.mxu0 0.0
    %2047 = vmatpush1.msra.mxu0 0.0
    %2048 = vmatprep.subr.mxu0 0.0
    %2049 = vmatpush1.msra.mxu0 0.0
    %2050 = vmatprep.subr.mxu0 0.0
    %2051 = vmatpush1.msra.mxu0 0.0
    %2052 = vmatprep.subr.mxu0 0.0
    %2053 = vmatpush1.msra.mxu0 0.0
    %2054 = vmatprep.subr.mxu0 0.0
    %2055 = vmatpush1.msra.mxu0 0.0
    %2056 = vmatprep.subr.mxu0 0.0
    %2057 = vmatpush1.msra.mxu0 0.0
    %2058 = vmatprep.subr.mxu0 0.0
    %2059 = vmatpush1.msra.mxu0 0.0
    %2060 = vmatprep.subr.mxu0 0.0
    %2061 = vmatpush1.msra.mxu0 0.0
    %2062 = vmatprep.subr.mxu0 0.0
    %2063 = vmatpush1.msra.mxu0 0.0
    %2064 = vmatprep.subr.mxu0 0.0
    %2065 = vmatpush1.msra.mxu0 0.0
    %2066 = vmatprep.subr.mxu0 0.0
    %2067 = vmatpush1.msra.mxu0 0.0
    %2068 = vmatprep.subr.mxu0 0.0
    %2069 = vmatpush1.msra.mxu0 0.0
    %2070 = vmatprep.subr.mxu0 0.0
    %2071 = vmatpush1.msra.mxu0 %v2036
    %2072 = vmatprep.subr.mxu0 0.0
    %2073 = vmatpush1.msra.mxu0 %v2034
    %2074 = vmatprep.subr.mxu0 0.0
    %2075 = vmatpush2.msra.mxu0 0.0
    %2076 = vmatprep.subr.mxu0 0.0
    %2077 = vmatpush2.msra.mxu0 0.0
    %2078 = vmatprep.subr.mxu0 0.0
    %2079 = vmatpush2.msra.mxu0 0.0
    %2080 = vmatprep.subr.mxu0 0.0
    %2081 = vmatpush2.msra.mxu0 0.0
    %2082 = vmatprep.subr.mxu0 0.0
    %2083 = vmatpush2.msra.mxu0 0.0
    %2084 = vmatprep.subr.mxu0 0.0
    %2085 = vmatpush2.msra.mxu0 0.0
    %2086 = vmatprep.subr.mxu0 0.0
    %2087 = vmatpush2.msra.mxu0 0.0
    %2088 = vmatprep.subr.mxu0 0.0
    %2089 = vmatpush2.msra.mxu0 0.0
    %2090 = vmatprep.subr.mxu0 0.0
    %2091 = vmatpush2.msra.mxu0 0.0
    %2092 = vmatprep.subr.mxu0 0.0
    %2093 = vmatpush2.msra.mxu0 0.0
    %2094 = vmatprep.subr.mxu0 0.0
    %2095 = vmatpush2.msra.mxu0 0.0
    %2096 = vmatprep.subr.mxu0 0.0
    %2097 = vmatpush2.msra.mxu0 0.0
    %2098 = vmatprep.subr.mxu0 0.0
    %2099 = vmatpush2.msra.mxu0 0.0
    %2100 = vmatprep.subr.mxu0 0.0
    %2101 = vmatpush2.msra.mxu0 0.0
    %2102 = vmatprep.subr.mxu0 0.0
    %2103 = vmatpush2.msra.mxu0 0.0
    %2104 = vmatprep.subr.mxu0 0.0
    %2105 = vmatpush2.msra.mxu0 0.0
    %2106 = vmatprep.mubr.f32.mxu0 0.0
    %2107 = vmatmul.mubr.f32.gmra.mxu0 %v2040
    %v2108 = vpop.f32.mrf.mxu0
    %v2109 = vadd.f32 0.0, %v2108
    %v2110 = vpop.f32.mrf.mxu0
    %2111 = vdwg.mxu0
    %2112 = vrot.lane.b32.xlu0 %v1482, 96
    %v2113 = vpop.permute.xlu0 %2112
    %2114 = vrot.lane.b32.xlu0 %v1484, 96
    %v2115 = vpop.permute.xlu0 %2114
    %v2119 = vsel %vm1909, %v1952, 0
    %2121 = vmatprep.subr.mxu0 0.0
    %2122 = vmatpush1.msra.mxu0 0.0
    %2123 = vmatprep.subr.mxu0 0.0
    %2124 = vmatpush1.msra.mxu0 0.0
    %2125 = vmatprep.subr.mxu0 0.0
    %2126 = vmatpush1.msra.mxu0 0.0
    %2127 = vmatprep.subr.mxu0 0.0
    %2128 = vmatpush1.msra.mxu0 0.0
    %2129 = vmatprep.subr.mxu0 0.0
    %2130 = vmatpush1.msra.mxu0 0.0
    %2131 = vmatprep.subr.mxu0 0.0
    %2132 = vmatpush1.msra.mxu0 0.0
    %2133 = vmatprep.subr.mxu0 0.0
    %2134 = vmatpush1.msra.mxu0 0.0
    %2135 = vmatprep.subr.mxu0 0.0
    %2136 = vmatpush1.msra.mxu0 0.0
    %2137 = vmatprep.subr.mxu0 0.0
    %2138 = vmatpush1.msra.mxu0 0.0
    %2139 = vmatprep.subr.mxu0 0.0
    %2140 = vmatpush1.msra.mxu0 0.0
    %2141 = vmatprep.subr.mxu0 0.0
    %2142 = vmatpush1.msra.mxu0 0.0
    %2143 = vmatprep.subr.mxu0 0.0
    %2144 = vmatpush1.msra.mxu0 0.0
    %2145 = vmatprep.subr.mxu0 0.0
    %2146 = vmatpush1.msra.mxu0 0.0
    %2147 = vmatprep.subr.mxu0 0.0
    %2148 = vmatpush1.msra.mxu0 0.0
    %2149 = vmatprep.subr.mxu0 0.0
    %2150 = vmatpush1.msra.mxu0 %v2115
    %2151 = vmatprep.subr.mxu0 0.0
    %2152 = vmatpush1.msra.mxu0 %v2113
    %2153 = vmatprep.subr.mxu0 0.0
    %2154 = vmatpush2.msra.mxu0 0.0
    %2155 = vmatprep.subr.mxu0 0.0
    %2156 = vmatpush2.msra.mxu0 0.0
    %2157 = vmatprep.subr.mxu0 0.0
    %2158 = vmatpush2.msra.mxu0 0.0
    %2159 = vmatprep.subr.mxu0 0.0
    %2160 = vmatpush2.msra.mxu0 0.0
    %2161 = vmatprep.subr.mxu0 0.0
    %2162 = vmatpush2.msra.mxu0 0.0
    %2163 = vmatprep.subr.mxu0 0.0
    %2164 = vmatpush2.msra.mxu0 0.0
    %2165 = vmatprep.subr.mxu0 0.0
    %2166 = vmatpush2.msra.mxu0 0.0
    %2167 = vmatprep.subr.mxu0 0.0
    %2168 = vmatpush2.msra.mxu0 0.0
    %2169 = vmatprep.subr.mxu0 0.0
    %2170 = vmatpush2.msra.mxu0 0.0
    %2171 = vmatprep.subr.mxu0 0.0
    %2172 = vmatpush2.msra.mxu0 0.0
    %2173 = vmatprep.subr.mxu0 0.0
    %2174 = vmatpush2.msra.mxu0 0.0
    %2175 = vmatprep.subr.mxu0 0.0
    %2176 = vmatpush2.msra.mxu0 0.0
    %2177 = vmatprep.subr.mxu0 0.0
    %2178 = vmatpush2.msra.mxu0 0.0
    %2179 = vmatprep.subr.mxu0 0.0
    %2180 = vmatpush2.msra.mxu0 0.0
    %2181 = vmatprep.subr.mxu0 0.0
    %2182 = vmatpush2.msra.mxu0 0.0
    %2183 = vmatprep.subr.mxu0 0.0
    %2184 = vmatpush2.msra.mxu0 0.0
    %2185 = vmatprep.mubr.f32.mxu0 0.0
    %2186 = vmatmul.mubr.f32.gmra.mxu0 %v2119
    %v2187 = vpop.f32.mrf.mxu0
    %v2188 = vadd.f32 0.0, %v2187
    %v2189 = vpop.f32.mrf.mxu0
    %2190 = vdwg.mxu0
    %2191 = vrot.lane.b32.xlu0 %v1488, 96
    %v2192 = vpop.permute.xlu0 %2191
    %2193 = vrot.lane.b32.xlu0 %v1490, 96
    %v2194 = vpop.permute.xlu0 %2193
    %v2198 = vsel %vm1909, %v1953, 0
    %2200 = vmatprep.subr.mxu0 0.0
    %2201 = vmatpush1.msra.mxu0 0.0
    %2202 = vmatprep.subr.mxu0 0.0
    %2203 = vmatpush1.msra.mxu0 0.0
    %2204 = vmatprep.subr.mxu0 0.0
    %2205 = vmatpush1.msra.mxu0 0.0
    %2206 = vmatprep.subr.mxu0 0.0
    %2207 = vmatpush1.msra.mxu0 0.0
    %2208 = vmatprep.subr.mxu0 0.0
    %2209 = vmatpush1.msra.mxu0 0.0
    %2210 = vmatprep.subr.mxu0 0.0
    %2211 = vmatpush1.msra.mxu0 0.0
    %2212 = vmatprep.subr.mxu0 0.0
    %2213 = vmatpush1.msra.mxu0 0.0
    %2214 = vmatprep.subr.mxu0 0.0
    %2215 = vmatpush1.msra.mxu0 0.0
    %2216 = vmatprep.subr.mxu0 0.0
    %2217 = vmatpush1.msra.mxu0 0.0
    %2218 = vmatprep.subr.mxu0 0.0
    %2219 = vmatpush1.msra.mxu0 0.0
    %2220 = vmatprep.subr.mxu0 0.0
    %2221 = vmatpush1.msra.mxu0 0.0
    %2222 = vmatprep.subr.mxu0 0.0
    %2223 = vmatpush1.msra.mxu0 0.0
    %2224 = vmatprep.subr.mxu0 0.0
    %2225 = vmatpush1.msra.mxu0 0.0
    %2226 = vmatprep.subr.mxu0 0.0
    %2227 = vmatpush1.msra.mxu0 0.0
    %2228 = vmatprep.subr.mxu0 0.0
    %2229 = vmatpush1.msra.mxu0 %v2194
    %2230 = vmatprep.subr.mxu0 0.0
    %2231 = vmatpush1.msra.mxu0 %v2192
    %2232 = vmatprep.subr.mxu0 0.0
    %2233 = vmatpush2.msra.mxu0 0.0
    %2234 = vmatprep.subr.mxu0 0.0
    %2235 = vmatpush2.msra.mxu0 0.0
    %2236 = vmatprep.subr.mxu0 0.0
    %2237 = vmatpush2.msra.mxu0 0.0
    %2238 = vmatprep.subr.mxu0 0.0
    %2239 = vmatpush2.msra.mxu0 0.0
    %2240 = vmatprep.subr.mxu0 0.0
    %2241 = vmatpush2.msra.mxu0 0.0
    %2242 = vmatprep.subr.mxu0 0.0
    %2243 = vmatpush2.msra.mxu0 0.0
    %2244 = vmatprep.subr.mxu0 0.0
    %2245 = vmatpush2.msra.mxu0 0.0
    %2246 = vmatprep.subr.mxu0 0.0
    %2247 = vmatpush2.msra.mxu0 0.0
    %2248 = vmatprep.subr.mxu0 0.0
    %2249 = vmatpush2.msra.mxu0 0.0
    %2250 = vmatprep.subr.mxu0 0.0
    %2251 = vmatpush2.msra.mxu0 0.0
    %2252 = vmatprep.subr.mxu0 0.0
    %2253 = vmatpush2.msra.mxu0 0.0
    %2254 = vmatprep.subr.mxu0 0.0
    %2255 = vmatpush2.msra.mxu0 0.0
    %2256 = vmatprep.subr.mxu0 0.0
    %2257 = vmatpush2.msra.mxu0 0.0
    %2258 = vmatprep.subr.mxu0 0.0
    %2259 = vmatpush2.msra.mxu0 0.0
    %2260 = vmatprep.subr.mxu0 0.0
    %2261 = vmatpush2.msra.mxu0 0.0
    %2262 = vmatprep.subr.mxu0 0.0
    %2263 = vmatpush2.msra.mxu0 0.0
    %2264 = vmatprep.mubr.f32.mxu0 0.0
    %2265 = vmatmul.mubr.f32.gmra.mxu0 %v2198
    %v2266 = vpop.f32.mrf.mxu0
    %v2267 = vadd.f32 0.0, %v2266
    %v2268 = vpop.f32.mrf.mxu0
    %2269 = vdwg.mxu0
    %v2271 = vsel %vm336, %v2030, 0
    %2273 = vmatprep.subr.mxu0 0.0
    %2274 = vmatpush1.msra.mxu0 0.0
    %2275 = vmatprep.subr.mxu0 0.0
    %2276 = vmatpush1.msra.mxu0 0.0
    %2277 = vmatprep.subr.mxu0 0.0
    %2278 = vmatpush1.msra.mxu0 0.0
    %2279 = vmatprep.subr.mxu0 0.0
    %2280 = vmatpush1.msra.mxu0 0.0
    %2281 = vmatprep.subr.mxu0 0.0
    %2282 = vmatpush1.msra.mxu0 0.0
    %2283 = vmatprep.subr.mxu0 0.0
    %2284 = vmatpush1.msra.mxu0 0.0
    %2285 = vmatprep.subr.mxu0 0.0
    %2286 = vmatpush1.msra.mxu0 0.0
    %2287 = vmatprep.subr.mxu0 0.0
    %2288 = vmatpush1.msra.mxu0 0.0
    %2289 = vmatprep.subr.mxu0 0.0
    %2290 = vmatpush1.msra.mxu0 0.0
    %2291 = vmatprep.subr.mxu0 0.0
    %2292 = vmatpush1.msra.mxu0 0.0
    %2293 = vmatprep.subr.mxu0 0.0
    %2294 = vmatpush1.msra.mxu0 0.0
    %2295 = vmatprep.subr.mxu0 0.0
    %2296 = vmatpush1.msra.mxu0 0.0
    %2297 = vmatprep.subr.mxu0 0.0
    %2298 = vmatpush1.msra.mxu0 0.0
    %2299 = vmatprep.subr.mxu0 0.0
    %2300 = vmatpush1.msra.mxu0 0.0
    %2301 = vmatprep.subr.mxu0 0.0
    %2302 = vmatpush1.msra.mxu0 0.0
    %2303 = vmatprep.subr.mxu0 0.0
    %2304 = vmatpush1.msra.mxu0 %v76
    %2305 = vmatprep.subr.mxu0 0.0
    %2306 = vmatpush2.msra.mxu0 0.0
    %2307 = vmatprep.subr.mxu0 0.0
    %2308 = vmatpush2.msra.mxu0 0.0
    %2309 = vmatprep.subr.mxu0 0.0
    %2310 = vmatpush2.msra.mxu0 0.0
    %2311 = vmatprep.subr.mxu0 0.0
    %2312 = vmatpush2.msra.mxu0 0.0
    %2313 = vmatprep.subr.mxu0 0.0
    %2314 = vmatpush2.msra.mxu0 0.0
    %2315 = vmatprep.subr.mxu0 0.0
    %2316 = vmatpush2.msra.mxu0 0.0
    %2317 = vmatprep.subr.mxu0 0.0
    %2318 = vmatpush2.msra.mxu0 0.0
    %2319 = vmatprep.subr.mxu0 0.0
    %2320 = vmatpush2.msra.mxu0 0.0
    %2321 = vmatprep.subr.mxu0 0.0
    %2322 = vmatpush2.msra.mxu0 0.0
    %2323 = vmatprep.subr.mxu0 0.0
    %2324 = vmatpush2.msra.mxu0 0.0
    %2325 = vmatprep.subr.mxu0 0.0
    %2326 = vmatpush2.msra.mxu0 0.0
    %2327 = vmatprep.subr.mxu0 0.0
    %2328 = vmatpush2.msra.mxu0 0.0
    %2329 = vmatprep.subr.mxu0 0.0
    %2330 = vmatpush2.msra.mxu0 0.0
    %2331 = vmatprep.subr.mxu0 0.0
    %2332 = vmatpush2.msra.mxu0 0.0
    %2333 = vmatprep.subr.mxu0 0.0
    %2334 = vmatpush2.msra.mxu0 0.0
    %2335 = vmatprep.subr.mxu0 0.0
    %2336 = vmatpush2.msra.mxu0 0.0
    %2337 = vmatprep.mubr.f32.mxu0 0.0
    %2338 = vmatmul.mubr.f32.gmra.mxu0 %v2271
    %v2339 = vpop.f32.mrf.mxu0
    %v2340 = vadd.f32 0.0, %v2339
    %v2341 = vpop.f32.mrf.mxu0
    %2342 = vdwg.mxu0
    %v2344 = vsel %vm336, %v2109, 0
    %2346 = vmatprep.subr.mxu0 0.0
    %2347 = vmatpush1.msra.mxu0 0.0
    %2348 = vmatprep.subr.mxu0 0.0
    %2349 = vmatpush1.msra.mxu0 0.0
    %2350 = vmatprep.subr.mxu0 0.0
    %2351 = vmatpush1.msra.mxu0 0.0
    %2352 = vmatprep.subr.mxu0 0.0
    %2353 = vmatpush1.msra.mxu0 0.0
    %2354 = vmatprep.subr.mxu0 0.0
    %2355 = vmatpush1.msra.mxu0 0.0
    %2356 = vmatprep.subr.mxu0 0.0
    %2357 = vmatpush1.msra.mxu0 0.0
    %2358 = vmatprep.subr.mxu0 0.0
    %2359 = vmatpush1.msra.mxu0 0.0
    %2360 = vmatprep.subr.mxu0 0.0
    %2361 = vmatpush1.msra.mxu0 0.0
    %2362 = vmatprep.subr.mxu0 0.0
    %2363 = vmatpush1.msra.mxu0 0.0
    %2364 = vmatprep.subr.mxu0 0.0
    %2365 = vmatpush1.msra.mxu0 0.0
    %2366 = vmatprep.subr.mxu0 0.0
    %2367 = vmatpush1.msra.mxu0 0.0
    %2368 = vmatprep.subr.mxu0 0.0
    %2369 = vmatpush1.msra.mxu0 0.0
    %2370 = vmatprep.subr.mxu0 0.0
    %2371 = vmatpush1.msra.mxu0 0.0
    %2372 = vmatprep.subr.mxu0 0.0
    %2373 = vmatpush1.msra.mxu0 0.0
    %2374 = vmatprep.subr.mxu0 0.0
    %2375 = vmatpush1.msra.mxu0 0.0
    %2376 = vmatprep.subr.mxu0 0.0
    %2377 = vmatpush1.msra.mxu0 %v77
    %2378 = vmatprep.subr.mxu0 0.0
    %2379 = vmatpush2.msra.mxu0 0.0
    %2380 = vmatprep.subr.mxu0 0.0
    %2381 = vmatpush2.msra.mxu0 0.0
    %2382 = vmatprep.subr.mxu0 0.0
    %2383 = vmatpush2.msra.mxu0 0.0
    %2384 = vmatprep.subr.mxu0 0.0
    %2385 = vmatpush2.msra.mxu0 0.0
    %2386 = vmatprep.subr.mxu0 0.0
    %2387 = vmatpush2.msra.mxu0 0.0
    %2388 = vmatprep.subr.mxu0 0.0
    %2389 = vmatpush2.msra.mxu0 0.0
    %2390 = vmatprep.subr.mxu0 0.0
    %2391 = vmatpush2.msra.mxu0 0.0
    %2392 = vmatprep.subr.mxu0 0.0
    %2393 = vmatpush2.msra.mxu0 0.0
    %2394 = vmatprep.subr.mxu0 0.0
    %2395 = vmatpush2.msra.mxu0 0.0
    %2396 = vmatprep.subr.mxu0 0.0
    %2397 = vmatpush2.msra.mxu0 0.0
    %2398 = vmatprep.subr.mxu0 0.0
    %2399 = vmatpush2.msra.mxu0 0.0
    %2400 = vmatprep.subr.mxu0 0.0
    %2401 = vmatpush2.msra.mxu0 0.0
    %2402 = vmatprep.subr.mxu0 0.0
    %2403 = vmatpush2.msra.mxu0 0.0
    %2404 = vmatprep.subr.mxu0 0.0
    %2405 = vmatpush2.msra.mxu0 0.0
    %2406 = vmatprep.subr.mxu0 0.0
    %2407 = vmatpush2.msra.mxu0 0.0
    %2408 = vmatprep.subr.mxu0 0.0
    %2409 = vmatpush2.msra.mxu0 0.0
    %2410 = vmatprep.mubr.f32.mxu0 0.0
    %2411 = vmatmul.mubr.f32.gmra.mxu0 %v2344
    %v2412 = vpop.f32.mrf.mxu0
    %v2413 = vadd.f32 0.0, %v2412
    %v2414 = vpop.f32.mrf.mxu0
    %2415 = vdwg.mxu0
    %v2417 = vsel %vm336, %v2188, 0
    %2419 = vmatprep.subr.mxu0 0.0
    %2420 = vmatpush1.msra.mxu0 0.0
    %2421 = vmatprep.subr.mxu0 0.0
    %2422 = vmatpush1.msra.mxu0 0.0
    %2423 = vmatprep.subr.mxu0 0.0
    %2424 = vmatpush1.msra.mxu0 0.0
    %2425 = vmatprep.subr.mxu0 0.0
    %2426 = vmatpush1.msra.mxu0 0.0
    %2427 = vmatprep.subr.mxu0 0.0
    %2428 = vmatpush1.msra.mxu0 0.0
    %2429 = vmatprep.subr.mxu0 0.0
    %2430 = vmatpush1.msra.mxu0 0.0
    %2431 = vmatprep.subr.mxu0 0.0
    %2432 = vmatpush1.msra.mxu0 0.0
    %2433 = vmatprep.subr.mxu0 0.0
    %2434 = vmatpush1.msra.mxu0 0.0
    %2435 = vmatprep.subr.mxu0 0.0
    %2436 = vmatpush1.msra.mxu0 0.0
    %2437 = vmatprep.subr.mxu0 0.0
    %2438 = vmatpush1.msra.mxu0 0.0
    %2439 = vmatprep.subr.mxu0 0.0
    %2440 = vmatpush1.msra.mxu0 0.0
    %2441 = vmatprep.subr.mxu0 0.0
    %2442 = vmatpush1.msra.mxu0 0.0
    %2443 = vmatprep.subr.mxu0 0.0
    %2444 = vmatpush1.msra.mxu0 0.0
    %2445 = vmatprep.subr.mxu0 0.0
    %2446 = vmatpush1.msra.mxu0 0.0
    %2447 = vmatprep.subr.mxu0 0.0
    %2448 = vmatpush1.msra.mxu0 0.0
    %2449 = vmatprep.subr.mxu0 0.0
    %2450 = vmatpush1.msra.mxu0 %v78
    %2451 = vmatprep.subr.mxu0 0.0
    %2452 = vmatpush2.msra.mxu0 0.0
    %2453 = vmatprep.subr.mxu0 0.0
    %2454 = vmatpush2.msra.mxu0 0.0
    %2455 = vmatprep.subr.mxu0 0.0
    %2456 = vmatpush2.msra.mxu0 0.0
    %2457 = vmatprep.subr.mxu0 0.0
    %2458 = vmatpush2.msra.mxu0 0.0
    %2459 = vmatprep.subr.mxu0 0.0
    %2460 = vmatpush2.msra.mxu0 0.0
    %2461 = vmatprep.subr.mxu0 0.0
    %2462 = vmatpush2.msra.mxu0 0.0
    %2463 = vmatprep.subr.mxu0 0.0
    %2464 = vmatpush2.msra.mxu0 0.0
    %2465 = vmatprep.subr.mxu0 0.0
    %2466 = vmatpush2.msra.mxu0 0.0
    %2467 = vmatprep.subr.mxu0 0.0
    %2468 = vmatpush2.msra.mxu0 0.0
    %2469 = vmatprep.subr.mxu0 0.0
    %2470 = vmatpush2.msra.mxu0 0.0
    %2471 = vmatprep.subr.mxu0 0.0
    %2472 = vmatpush2.msra.mxu0 0.0
    %2473 = vmatprep.subr.mxu0 0.0
    %2474 = vmatpush2.msra.mxu0 0.0
    %2475 = vmatprep.subr.mxu0 0.0
    %2476 = vmatpush2.msra.mxu0 0.0
    %2477 = vmatprep.subr.mxu0 0.0
    %2478 = vmatpush2.msra.mxu0 0.0
    %2479 = vmatprep.subr.mxu0 0.0
    %2480 = vmatpush2.msra.mxu0 0.0
    %2481 = vmatprep.subr.mxu0 0.0
    %2482 = vmatpush2.msra.mxu0 0.0
    %2483 = vmatprep.mubr.f32.mxu0 0.0
    %2484 = vmatmul.mubr.f32.gmra.mxu0 %v2417
    %v2485 = vpop.f32.mrf.mxu0
    %v2486 = vadd.f32 0.0, %v2485
    %v2487 = vpop.f32.mrf.mxu0
    %2488 = vdwg.mxu0
    %v2490 = vsel %vm336, %v2267, 0
    %2492 = vmatprep.subr.mxu0 0.0
    %2493 = vmatpush1.msra.mxu0 0.0
    %2494 = vmatprep.subr.mxu0 0.0
    %2495 = vmatpush1.msra.mxu0 0.0
    %2496 = vmatprep.subr.mxu0 0.0
    %2497 = vmatpush1.msra.mxu0 0.0
    %2498 = vmatprep.subr.mxu0 0.0
    %2499 = vmatpush1.msra.mxu0 0.0
    %2500 = vmatprep.subr.mxu0 0.0
    %2501 = vmatpush1.msra.mxu0 0.0
    %2502 = vmatprep.subr.mxu0 0.0
    %2503 = vmatpush1.msra.mxu0 0.0
    %2504 = vmatprep.subr.mxu0 0.0
    %2505 = vmatpush1.msra.mxu0 0.0
    %2506 = vmatprep.subr.mxu0 0.0
    %2507 = vmatpush1.msra.mxu0 0.0
    %2508 = vmatprep.subr.mxu0 0.0
    %2509 = vmatpush1.msra.mxu0 0.0
    %2510 = vmatprep.subr.mxu0 0.0
    %2511 = vmatpush1.msra.mxu0 0.0
    %2512 = vmatprep.subr.mxu0 0.0
    %2513 = vmatpush1.msra.mxu0 0.0
    %2514 = vmatprep.subr.mxu0 0.0
    %2515 = vmatpush1.msra.mxu0 0.0
    %2516 = vmatprep.subr.mxu0 0.0
    %2517 = vmatpush1.msra.mxu0 0.0
    %2518 = vmatprep.subr.mxu0 0.0
    %2519 = vmatpush1.msra.mxu0 0.0
    %2520 = vmatprep.subr.mxu0 0.0
    %2521 = vmatpush1.msra.mxu0 0.0
    %2522 = vmatprep.subr.mxu0 0.0
    %2523 = vmatpush1.msra.mxu0 %v79
    %2524 = vmatprep.subr.mxu0 0.0
    %2525 = vmatpush2.msra.mxu0 0.0
    %2526 = vmatprep.subr.mxu0 0.0
    %2527 = vmatpush2.msra.mxu0 0.0
    %2528 = vmatprep.subr.mxu0 0.0
    %2529 = vmatpush2.msra.mxu0 0.0
    %2530 = vmatprep.subr.mxu0 0.0
    %2531 = vmatpush2.msra.mxu0 0.0
    %2532 = vmatprep.subr.mxu0 0.0
    %2533 = vmatpush2.msra.mxu0 0.0
    %2534 = vmatprep.subr.mxu0 0.0
    %2535 = vmatpush2.msra.mxu0 0.0
    %2536 = vmatprep.subr.mxu0 0.0
    %2537 = vmatpush2.msra.mxu0 0.0
    %2538 = vmatprep.subr.mxu0 0.0
    %2539 = vmatpush2.msra.mxu0 0.0
    %2540 = vmatprep.subr.mxu0 0.0
    %2541 = vmatpush2.msra.mxu0 0.0
    %2542 = vmatprep.subr.mxu0 0.0
    %2543 = vmatpush2.msra.mxu0 0.0
    %2544 = vmatprep.subr.mxu0 0.0
    %2545 = vmatpush2.msra.mxu0 0.0
    %2546 = vmatprep.subr.mxu0 0.0
    %2547 = vmatpush2.msra.mxu0 0.0
    %2548 = vmatprep.subr.mxu0 0.0
    %2549 = vmatpush2.msra.mxu0 0.0
    %2550 = vmatprep.subr.mxu0 0.0
    %2551 = vmatpush2.msra.mxu0 0.0
    %2552 = vmatprep.subr.mxu0 0.0
    %2553 = vmatpush2.msra.mxu0 0.0
    %2554 = vmatprep.subr.mxu0 0.0
    %2555 = vmatpush2.msra.mxu0 0.0
    %2556 = vmatprep.mubr.f32.mxu0 0.0
    %2557 = vmatmul.mubr.f32.gmra.mxu0 %v2490
    %v2558 = vpop.f32.mrf.mxu0
    %v2559 = vadd.f32 0.0, %v2558
    %v2560 = vpop.f32.mrf.mxu0
    %2561 = vdwg.mxu0
    %v2562 = vsel %vm91, %v2340, 0.0
    %v2563 = vsel %vm91, %v2413, 0.0
    %v2564 = vadd.f32 %v2562, %v2563
    %v2565 = vsel %vm91, %v2486, 0.0
    %v2566 = vadd.f32 %v2564, %v2565
    %v2567 = vsel %vm91, %v2559, 0.0
    %v2568 = vadd.f32 %v2566, %v2567
    %v2569 = vadd.f32 %v1272, %v2568
    %v2570 = vsel %vm91, %v2569, 0.0
    %2571 = vadd.xlane.f32.xlu0 %v2570
    %v2572 = vpop.xlane.xlu0 %2571
    %v2573 = vmul.f32 %v2572, %v95
    %v2574 = vsub.f32 %v2569, %v2573
    %v2575 = vmul.f32 %v2574, %v2574
    %v2576 = vsel %vm91, %v2575, 0.0
    %2577 = vadd.xlane.f32.xlu0 %v2576
    %v2578 = vpop.xlane.xlu0 %2577
    %v2579 = vmul.f32 %v2578, %v95
    %v2580 = vadd.f32 %v2579, 1e-05
    %v2581 = vrsqrt.pop %v2580
    %v2582 = vmul.f32 %v2574, %v2581
    %v2583 = vlaneseq
    %v2584 = vshrl.u32 %v2583, 7
    %v2585 = vsub.s32 4, %v2584
    %v2586 = vrot.slane %v63, %v2585
    %v2587 = vmul.f32 %v2582, %v2586
    %v2588 = vlaneseq
    %v2589 = vshrl.u32 %v2588, 7
    %v2590 = vsub.s32 5, %v2589
    %v2591 = vrot.slane %v63, %v2590
    %v2592 = vadd.f32 %v2587, %v2591
    %2597 = vrot.lane.b32.xlu0 %v65, 64
    %v2598 = vpop.permute.xlu0 %2597
    %2599 = vrot.lane.b32.xlu0 %v67, 64
    %v2600 = vpop.permute.xlu0 %2599
    %2601 = vrot.lane.b32.xlu0 %v69, 64
    %v2602 = vpop.permute.xlu0 %2601
    %2603 = vrot.lane.b32.xlu0 %v71, 64
    %v2604 = vpop.permute.xlu0 %2603
    %v2610 = vsel %vm91, %v2592, 0
    %2612 = vmatprep.subr.mxu0 0.0
    %2613 = vmatpush1.msra.mxu0 0.0
    %2614 = vmatprep.subr.mxu0 0.0
    %2615 = vmatpush1.msra.mxu0 0.0
    %2616 = vmatprep.subr.mxu0 0.0
    %2617 = vmatpush1.msra.mxu0 0.0
    %2618 = vmatprep.subr.mxu0 0.0
    %2619 = vmatpush1.msra.mxu0 0.0
    %2620 = vmatprep.subr.mxu0 0.0
    %2621 = vmatpush1.msra.mxu0 0.0
    %2622 = vmatprep.subr.mxu0 0.0
    %2623 = vmatpush1.msra.mxu0 0.0
    %2624 = vmatprep.subr.mxu0 0.0
    %2625 = vmatpush1.msra.mxu0 0.0
    %2626 = vmatprep.subr.mxu0 0.0
    %2627 = vmatpush1.msra.mxu0 0.0
    %2628 = vmatprep.subr.mxu0 0.0
    %2629 = vmatpush1.msra.mxu0 0.0
    %2630 = vmatprep.subr.mxu0 0.0
    %2631 = vmatpush1.msra.mxu0 0.0
    %2632 = vmatprep.subr.mxu0 0.0
    %2633 = vmatpush1.msra.mxu0 0.0
    %2634 = vmatprep.subr.mxu0 0.0
    %2635 = vmatpush1.msra.mxu0 0.0
    %2636 = vmatprep.subr.mxu0 0.0
    %2637 = vmatpush1.msra.mxu0 %v2604
    %2638 = vmatprep.subr.mxu0 0.0
    %2639 = vmatpush1.msra.mxu0 %v2602
    %2640 = vmatprep.subr.mxu0 0.0
    %2641 = vmatpush1.msra.mxu0 %v2600
    %2642 = vmatprep.subr.mxu0 0.0
    %2643 = vmatpush1.msra.mxu0 %v2598
    %2644 = vmatprep.subr.mxu0 0.0
    %2645 = vmatpush2.msra.mxu0 0.0
    %2646 = vmatprep.subr.mxu0 0.0
    %2647 = vmatpush2.msra.mxu0 0.0
    %2648 = vmatprep.subr.mxu0 0.0
    %2649 = vmatpush2.msra.mxu0 0.0
    %2650 = vmatprep.subr.mxu0 0.0
    %2651 = vmatpush2.msra.mxu0 0.0
    %2652 = vmatprep.subr.mxu0 0.0
    %2653 = vmatpush2.msra.mxu0 0.0
    %2654 = vmatprep.subr.mxu0 0.0
    %2655 = vmatpush2.msra.mxu0 0.0
    %2656 = vmatprep.subr.mxu0 0.0
    %2657 = vmatpush2.msra.mxu0 0.0
    %2658 = vmatprep.subr.mxu0 0.0
    %2659 = vmatpush2.msra.mxu0 0.0
    %2660 = vmatprep.subr.mxu0 0.0
    %2661 = vmatpush2.msra.mxu0 0.0
    %2662 = vmatprep.subr.mxu0 0.0
    %2663 = vmatpush2.msra.mxu0 0.0
    %2664 = vmatprep.subr.mxu0 0.0
    %2665 = vmatpush2.msra.mxu0 0.0
    %2666 = vmatprep.subr.mxu0 0.0
    %2667 = vmatpush2.msra.mxu0 0.0
    %2668 = vmatprep.subr.mxu0 0.0
    %2669 = vmatpush2.msra.mxu0 0.0
    %2670 = vmatprep.subr.mxu0 0.0
    %2671 = vmatpush2.msra.mxu0 0.0
    %2672 = vmatprep.subr.mxu0 0.0
    %2673 = vmatpush2.msra.mxu0 0.0
    %2674 = vmatprep.subr.mxu0 0.0
    %2675 = vmatpush2.msra.mxu0 0.0
    %2676 = vmatprep.mubr.f32.mxu0 0.0
    %2677 = vmatmul.mubr.f32.gmra.mxu0 %v2610
    %v2678 = vpop.f32.mrf.mxu0
    %v2679 = vadd.f32 0.0, %v2678
    %v2680 = vpop.f32.mrf.mxu0
    %2681 = vdwg.mxu0
    %v2682 = vmax.f32 %v2679, 0.0
    %vm2683 = vcmask 523264
    %v2685 = vsel %vm2683, %v2682, 0
    %2687 = vmatprep.subr.mxu0 0.0
    %2688 = vmatpush1.msra.mxu0 0.0
    %2689 = vmatprep.subr.mxu0 0.0
    %2690 = vmatpush1.msra.mxu0 0.0
    %2691 = vmatprep.subr.mxu0 0.0
    %2692 = vmatpush1.msra.mxu0 0.0
    %2693 = vmatprep.subr.mxu0 0.0
    %2694 = vmatpush1.msra.mxu0 0.0
    %2695 = vmatprep.subr.mxu0 0.0
    %2696 = vmatpush1.msra.mxu0 0.0
    %2697 = vmatprep.subr.mxu0 0.0
    %2698 = vmatpush1.msra.mxu0 0.0
    %2699 = vmatprep.subr.mxu0 0.0
    %2700 = vmatpush1.msra.mxu0 0.0
    %2701 = vmatprep.subr.mxu0 0.0
    %2702 = vmatpush1.msra.mxu0 0.0
    %2703 = vmatprep.subr.mxu0 0.0
    %2704 = vmatpush1.msra.mxu0 %v87
    %2705 = vmatprep.subr.mxu0 0.0
    %2706 = vmatpush1.msra.mxu0 %v86
    %2707 = vmatprep.subr.mxu0 0.0
    %2708 = vmatpush1.msra.mxu0 %v85
    %2709 = vmatprep.subr.mxu0 0.0
    %2710 = vmatpush1.msra.mxu0 %v84
    %2711 = vmatprep.subr.mxu0 0.0
    %2712 = vmatpush1.msra.mxu0 %v83
    %2713 = vmatprep.subr.mxu0 0.0
    %2714 = vmatpush1.msra.mxu0 %v82
    %2715 = vmatprep.subr.mxu0 0.0
    %2716 = vmatpush1.msra.mxu0 %v81
    %2717 = vmatprep.subr.mxu0 0.0
    %2718 = vmatpush1.msra.mxu0 %v80
    %2719 = vmatprep.subr.mxu0 0.0
    %2720 = vmatpush2.msra.mxu0 0.0
    %2721 = vmatprep.subr.mxu0 0.0
    %2722 = vmatpush2.msra.mxu0 0.0
    %2723 = vmatprep.subr.mxu0 0.0
    %2724 = vmatpush2.msra.mxu0 0.0
    %2725 = vmatprep.subr.mxu0 0.0
    %2726 = vmatpush2.msra.mxu0 0.0
    %2727 = vmatprep.subr.mxu0 0.0
    %2728 = vmatpush2.msra.mxu0 0.0
    %2729 = vmatprep.subr.mxu0 0.0
    %2730 = vmatpush2.msra.mxu0 0.0
    %2731 = vmatprep.subr.mxu0 0.0
    %2732 = vmatpush2.msra.mxu0 0.0
    %2733 = vmatprep.subr.mxu0 0.0
    %2734 = vmatpush2.msra.mxu0 0.0
    %2735 = vmatprep.subr.mxu0 0.0
    %2736 = vmatpush2.msra.mxu0 0.0
    %2737 = vmatprep.subr.mxu0 0.0
    %2738 = vmatpush2.msra.mxu0 0.0
    %2739 = vmatprep.subr.mxu0 0.0
    %2740 = vmatpush2.msra.mxu0 0.0
    %2741 = vmatprep.subr.mxu0 0.0
    %2742 = vmatpush2.msra.mxu0 0.0
    %2743 = vmatprep.subr.mxu0 0.0
    %2744 = vmatpush2.msra.mxu0 0.0
    %2745 = vmatprep.subr.mxu0 0.0
    %2746 = vmatpush2.msra.mxu0 0.0
    %2747 = vmatprep.subr.mxu0 0.0
    %2748 = vmatpush2.msra.mxu0 0.0
    %2749 = vmatprep.subr.mxu0 0.0
    %2750 = vmatpush2.msra.mxu0 0.0
    %2751 = vmatprep.mubr.f32.mxu0 0.0
    %2752 = vmatmul.mubr.f32.gmra.mxu0 %v2685
    %v2753 = vpop.f32.mrf.mxu0
    %v2754 = vadd.f32 0.0, %v2753
    %v2755 = vpop.f32.mrf.mxu0
    %2756 = vdwg.mxu0
    %v2757 = vadd.f32 %v2569, %v2754
    %2758 = vst.msk [vmem:[#allocation8] sm:$0xff] %vm91, %v2757
    %s2759 = scalar_lea.vmem [#allocation2], 8
    %v2760 = vld [vmem:[%s2759] sm:$0xff]
    %s2761 = scalar_lea.vmem %s1, 16
    %v2762 = vld [vmem:[%s2761] sm:$0xff]
    %v2763 = vld [vmem:[%s2761 + $0x8] sm:$0xff]
    %v2764 = vsel %vm91, %v2760, 0.0
    %2765 = vadd.xlane.f32.xlu0 %v2764
    %v2766 = vpop.xlane.xlu0 %2765
    %v2767 = vmul.f32 %v2766, %v95
    %v2768 = vsub.f32 %v2760, %v2767
    %v2769 = vmul.f32 %v2768, %v2768
    %v2770 = vsel %vm91, %v2769, 0.0
    %2771 = vadd.xlane.f32.xlu0 %v2770
    %v2772 = vpop.xlane.xlu0 %2771
    %v2773 = vmul.f32 %v2772, %v95
    %v2774 = vadd.f32 %v2773, 1e-05
    %v2775 = vrsqrt.pop %v2774
    %v2776 = vmul.f32 %v2768, %v2775
    %v2777 = vmul.f32 %v2776, %v109
    %v2778 = vadd.f32 %v2777, %v114
    %v2780 = vsel %vm91, %v2778, 0
    %2782 = vmatprep.subr.mxu0 0.0
    %2783 = vmatpush1.msra.mxu0 0.0
    %2784 = vmatprep.subr.mxu0 0.0
    %2785 = vmatpush1.msra.mxu0 0.0
    %2786 = vmatprep.subr.mxu0 0.0
    %2787 = vmatpush1.msra.mxu0 0.0
    %2788 = vmatprep.subr.mxu0 0.0
    %2789 = vmatpush1.msra.mxu0 0.0
    %2790 = vmatprep.subr.mxu0 0.0
    %2791 = vmatpush1.msra.mxu0 0.0
    %2792 = vmatprep.subr.mxu0 0.0
    %2793 = vmatpush1.msra.mxu0 0.0
    %2794 = vmatprep.subr.mxu0 0.0
    %2795 = vmatpush1.msra.mxu0 0.0
    %2796 = vmatprep.subr.mxu0 0.0
    %2797 = vmatpush1.msra.mxu0 0.0
    %2798 = vmatprep.subr.mxu0 0.0
    %2799 = vmatpush1.msra.mxu0 0.0
    %2800 = vmatprep.subr.mxu0 0.0
    %2801 = vmatpush1.msra.mxu0 0.0
    %2802 = vmatprep.subr.mxu0 0.0
    %2803 = vmatpush1.msra.mxu0 0.0
    %2804 = vmatprep.subr.mxu0 0.0
    %2805 = vmatpush1.msra.mxu0 0.0
    %2806 = vmatprep.subr.mxu0 0.0
    %2807 = vmatpush1.msra.mxu0 %v70
    %2808 = vmatprep.subr.mxu0 0.0
    %2809 = vmatpush1.msra.mxu0 %v68
    %2810 = vmatprep.subr.mxu0 0.0
    %2811 = vmatpush1.msra.mxu0 %v66
    %2812 = vmatprep.subr.mxu0 0.0
    %2813 = vmatpush1.msra.mxu0 %v64
    %2814 = vmatprep.subr.mxu0 0.0
    %2815 = vmatpush2.msra.mxu0 0.0
    %2816 = vmatprep.subr.mxu0 0.0
    %2817 = vmatpush2.msra.mxu0 0.0
    %2818 = vmatprep.subr.mxu0 0.0
    %2819 = vmatpush2.msra.mxu0 0.0
    %2820 = vmatprep.subr.mxu0 0.0
    %2821 = vmatpush2.msra.mxu0 0.0
    %2822 = vmatprep.subr.mxu0 0.0
    %2823 = vmatpush2.msra.mxu0 0.0
    %2824 = vmatprep.subr.mxu0 0.0
    %2825 = vmatpush2.msra.mxu0 0.0
    %2826 = vmatprep.subr.mxu0 0.0
    %2827 = vmatpush2.msra.mxu0 0.0
    %2828 = vmatprep.subr.mxu0 0.0
    %2829 = vmatpush2.msra.mxu0 0.0
    %2830 = vmatprep.subr.mxu0 0.0
    %2831 = vmatpush2.msra.mxu0 0.0
    %2832 = vmatprep.subr.mxu0 0.0
    %2833 = vmatpush2.msra.mxu0 0.0
    %2834 = vmatprep.subr.mxu0 0.0
    %2835 = vmatpush2.msra.mxu0 0.0
    %2836 = vmatprep.subr.mxu0 0.0
    %2837 = vmatpush2.msra.mxu0 0.0
    %2838 = vmatprep.subr.mxu0 0.0
    %2839 = vmatpush2.msra.mxu0 0.0
    %2840 = vmatprep.subr.mxu0 0.0
    %2841 = vmatpush2.msra.mxu0 0.0
    %2842 = vmatprep.subr.mxu0 0.0
    %2843 = vmatpush2.msra.mxu0 0.0
    %2844 = vmatprep.subr.mxu0 0.0
    %2845 = vmatpush2.msra.mxu0 0.0
    %2846 = vmatprep.mubr.f32.mxu0 0.0
    %2847 = vmatmul.mubr.f32.gmra.mxu0 %v2780
    %v2848 = vpop.f32.mrf.mxu0
    %v2849 = vadd.f32 0.0, %v2848
    %v2850 = vpop.f32.mrf.mxu0
    %2851 = vdwg.mxu0
    %2853 = vrot.lane.b32.xlu0 %v2849, 120
    %v2854 = vpop.permute.xlu0 %2853
    %2855 = vrot.lane.b32.xlu0 %v2849, 112
    %v2856 = vpop.permute.xlu0 %2855
    %2857 = vrot.lane.b32.xlu0 %v2849, 104
    %v2858 = vpop.permute.xlu0 %2857
    %2859 = vrot.lane.b32.xlu0 %v2849, 96
    %v2860 = vpop.permute.xlu0 %2859
    %2861 = vrot.lane.b32.xlu0 %v2854, 96
    %v2862 = vpop.permute.xlu0 %2861
    %2863 = vrot.lane.b32.xlu0 %v2856, 96
    %v2864 = vpop.permute.xlu0 %2863
    %2865 = vrot.lane.b32.xlu0 %v2858, 96
    %v2866 = vpop.permute.xlu0 %2865
    %2871 = vxpose.xlu0.b32.start [1/16] %v2860, 128
    %2872 = vxpose.xlu0.b32.cont [2/16] 0.0, 128
    %2873 = vxpose.xlu0.b32.cont [3/16] 0.0, 128
    %2874 = vxpose.xlu0.b32.cont [4/16] 0.0, 128
    %2875 = vxpose.xlu0.b32.cont [5/16] 0.0, 128
    %2876 = vxpose.xlu0.b32.cont [6/16] 0.0, 128
    %2877 = vxpose.xlu0.b32.cont [7/16] 0.0, 128
    %2878 = vxpose.xlu0.b32.cont [8/16] 0.0, 128
    %2879 = vxpose.xlu0.b32.cont [9/16] 0.0, 128
    %2880 = vxpose.xlu0.b32.cont [10/16] 0.0, 128
    %2881 = vxpose.xlu0.b32.cont [11/16] 0.0, 128
    %2882 = vxpose.xlu0.b32.cont [12/16] 0.0, 128
    %2883 = vxpose.xlu0.b32.cont [13/16] 0.0, 128
    %2884 = vxpose.xlu0.b32.cont [14/16] 0.0, 128
    %2885 = vxpose.xlu0.b32.cont [15/16] 0.0, 128
    %2886 = vxpose.xlu0.b32.end [16/16] 0.0, 128
    %v2887 = vpop.trf.xlu0
    %v2888 = vpop.trf.xlu0
    %v2889 = vpop.trf.xlu0
    %v2890 = vpop.trf.xlu0
    %v2891 = vpop.trf.xlu0
    %v2892 = vpop.trf.xlu0
    %v2893 = vpop.trf.xlu0
    %v2894 = vpop.trf.xlu0
    %v2895 = vpop.trf.xlu0
    %v2896 = vpop.trf.xlu0
    %v2897 = vpop.trf.xlu0
    %v2898 = vpop.trf.xlu0
    %v2899 = vpop.trf.xlu0
    %v2900 = vpop.trf.xlu0
    %v2901 = vpop.trf.xlu0
    %v2902 = vpop.trf.xlu0
    %2903 = vxpose.xlu0.b32.start [1/16] %v2862, 128
    %2904 = vxpose.xlu0.b32.cont [2/16] 0.0, 128
    %2905 = vxpose.xlu0.b32.cont [3/16] 0.0, 128
    %2906 = vxpose.xlu0.b32.cont [4/16] 0.0, 128
    %2907 = vxpose.xlu0.b32.cont [5/16] 0.0, 128
    %2908 = vxpose.xlu0.b32.cont [6/16] 0.0, 128
    %2909 = vxpose.xlu0.b32.cont [7/16] 0.0, 128
    %2910 = vxpose.xlu0.b32.cont [8/16] 0.0, 128
    %2911 = vxpose.xlu0.b32.cont [9/16] 0.0, 128
    %2912 = vxpose.xlu0.b32.cont [10/16] 0.0, 128
    %2913 = vxpose.xlu0.b32.cont [11/16] 0.0, 128
    %2914 = vxpose.xlu0.b32.cont [12/16] 0.0, 128
    %2915 = vxpose.xlu0.b32.cont [13/16] 0.0, 128
    %2916 = vxpose.xlu0.b32.cont [14/16] 0.0, 128
    %2917 = vxpose.xlu0.b32.cont [15/16] 0.0, 128
    %2918 = vxpose.xlu0.b32.end [16/16] 0.0, 128
    %v2919 = vpop.trf.xlu0
    %v2920 = vpop.trf.xlu0
    %v2921 = vpop.trf.xlu0
    %v2922 = vpop.trf.xlu0
    %v2923 = vpop.trf.xlu0
    %v2924 = vpop.trf.xlu0
    %v2925 = vpop.trf.xlu0
    %v2926 = vpop.trf.xlu0
    %v2927 = vpop.trf.xlu0
    %v2928 = vpop.trf.xlu0
    %v2929 = vpop.trf.xlu0
    %v2930 = vpop.trf.xlu0
    %v2931 = vpop.trf.xlu0
    %v2932 = vpop.trf.xlu0
    %v2933 = vpop.trf.xlu0
    %v2934 = vpop.trf.xlu0
    %2935 = vxpose.xlu0.b32.start [1/16] %v2864, 128
    %2936 = vxpose.xlu0.b32.cont [2/16] 0.0, 128
    %2937 = vxpose.xlu0.b32.cont [3/16] 0.0, 128
    %2938 = vxpose.xlu0.b32.cont [4/16] 0.0, 128
    %2939 = vxpose.xlu0.b32.cont [5/16] 0.0, 128
    %2940 = vxpose.xlu0.b32.cont [6/16] 0.0, 128
    %2941 = vxpose.xlu0.b32.cont [7/16] 0.0, 128
    %2942 = vxpose.xlu0.b32.cont [8/16] 0.0, 128
    %2943 = vxpose.xlu0.b32.cont [9/16] 0.0, 128
    %2944 = vxpose.xlu0.b32.cont [10/16] 0.0, 128
    %2945 = vxpose.xlu0.b32.cont [11/16] 0.0, 128
    %2946 = vxpose.xlu0.b32.cont [12/16] 0.0, 128
    %2947 = vxpose.xlu0.b32.cont [13/16] 0.0, 128
    %2948 = vxpose.xlu0.b32.cont [14/16] 0.0, 128
    %2949 = vxpose.xlu0.b32.cont [15/16] 0.0, 128
    %2950 = vxpose.xlu0.b32.end [16/16] 0.0, 128
    %v2951 = vpop.trf.xlu0
    %v2952 = vpop.trf.xlu0
    %v2953 = vpop.trf.xlu0
    %v2954 = vpop.trf.xlu0
    %v2955 = vpop.trf.xlu0
    %v2956 = vpop.trf.xlu0
    %v2957 = vpop.trf.xlu0
    %v2958 = vpop.trf.xlu0
    %v2959 = vpop.trf.xlu0
    %v2960 = vpop.trf.xlu0
    %v2961 = vpop.trf.xlu0
    %v2962 = vpop.trf.xlu0
    %v2963 = vpop.trf.xlu0
    %v2964 = vpop.trf.xlu0
    %v2965 = vpop.trf.xlu0
    %v2966 = vpop.trf.xlu0
    %2967 = vxpose.xlu0.b32.start [1/16] %v2866, 128
    %2968 = vxpose.xlu0.b32.cont [2/16] 0.0, 128
    %2969 = vxpose.xlu0.b32.cont [3/16] 0.0, 128
    %2970 = vxpose.xlu0.b32.cont [4/16] 0.0, 128
    %2971 = vxpose.xlu0.b32.cont [5/16] 0.0, 128
    %2972 = vxpose.xlu0.b32.cont [6/16] 0.0, 128
    %2973 = vxpose.xlu0.b32.cont [7/16] 0.0, 128
    %2974 = vxpose.xlu0.b32.cont [8/16] 0.0, 128
    %2975 = vxpose.xlu0.b32.cont [9/16] 0.0, 128
    %2976 = vxpose.xlu0.b32.cont [10/16] 0.0, 128
    %2977 = vxpose.xlu0.b32.cont [11/16] 0.0, 128
    %2978 = vxpose.xlu0.b32.cont [12/16] 0.0, 128
    %2979 = vxpose.xlu0.b32.cont [13/16] 0.0, 128
    %2980 = vxpose.xlu0.b32.cont [14/16] 0.0, 128
    %2981 = vxpose.xlu0.b32.cont [15/16] 0.0, 128
    %2982 = vxpose.xlu0.b32.end [16/16] 0.0, 128
    %v2983 = vpop.trf.xlu0
    %v2984 = vpop.trf.xlu0
    %v2985 = vpop.trf.xlu0
    %v2986 = vpop.trf.xlu0
    %v2987 = vpop.trf.xlu0
    %v2988 = vpop.trf.xlu0
    %v2989 = vpop.trf.xlu0
    %v2990 = vpop.trf.xlu0
    %v2991 = vpop.trf.xlu0
    %v2992 = vpop.trf.xlu0
    %v2993 = vpop.trf.xlu0
    %v2994 = vpop.trf.xlu0
    %v2995 = vpop.trf.xlu0
    %v2996 = vpop.trf.xlu0
    %v2997 = vpop.trf.xlu0
    %v2998 = vpop.trf.xlu0
    %v2999 = vsel %vm336, %v2849, 0
    %3001 = vmatprep.subr.mxu0 0.0
    %3002 = vmatpush1.msra.mxu0 0.0
    %3003 = vmatprep.subr.mxu0 0.0
    %3004 = vmatpush1.msra.mxu0 0.0
    %3005 = vmatprep.subr.mxu0 0.0
    %3006 = vmatpush1.msra.mxu0 0.0
    %3007 = vmatprep.subr.mxu0 0.0
    %3008 = vmatpush1.msra.mxu0 0.0
    %3009 = vmatprep.subr.mxu0 0.0
    %3010 = vmatpush1.msra.mxu0 0.0
    %3011 = vmatprep.subr.mxu0 0.0
    %3012 = vmatpush1.msra.mxu0 0.0
    %3013 = vmatprep.subr.mxu0 0.0
    %3014 = vmatpush1.msra.mxu0 0.0
    %3015 = vmatprep.subr.mxu0 0.0
    %3016 = vmatpush1.msra.mxu0 0.0
    %3017 = vmatprep.subr.mxu0 0.0
    %3018 = vmatpush1.msra.mxu0 0.0
    %3019 = vmatprep.subr.mxu0 0.0
    %3020 = vmatpush1.msra.mxu0 0.0
    %3021 = vmatprep.subr.mxu0 0.0
    %3022 = vmatpush1.msra.mxu0 0.0
    %3023 = vmatprep.subr.mxu0 0.0
    %3024 = vmatpush1.msra.mxu0 0.0
    %3025 = vmatprep.subr.mxu0 0.0
    %3026 = vmatpush1.msra.mxu0 0.0
    %3027 = vmatprep.subr.mxu0 0.0
    %3028 = vmatpush1.msra.mxu0 0.0
    %3029 = vmatprep.subr.mxu0 0.0
    %3030 = vmatpush1.msra.mxu0 0.0
    %3031 = vmatprep.subr.mxu0 0.0
    %3032 = vmatpush1.msra.mxu0 %v2887
    %3033 = vmatprep.subr.mxu0 0.0
    %3034 = vmatpush2.msra.mxu0 0.0
    %3035 = vmatprep.subr.mxu0 0.0
    %3036 = vmatpush2.msra.mxu0 0.0
    %3037 = vmatprep.subr.mxu0 0.0
    %3038 = vmatpush2.msra.mxu0 0.0
    %3039 = vmatprep.subr.mxu0 0.0
    %3040 = vmatpush2.msra.mxu0 0.0
    %3041 = vmatprep.subr.mxu0 0.0
    %3042 = vmatpush2.msra.mxu0 0.0
    %3043 = vmatprep.subr.mxu0 0.0
    %3044 = vmatpush2.msra.mxu0 0.0
    %3045 = vmatprep.subr.mxu0 0.0
    %3046 = vmatpush2.msra.mxu0 0.0
    %3047 = vmatprep.subr.mxu0 0.0
    %3048 = vmatpush2.msra.mxu0 0.0
    %3049 = vmatprep.subr.mxu0 0.0
    %3050 = vmatpush2.msra.mxu0 0.0
    %3051 = vmatprep.subr.mxu0 0.0
    %3052 = vmatpush2.msra.mxu0 0.0
    %3053 = vmatprep.subr.mxu0 0.0
    %3054 = vmatpush2.msra.mxu0 0.0
    %3055 = vmatprep.subr.mxu0 0.0
    %3056 = vmatpush2.msra.mxu0 0.0
    %3057 = vmatprep.subr.mxu0 0.0
    %3058 = vmatpush2.msra.mxu0 0.0
    %3059 = vmatprep.subr.mxu0 0.0
    %3060 = vmatpush2.msra.mxu0 0.0
    %3061 = vmatprep.subr.mxu0 0.0
    %3062 = vmatpush2.msra.mxu0 0.0
    %3063 = vmatprep.subr.mxu0 0.0
    %3064 = vmatpush2.msra.mxu0 0.0
    %3065 = vmatprep.mubr.f32.mxu0 0.0
    %3066 = vmatmul.mubr.f32.gmra.mxu0 %v2999
    %v3067 = vpop.f32.mrf.mxu0
    %v3068 = vadd.f32 0.0, %v3067
    %v3069 = vpop.f32.mrf.mxu0
    %3070 = vdwg.mxu0
    %v3071 = vsel %vm336, %v2854, 0
    %3073 = vmatprep.subr.mxu0 0.0
    %3074 = vmatpush1.msra.mxu0 0.0
    %3075 = vmatprep.subr.mxu0 0.0
    %3076 = vmatpush1.msra.mxu0 0.0
    %3077 = vmatprep.subr.mxu0 0.0
    %3078 = vmatpush1.msra.mxu0 0.0
    %3079 = vmatprep.subr.mxu0 0.0
    %3080 = vmatpush1.msra.mxu0 0.0
    %3081 = vmatprep.subr.mxu0 0.0
    %3082 = vmatpush1.msra.mxu0 0.0
    %3083 = vmatprep.subr.mxu0 0.0
    %3084 = vmatpush1.msra.mxu0 0.0
    %3085 = vmatprep.subr.mxu0 0.0
    %3086 = vmatpush1.msra.mxu0 0.0
    %3087 = vmatprep.subr.mxu0 0.0
    %3088 = vmatpush1.msra.mxu0 0.0
    %3089 = vmatprep.subr.mxu0 0.0
    %3090 = vmatpush1.msra.mxu0 0.0
    %3091 = vmatprep.subr.mxu0 0.0
    %3092 = vmatpush1.msra.mxu0 0.0
    %3093 = vmatprep.subr.mxu0 0.0
    %3094 = vmatpush1.msra.mxu0 0.0
    %3095 = vmatprep.subr.mxu0 0.0
    %3096 = vmatpush1.msra.mxu0 0.0
    %3097 = vmatprep.subr.mxu0 0.0
    %3098 = vmatpush1.msra.mxu0 0.0
    %3099 = vmatprep.subr.mxu0 0.0
    %3100 = vmatpush1.msra.mxu0 0.0
    %3101 = vmatprep.subr.mxu0 0.0
    %3102 = vmatpush1.msra.mxu0 0.0
    %3103 = vmatprep.subr.mxu0 0.0
    %3104 = vmatpush1.msra.mxu0 %v2919
    %3105 = vmatprep.subr.mxu0 0.0
    %3106 = vmatpush2.msra.mxu0 0.0
    %3107 = vmatprep.subr.mxu0 0.0
    %3108 = vmatpush2.msra.mxu0 0.0
    %3109 = vmatprep.subr.mxu0 0.0
    %3110 = vmatpush2.msra.mxu0 0.0
    %3111 = vmatprep.subr.mxu0 0.0
    %3112 = vmatpush2.msra.mxu0 0.0
    %3113 = vmatprep.subr.mxu0 0.0
    %3114 = vmatpush2.msra.mxu0 0.0
    %3115 = vmatprep.subr.mxu0 0.0
    %3116 = vmatpush2.msra.mxu0 0.0
    %3117 = vmatprep.subr.mxu0 0.0
    %3118 = vmatpush2.msra.mxu0 0.0
    %3119 = vmatprep.subr.mxu0 0.0
    %3120 = vmatpush2.msra.mxu0 0.0
    %3121 = vmatprep.subr.mxu0 0.0
    %3122 = vmatpush2.msra.mxu0 0.0
    %3123 = vmatprep.subr.mxu0 0.0
    %3124 = vmatpush2.msra.mxu0 0.0
    %3125 = vmatprep.subr.mxu0 0.0
    %3126 = vmatpush2.msra.mxu0 0.0
    %3127 = vmatprep.subr.mxu0 0.0
    %3128 = vmatpush2.msra.mxu0 0.0
    %3129 = vmatprep.subr.mxu0 0.0
    %3130 = vmatpush2.msra.mxu0 0.0
    %3131 = vmatprep.subr.mxu0 0.0
    %3132 = vmatpush2.msra.mxu0 0.0
    %3133 = vmatprep.subr.mxu0 0.0
    %3134 = vmatpush2.msra.mxu0 0.0
    %3135 = vmatprep.subr.mxu0 0.0
    %3136 = vmatpush2.msra.mxu0 0.0
    %3137 = vmatprep.mubr.f32.mxu0 0.0
    %3138 = vmatmul.mubr.f32.gmra.mxu0 %v3071
    %v3139 = vpop.f32.mrf.mxu0
    %v3140 = vadd.f32 0.0, %v3139
    %v3141 = vpop.f32.mrf.mxu0
    %3142 = vdwg.mxu0
    %v3143 = vsel %vm336, %v2856, 0
    %3145 = vmatprep.subr.mxu0 0.0
    %3146 = vmatpush1.msra.mxu0 0.0
    %3147 = vmatprep.subr.mxu0 0.0
    %3148 = vmatpush1.msra.mxu0 0.0
    %3149 = vmatprep.subr.mxu0 0.0
    %3150 = vmatpush1.msra.mxu0 0.0
    %3151 = vmatprep.subr.mxu0 0.0
    %3152 = vmatpush1.msra.mxu0 0.0
    %3153 = vmatprep.subr.mxu0 0.0
    %3154 = vmatpush1.msra.mxu0 0.0
    %3155 = vmatprep.subr.mxu0 0.0
    %3156 = vmatpush1.msra.mxu0 0.0
    %3157 = vmatprep.subr.mxu0 0.0
    %3158 = vmatpush1.msra.mxu0 0.0
    %3159 = vmatprep.subr.mxu0 0.0
    %3160 = vmatpush1.msra.mxu0 0.0
    %3161 = vmatprep.subr.mxu0 0.0
    %3162 = vmatpush1.msra.mxu0 0.0
    %3163 = vmatprep.subr.mxu0 0.0
    %3164 = vmatpush1.msra.mxu0 0.0
    %3165 = vmatprep.subr.mxu0 0.0
    %3166 = vmatpush1.msra.mxu0 0.0
    %3167 = vmatprep.subr.mxu0 0.0
    %3168 = vmatpush1.msra.mxu0 0.0
    %3169 = vmatprep.subr.mxu0 0.0
    %3170 = vmatpush1.msra.mxu0 0.0
    %3171 = vmatprep.subr.mxu0 0.0
    %3172 = vmatpush1.msra.mxu0 0.0
    %3173 = vmatprep.subr.mxu0 0.0
    %3174 = vmatpush1.msra.mxu0 0.0
    %3175 = vmatprep.subr.mxu0 0.0
    %3176 = vmatpush1.msra.mxu0 %v2951
    %3177 = vmatprep.subr.mxu0 0.0
    %3178 = vmatpush2.msra.mxu0 0.0
    %3179 = vmatprep.subr.mxu0 0.0
    %3180 = vmatpush2.msra.mxu0 0.0
    %3181 = vmatprep.subr.mxu0 0.0
    %3182 = vmatpush2.msra.mxu0 0.0
    %3183 = vmatprep.subr.mxu0 0.0
    %3184 = vmatpush2.msra.mxu0 0.0
    %3185 = vmatprep.subr.mxu0 0.0
    %3186 = vmatpush2.msra.mxu0 0.0
    %3187 = vmatprep.subr.mxu0 0.0
    %3188 = vmatpush2.msra.mxu0 0.0
    %3189 = vmatprep.subr.mxu0 0.0
    %3190 = vmatpush2.msra.mxu0 0.0
    %3191 = vmatprep.subr.mxu0 0.0
    %3192 = vmatpush2.msra.mxu0 0.0
    %3193 = vmatprep.subr.mxu0 0.0
    %3194 = vmatpush2.msra.mxu0 0.0
    %3195 = vmatprep.subr.mxu0 0.0
    %3196 = vmatpush2.msra.mxu0 0.0
    %3197 = vmatprep.subr.mxu0 0.0
    %3198 = vmatpush2.msra.mxu0 0.0
    %3199 = vmatprep.subr.mxu0 0.0
    %3200 = vmatpush2.msra.mxu0 0.0
    %3201 = vmatprep.subr.mxu0 0.0
    %3202 = vmatpush2.msra.mxu0 0.0
    %3203 = vmatprep.subr.mxu0 0.0
    %3204 = vmatpush2.msra.mxu0 0.0
    %3205 = vmatprep.subr.mxu0 0.0
    %3206 = vmatpush2.msra.mxu0 0.0
    %3207 = vmatprep.subr.mxu0 0.0
    %3208 = vmatpush2.msra.mxu0 0.0
    %3209 = vmatprep.mubr.f32.mxu0 0.0
    %3210 = vmatmul.mubr.f32.gmra.mxu0 %v3143
    %v3211 = vpop.f32.mrf.mxu0
    %v3212 = vadd.f32 0.0, %v3211
    %v3213 = vpop.f32.mrf.mxu0
    %3214 = vdwg.mxu0
    %v3215 = vsel %vm336, %v2858, 0
    %3217 = vmatprep.subr.mxu0 0.0
    %3218 = vmatpush1.msra.mxu0 0.0
    %3219 = vmatprep.subr.mxu0 0.0
    %3220 = vmatpush1.msra.mxu0 0.0
    %3221 = vmatprep.subr.mxu0 0.0
    %3222 = vmatpush1.msra.mxu0 0.0
    %3223 = vmatprep.subr.mxu0 0.0
    %3224 = vmatpush1.msra.mxu0 0.0
    %3225 = vmatprep.subr.mxu0 0.0
    %3226 = vmatpush1.msra.mxu0 0.0
    %3227 = vmatprep.subr.mxu0 0.0
    %3228 = vmatpush1.msra.mxu0 0.0
    %3229 = vmatprep.subr.mxu0 0.0
    %3230 = vmatpush1.msra.mxu0 0.0
    %3231 = vmatprep.subr.mxu0 0.0
    %3232 = vmatpush1.msra.mxu0 0.0
    %3233 = vmatprep.subr.mxu0 0.0
    %3234 = vmatpush1.msra.mxu0 0.0
    %3235 = vmatprep.subr.mxu0 0.0
    %3236 = vmatpush1.msra.mxu0 0.0
    %3237 = vmatprep.subr.mxu0 0.0
    %3238 = vmatpush1.msra.mxu0 0.0
    %3239 = vmatprep.subr.mxu0 0.0
    %3240 = vmatpush1.msra.mxu0 0.0
    %3241 = vmatprep.subr.mxu0 0.0
    %3242 = vmatpush1.msra.mxu0 0.0
    %3243 = vmatprep.subr.mxu0 0.0
    %3244 = vmatpush1.msra.mxu0 0.0
    %3245 = vmatprep.subr.mxu0 0.0
    %3246 = vmatpush1.msra.mxu0 0.0
    %3247 = vmatprep.subr.mxu0 0.0
    %3248 = vmatpush1.msra.mxu0 %v2983
    %3249 = vmatprep.subr.mxu0 0.0
    %3250 = vmatpush2.msra.mxu0 0.0
    %3251 = vmatprep.subr.mxu0 0.0
    %3252 = vmatpush2.msra.mxu0 0.0
    %3253 = vmatprep.subr.mxu0 0.0
    %3254 = vmatpush2.msra.mxu0 0.0
    %3255 = vmatprep.subr.mxu0 0.0
    %3256 = vmatpush2.msra.mxu0 0.0
    %3257 = vmatprep.subr.mxu0 0.0
    %3258 = vmatpush2.msra.mxu0 0.0
    %3259 = vmatprep.subr.mxu0 0.0
    %3260 = vmatpush2.msra.mxu0 0.0
    %3261 = vmatprep.subr.mxu0 0.0
    %3262 = vmatpush2.msra.mxu0 0.0
    %3263 = vmatprep.subr.mxu0 0.0
    %3264 = vmatpush2.msra.mxu0 0.0
    %3265 = vmatprep.subr.mxu0 0.0
    %3266 = vmatpush2.msra.mxu0 0.0
    %3267 = vmatprep.subr.mxu0 0.0
    %3268 = vmatpush2.msra.mxu0 0.0
    %3269 = vmatprep.subr.mxu0 0.0
    %3270 = vmatpush2.msra.mxu0 0.0
    %3271 = vmatprep.subr.mxu0 0.0
    %3272 = vmatpush2.msra.mxu0 0.0
    %3273 = vmatprep.subr.mxu0 0.0
    %3274 = vmatpush2.msra.mxu0 0.0
    %3275 = vmatprep.subr.mxu0 0.0
    %3276 = vmatpush2.msra.mxu0 0.0
    %3277 = vmatprep.subr.mxu0 0.0
    %3278 = vmatpush2.msra.mxu0 0.0
    %3279 = vmatprep.subr.mxu0 0.0
    %3280 = vmatpush2.msra.mxu0 0.0
    %3281 = vmatprep.mubr.f32.mxu0 0.0
    %3282 = vmatmul.mubr.f32.gmra.mxu0 %v3215
    %v3283 = vpop.f32.mrf.mxu0
    %v3284 = vadd.f32 0.0, %v3283
    %v3285 = vpop.f32.mrf.mxu0
    %3286 = vdwg.mxu0
    %v3287 = vsel %vm336, %v3068, -inf
    %3288 = vmax.xlane.f32.xlu0 %v3287
    %v3289 = vpop.xlane.xlu0 %3288
    %v3290 = vsel %vm336, %v3140, -inf
    %3291 = vmax.xlane.f32.xlu0 %v3290
    %v3292 = vpop.xlane.xlu0 %3291
    %v3293 = vsel %vm336, %v3212, -inf
    %3294 = vmax.xlane.f32.xlu0 %v3293
    %v3295 = vpop.xlane.xlu0 %3294
    %v3296 = vsel %vm336, %v3284, -inf
    %3297 = vmax.xlane.f32.xlu0 %v3296
    %v3298 = vpop.xlane.xlu0 %3297
    %v3299 = vsub.f32 %v3068, %v3289
    %v3300 = vsub.f32 %v3140, %v3292
    %v3301 = vsub.f32 %v3212, %v3295
    %v3302 = vsub.f32 %v3284, %v3298
    %v3303 = vmul.f32 %v3299, 1.442695
    %v3304 = vpow.pop %v3303
    %v3305 = vmul.f32 %v3300, 1.442695
    %v3306 = vpow.pop %v3305
    %v3307 = vmul.f32 %v3301, 1.442695
    %v3308 = vpow.pop %v3307
    %v3309 = vmul.f32 %v3302, 1.442695
    %v3310 = vpow.pop %v3309
    %v3311 = vsel %vm336, %v3304, 0.0
    %3312 = vadd.xlane.f32.xlu0 %v3311
    %v3313 = vpop.xlane.xlu0 %3312
    %v3314 = vsel %vm336, %v3306, 0.0
    %3315 = vadd.xlane.f32.xlu0 %v3314
    %v3316 = vpop.xlane.xlu0 %3315
    %v3317 = vsel %vm336, %v3308, 0.0
    %3318 = vadd.xlane.f32.xlu0 %v3317
    %v3319 = vpop.xlane.xlu0 %3318
    %v3320 = vsel %vm336, %v3310, 0.0
    %3321 = vadd.xlane.f32.xlu0 %v3320
    %v3322 = vpop.xlane.xlu0 %3321
    %v3323 = vrcp.pop %v3313
    %v3324 = vrcp.pop %v3316
    %v3325 = vrcp.pop %v3319
    %v3326 = vrcp.pop %v3322
    %v3327 = vmul.f32 %v3304, %v3323
    %v3328 = vmul.f32 %v3306, %v3324
    %v3329 = vmul.f32 %v3308, %v3325
    %v3330 = vmul.f32 %v3310, %v3326
    %3331 = vrot.lane.b32.xlu0 %v2849, 64
    %v3332 = vpop.permute.xlu0 %3331
    %v3335 = vsel %vm336, %v3327, 0
    %3337 = vmatprep.subr.mxu0 0.0
    %3338 = vmatpush1.msra.mxu0 0.0
    %3339 = vmatprep.subr.mxu0 0.0
    %3340 = vmatpush1.msra.mxu0 0.0
    %3341 = vmatprep.subr.mxu0 0.0
    %3342 = vmatpush1.msra.mxu0 0.0
    %3343 = vmatprep.subr.mxu0 0.0
    %3344 = vmatpush1.msra.mxu0 0.0
    %3345 = vmatprep.subr.mxu0 0.0
    %3346 = vmatpush1.msra.mxu0 0.0
    %3347 = vmatprep.subr.mxu0 0.0
    %3348 = vmatpush1.msra.mxu0 0.0
    %3349 = vmatprep.subr.mxu0 0.0
    %3350 = vmatpush1.msra.mxu0 0.0
    %3351 = vmatprep.subr.mxu0 0.0
    %3352 = vmatpush1.msra.mxu0 0.0
    %3353 = vmatprep.subr.mxu0 0.0
    %3354 = vmatpush1.msra.mxu0 0.0
    %3355 = vmatprep.subr.mxu0 0.0
    %3356 = vmatpush1.msra.mxu0 0.0
    %3357 = vmatprep.subr.mxu0 0.0
    %3358 = vmatpush1.msra.mxu0 0.0
    %3359 = vmatprep.subr.mxu0 0.0
    %3360 = vmatpush1.msra.mxu0 0.0
    %3361 = vmatprep.subr.mxu0 0.0
    %3362 = vmatpush1.msra.mxu0 0.0
    %3363 = vmatprep.subr.mxu0 0.0
    %3364 = vmatpush1.msra.mxu0 0.0
    %3365 = vmatprep.subr.mxu0 0.0
    %3366 = vmatpush1.msra.mxu0 0.0
    %3367 = vmatprep.subr.mxu0 0.0
    %3368 = vmatpush1.msra.mxu0 %v3332
    %3369 = vmatprep.subr.mxu0 0.0
    %3370 = vmatpush2.msra.mxu0 0.0
    %3371 = vmatprep.subr.mxu0 0.0
    %3372 = vmatpush2.msra.mxu0 0.0
    %3373 = vmatprep.subr.mxu0 0.0
    %3374 = vmatpush2.msra.mxu0 0.0
    %3375 = vmatprep.subr.mxu0 0.0
    %3376 = vmatpush2.msra.mxu0 0.0
    %3377 = vmatprep.subr.mxu0 0.0
    %3378 = vmatpush2.msra.mxu0 0.0
    %3379 = vmatprep.subr.mxu0 0.0
    %3380 = vmatpush2.msra.mxu0 0.0
    %3381 = vmatprep.subr.mxu0 0.0
    %3382 = vmatpush2.msra.mxu0 0.0
    %3383 = vmatprep.subr.mxu0 0.0
    %3384 = vmatpush2.msra.mxu0 0.0
    %3385 = vmatprep.subr.mxu0 0.0
    %3386 = vmatpush2.msra.mxu0 0.0
    %3387 = vmatprep.subr.mxu0 0.0
    %3388 = vmatpush2.msra.mxu0 0.0
    %3389 = vmatprep.subr.mxu0 0.0
    %3390 = vmatpush2.msra.mxu0 0.0
    %3391 = vmatprep.subr.mxu0 0.0
    %3392 = vmatpush2.msra.mxu0 0.0
    %3393 = vmatprep.subr.mxu0 0.0
    %3394 = vmatpush2.msra.mxu0 0.0
    %3395 = vmatprep.subr.mxu0 0.0
    %3396 = vmatpush2.msra.mxu0 0.0
    %3397 = vmatprep.subr.mxu0 0.0
    %3398 = vmatpush2.msra.mxu0 0.0
    %3399 = vmatprep.subr.mxu0 0.0
    %3400 = vmatpush2.msra.mxu0 0.0
    %3401 = vmatprep.mubr.f32.mxu0 0.0
    %3402 = vmatmul.mubr.f32.gmra.mxu0 %v3335
    %v3403 = vpop.f32.mrf.mxu0
    %v3404 = vadd.f32 0.0, %v3403
    %v3405 = vpop.f32.mrf.mxu0
    %3406 = vdwg.mxu0
    %3407 = vrot.lane.b32.xlu0 %v2854, 64
    %v3408 = vpop.permute.xlu0 %3407
    %v3411 = vsel %vm336, %v3328, 0
    %3413 = vmatprep.subr.mxu0 0.0
    %3414 = vmatpush1.msra.mxu0 0.0
    %3415 = vmatprep.subr.mxu0 0.0
    %3416 = vmatpush1.msra.mxu0 0.0
    %3417 = vmatprep.subr.mxu0 0.0
    %3418 = vmatpush1.msra.mxu0 0.0
    %3419 = vmatprep.subr.mxu0 0.0
    %3420 = vmatpush1.msra.mxu0 0.0
    %3421 = vmatprep.subr.mxu0 0.0
    %3422 = vmatpush1.msra.mxu0 0.0
    %3423 = vmatprep.subr.mxu0 0.0
    %3424 = vmatpush1.msra.mxu0 0.0
    %3425 = vmatprep.subr.mxu0 0.0
    %3426 = vmatpush1.msra.mxu0 0.0
    %3427 = vmatprep.subr.mxu0 0.0
    %3428 = vmatpush1.msra.mxu0 0.0
    %3429 = vmatprep.subr.mxu0 0.0
    %3430 = vmatpush1.msra.mxu0 0.0
    %3431 = vmatprep.subr.mxu0 0.0
    %3432 = vmatpush1.msra.mxu0 0.0
    %3433 = vmatprep.subr.mxu0 0.0
    %3434 = vmatpush1.msra.mxu0 0.0
    %3435 = vmatprep.subr.mxu0 0.0
    %3436 = vmatpush1.msra.mxu0 0.0
    %3437 = vmatprep.subr.mxu0 0.0
    %3438 = vmatpush1.msra.mxu0 0.0
    %3439 = vmatprep.subr.mxu0 0.0
    %3440 = vmatpush1.msra.mxu0 0.0
    %3441 = vmatprep.subr.mxu0 0.0
    %3442 = vmatpush1.msra.mxu0 0.0
    %3443 = vmatprep.subr.mxu0 0.0
    %3444 = vmatpush1.msra.mxu0 %v3408
    %3445 = vmatprep.subr.mxu0 0.0
    %3446 = vmatpush2.msra.mxu0 0.0
    %3447 = vmatprep.subr.mxu0 0.0
    %3448 = vmatpush2.msra.mxu0 0.0
    %3449 = vmatprep.subr.mxu0 0.0
    %3450 = vmatpush2.msra.mxu0 0.0
    %3451 = vmatprep.subr.mxu0 0.0
    %3452 = vmatpush2.msra.mxu0 0.0
    %3453 = vmatprep.subr.mxu0 0.0
    %3454 = vmatpush2.msra.mxu0 0.0
    %3455 = vmatprep.subr.mxu0 0.0
    %3456 = vmatpush2.msra.mxu0 0.0
    %3457 = vmatprep.subr.mxu0 0.0
    %3458 = vmatpush2.msra.mxu0 0.0
    %3459 = vmatprep.subr.mxu0 0.0
    %3460 = vmatpush2.msra.mxu0 0.0
    %3461 = vmatprep.subr.mxu0 0.0
    %3462 = vmatpush2.msra.mxu0 0.0
    %3463 = vmatprep.subr.mxu0 0.0
    %3464 = vmatpush2.msra.mxu0 0.0
    %3465 = vmatprep.subr.mxu0 0.0
    %3466 = vmatpush2.msra.mxu0 0.0
    %3467 = vmatprep.subr.mxu0 0.0
    %3468 = vmatpush2.msra.mxu0 0.0
    %3469 = vmatprep.subr.mxu0 0.0
    %3470 = vmatpush2.msra.mxu0 0.0
    %3471 = vmatprep.subr.mxu0 0.0
    %3472 = vmatpush2.msra.mxu0 0.0
    %3473 = vmatprep.subr.mxu0 0.0
    %3474 = vmatpush2.msra.mxu0 0.0
    %3475 = vmatprep.subr.mxu0 0.0
    %3476 = vmatpush2.msra.mxu0 0.0
    %3477 = vmatprep.mubr.f32.mxu0 0.0
    %3478 = vmatmul.mubr.f32.gmra.mxu0 %v3411
    %v3479 = vpop.f32.mrf.mxu0
    %v3480 = vadd.f32 0.0, %v3479
    %v3481 = vpop.f32.mrf.mxu0
    %3482 = vdwg.mxu0
    %3483 = vrot.lane.b32.xlu0 %v2856, 64
    %v3484 = vpop.permute.xlu0 %3483
    %v3487 = vsel %vm336, %v3329, 0
    %3489 = vmatprep.subr.mxu0 0.0
    %3490 = vmatpush1.msra.mxu0 0.0
    %3491 = vmatprep.subr.mxu0 0.0
    %3492 = vmatpush1.msra.mxu0 0.0
    %3493 = vmatprep.subr.mxu0 0.0
    %3494 = vmatpush1.msra.mxu0 0.0
    %3495 = vmatprep.subr.mxu0 0.0
    %3496 = vmatpush1.msra.mxu0 0.0
    %3497 = vmatprep.subr.mxu0 0.0
    %3498 = vmatpush1.msra.mxu0 0.0
    %3499 = vmatprep.subr.mxu0 0.0
    %3500 = vmatpush1.msra.mxu0 0.0
    %3501 = vmatprep.subr.mxu0 0.0
    %3502 = vmatpush1.msra.mxu0 0.0
    %3503 = vmatprep.subr.mxu0 0.0
    %3504 = vmatpush1.msra.mxu0 0.0
    %3505 = vmatprep.subr.mxu0 0.0
    %3506 = vmatpush1.msra.mxu0 0.0
    %3507 = vmatprep.subr.mxu0 0.0
    %3508 = vmatpush1.msra.mxu0 0.0
    %3509 = vmatprep.subr.mxu0 0.0
    %3510 = vmatpush1.msra.mxu0 0.0
    %3511 = vmatprep.subr.mxu0 0.0
    %3512 = vmatpush1.msra.mxu0 0.0
    %3513 = vmatprep.subr.mxu0 0.0
    %3514 = vmatpush1.msra.mxu0 0.0
    %3515 = vmatprep.subr.mxu0 0.0
    %3516 = vmatpush1.msra.mxu0 0.0
    %3517 = vmatprep.subr.mxu0 0.0
    %3518 = vmatpush1.msra.mxu0 0.0
    %3519 = vmatprep.subr.mxu0 0.0
    %3520 = vmatpush1.msra.mxu0 %v3484
    %3521 = vmatprep.subr.mxu0 0.0
    %3522 = vmatpush2.msra.mxu0 0.0
    %3523 = vmatprep.subr.mxu0 0.0
    %3524 = vmatpush2.msra.mxu0 0.0
    %3525 = vmatprep.subr.mxu0 0.0
    %3526 = vmatpush2.msra.mxu0 0.0
    %3527 = vmatprep.subr.mxu0 0.0
    %3528 = vmatpush2.msra.mxu0 0.0
    %3529 = vmatprep.subr.mxu0 0.0
    %3530 = vmatpush2.msra.mxu0 0.0
    %3531 = vmatprep.subr.mxu0 0.0
    %3532 = vmatpush2.msra.mxu0 0.0
    %3533 = vmatprep.subr.mxu0 0.0
    %3534 = vmatpush2.msra.mxu0 0.0
    %3535 = vmatprep.subr.mxu0 0.0
    %3536 = vmatpush2.msra.mxu0 0.0
    %3537 = vmatprep.subr.mxu0 0.0
    %3538 = vmatpush2.msra.mxu0 0.0
    %3539 = vmatprep.subr.mxu0 0.0
    %3540 = vmatpush2.msra.mxu0 0.0
    %3541 = vmatprep.subr.mxu0 0.0
    %3542 = vmatpush2.msra.mxu0 0.0
    %3543 = vmatprep.subr.mxu0 0.0
    %3544 = vmatpush2.msra.mxu0 0.0
    %3545 = vmatprep.subr.mxu0 0.0
    %3546 = vmatpush2.msra.mxu0 0.0
    %3547 = vmatprep.subr.mxu0 0.0
    %3548 = vmatpush2.msra.mxu0 0.0
    %3549 = vmatprep.subr.mxu0 0.0
    %3550 = vmatpush2.msra.mxu0 0.0
    %3551 = vmatprep.subr.mxu0 0.0
    %3552 = vmatpush2.msra.mxu0 0.0
    %3553 = vmatprep.mubr.f32.mxu0 0.0
    %3554 = vmatmul.mubr.f32.gmra.mxu0 %v3487
    %v3555 = vpop.f32.mrf.mxu0
    %v3556 = vadd.f32 0.0, %v3555
    %v3557 = vpop.f32.mrf.mxu0
    %3558 = vdwg.mxu0
    %3559 = vrot.lane.b32.xlu0 %v2858, 64
    %v3560 = vpop.permute.xlu0 %3559
    %v3563 = vsel %vm336, %v3330, 0
    %3565 = vmatprep.subr.mxu0 0.0
    %3566 = vmatpush1.msra.mxu0 0.0
    %3567 = vmatprep.subr.mxu0 0.0
    %3568 = vmatpush1.msra.mxu0 0.0
    %3569 = vmatprep.subr.mxu0 0.0
    %3570 = vmatpush1.msra.mxu0 0.0
    %3571 = vmatprep.subr.mxu0 0.0
    %3572 = vmatpush1.msra.mxu0 0.0
    %3573 = vmatprep.subr.mxu0 0.0
    %3574 = vmatpush1.msra.mxu0 0.0
    %3575 = vmatprep.subr.mxu0 0.0
    %3576 = vmatpush1.msra.mxu0 0.0
    %3577 = vmatprep.subr.mxu0 0.0
    %3578 = vmatpush1.msra.mxu0 0.0
    %3579 = vmatprep.subr.mxu0 0.0
    %3580 = vmatpush1.msra.mxu0 0.0
    %3581 = vmatprep.subr.mxu0 0.0
    %3582 = vmatpush1.msra.mxu0 0.0
    %3583 = vmatprep.subr.mxu0 0.0
    %3584 = vmatpush1.msra.mxu0 0.0
    %3585 = vmatprep.subr.mxu0 0.0
    %3586 = vmatpush1.msra.mxu0 0.0
    %3587 = vmatprep.subr.mxu0 0.0
    %3588 = vmatpush1.msra.mxu0 0.0
    %3589 = vmatprep.subr.mxu0 0.0
    %3590 = vmatpush1.msra.mxu0 0.0
    %3591 = vmatprep.subr.mxu0 0.0
    %3592 = vmatpush1.msra.mxu0 0.0
    %3593 = vmatprep.subr.mxu0 0.0
    %3594 = vmatpush1.msra.mxu0 0.0
    %3595 = vmatprep.subr.mxu0 0.0
    %3596 = vmatpush1.msra.mxu0 %v3560
    %3597 = vmatprep.subr.mxu0 0.0
    %3598 = vmatpush2.msra.mxu0 0.0
    %3599 = vmatprep.subr.mxu0 0.0
    %3600 = vmatpush2.msra.mxu0 0.0
    %3601 = vmatprep.subr.mxu0 0.0
    %3602 = vmatpush2.msra.mxu0 0.0
    %3603 = vmatprep.subr.mxu0 0.0
    %3604 = vmatpush2.msra.mxu0 0.0
    %3605 = vmatprep.subr.mxu0 0.0
    %3606 = vmatpush2.msra.mxu0 0.0
    %3607 = vmatprep.subr.mxu0 0.0
    %3608 = vmatpush2.msra.mxu0 0.0
    %3609 = vmatprep.subr.mxu0 0.0
    %3610 = vmatpush2.msra.mxu0 0.0
    %3611 = vmatprep.subr.mxu0 0.0
    %3612 = vmatpush2.msra.mxu0 0.0
    %3613 = vmatprep.subr.mxu0 0.0
    %3614 = vmatpush2.msra.mxu0 0.0
    %3615 = vmatprep.subr.mxu0 0.0
    %3616 = vmatpush2.msra.mxu0 0.0
    %3617 = vmatprep.subr.mxu0 0.0
    %3618 = vmatpush2.msra.mxu0 0.0
    %3619 = vmatprep.subr.mxu0 0.0
    %3620 = vmatpush2.msra.mxu0 0.0
    %3621 = vmatprep.subr.mxu0 0.0
    %3622 = vmatpush2.msra.mxu0 0.0
    %3623 = vmatprep.subr.mxu0 0.0
    %3624 = vmatpush2.msra.mxu0 0.0
    %3625 = vmatprep.subr.mxu0 0.0
    %3626 = vmatpush2.msra.mxu0 0.0
    %3627 = vmatprep.subr.mxu0 0.0
    %3628 = vmatpush2.msra.mxu0 0.0
    %3629 = vmatprep.mubr.f32.mxu0 0.0
    %3630 = vmatmul.mubr.f32.gmra.mxu0 %v3563
    %v3631 = vpop.f32.mrf.mxu0
    %v3632 = vadd.f32 0.0, %v3631
    %v3633 = vpop.f32.mrf.mxu0
    %3634 = vdwg.mxu0
    %v3636 = vsel %vm336, %v3404, 0
    %3638 = vmatprep.subr.mxu0 0.0
    %3639 = vmatpush1.msra.mxu0 0.0
    %3640 = vmatprep.subr.mxu0 0.0
    %3641 = vmatpush1.msra.mxu0 0.0
    %3642 = vmatprep.subr.mxu0 0.0
    %3643 = vmatpush1.msra.mxu0 0.0
    %3644 = vmatprep.subr.mxu0 0.0
    %3645 = vmatpush1.msra.mxu0 0.0
    %3646 = vmatprep.subr.mxu0 0.0
    %3647 = vmatpush1.msra.mxu0 0.0
    %3648 = vmatprep.subr.mxu0 0.0
    %3649 = vmatpush1.msra.mxu0 0.0
    %3650 = vmatprep.subr.mxu0 0.0
    %3651 = vmatpush1.msra.mxu0 0.0
    %3652 = vmatprep.subr.mxu0 0.0
    %3653 = vmatpush1.msra.mxu0 0.0
    %3654 = vmatprep.subr.mxu0 0.0
    %3655 = vmatpush1.msra.mxu0 0.0
    %3656 = vmatprep.subr.mxu0 0.0
    %3657 = vmatpush1.msra.mxu0 0.0
    %3658 = vmatprep.subr.mxu0 0.0
    %3659 = vmatpush1.msra.mxu0 0.0
    %3660 = vmatprep.subr.mxu0 0.0
    %3661 = vmatpush1.msra.mxu0 0.0
    %3662 = vmatprep.subr.mxu0 0.0
    %3663 = vmatpush1.msra.mxu0 0.0
    %3664 = vmatprep.subr.mxu0 0.0
    %3665 = vmatpush1.msra.mxu0 0.0
    %3666 = vmatprep.subr.mxu0 0.0
    %3667 = vmatpush1.msra.mxu0 0.0
    %3668 = vmatprep.subr.mxu0 0.0
    %3669 = vmatpush1.msra.mxu0 %v72
    %3670 = vmatprep.subr.mxu0 0.0
    %3671 = vmatpush2.msra.mxu0 0.0
    %3672 = vmatprep.subr.mxu0 0.0
    %3673 = vmatpush2.msra.mxu0 0.0
    %3674 = vmatprep.subr.mxu0 0.0
    %3675 = vmatpush2.msra.mxu0 0.0
    %3676 = vmatprep.subr.mxu0 0.0
    %3677 = vmatpush2.msra.mxu0 0.0
    %3678 = vmatprep.subr.mxu0 0.0
    %3679 = vmatpush2.msra.mxu0 0.0
    %3680 = vmatprep.subr.mxu0 0.0
    %3681 = vmatpush2.msra.mxu0 0.0
    %3682 = vmatprep.subr.mxu0 0.0
    %3683 = vmatpush2.msra.mxu0 0.0
    %3684 = vmatprep.subr.mxu0 0.0
    %3685 = vmatpush2.msra.mxu0 0.0
    %3686 = vmatprep.subr.mxu0 0.0
    %3687 = vmatpush2.msra.mxu0 0.0
    %3688 = vmatprep.subr.mxu0 0.0
    %3689 = vmatpush2.msra.mxu0 0.0
    %3690 = vmatprep.subr.mxu0 0.0
    %3691 = vmatpush2.msra.mxu0 0.0
    %3692 = vmatprep.subr.mxu0 0.0
    %3693 = vmatpush2.msra.mxu0 0.0
    %3694 = vmatprep.subr.mxu0 0.0
    %3695 = vmatpush2.msra.mxu0 0.0
    %3696 = vmatprep.subr.mxu0 0.0
    %3697 = vmatpush2.msra.mxu0 0.0
    %3698 = vmatprep.subr.mxu0 0.0
    %3699 = vmatpush2.msra.mxu0 0.0
    %3700 = vmatprep.subr.mxu0 0.0
    %3701 = vmatpush2.msra.mxu0 0.0
    %3702 = vmatprep.mubr.f32.mxu0 0.0
    %3703 = vmatmul.mubr.f32.gmra.mxu0 %v3636
    %v3704 = vpop.f32.mrf.mxu0
    %v3705 = vadd.f32 0.0, %v3704
    %v3706 = vpop.f32.mrf.mxu0
    %3707 = vdwg.mxu0
    %v3709 = vsel %vm336, %v3480, 0
    %3711 = vmatprep.subr.mxu0 0.0
    %3712 = vmatpush1.msra.mxu0 0.0
    %3713 = vmatprep.subr.mxu0 0.0
    %3714 = vmatpush1.msra.mxu0 0.0
    %3715 = vmatprep.subr.mxu0 0.0
    %3716 = vmatpush1.msra.mxu0 0.0
    %3717 = vmatprep.subr.mxu0 0.0
    %3718 = vmatpush1.msra.mxu0 0.0
    %3719 = vmatprep.subr.mxu0 0.0
    %3720 = vmatpush1.msra.mxu0 0.0
    %3721 = vmatprep.subr.mxu0 0.0
    %3722 = vmatpush1.msra.mxu0 0.0
    %3723 = vmatprep.subr.mxu0 0.0
    %3724 = vmatpush1.msra.mxu0 0.0
    %3725 = vmatprep.subr.mxu0 0.0
    %3726 = vmatpush1.msra.mxu0 0.0
    %3727 = vmatprep.subr.mxu0 0.0
    %3728 = vmatpush1.msra.mxu0 0.0
    %3729 = vmatprep.subr.mxu0 0.0
    %3730 = vmatpush1.msra.mxu0 0.0
    %3731 = vmatprep.subr.mxu0 0.0
    %3732 = vmatpush1.msra.mxu0 0.0
    %3733 = vmatprep.subr.mxu0 0.0
    %3734 = vmatpush1.msra.mxu0 0.0
    %3735 = vmatprep.subr.mxu0 0.0
    %3736 = vmatpush1.msra.mxu0 0.0
    %3737 = vmatprep.subr.mxu0 0.0
    %3738 = vmatpush1.msra.mxu0 0.0
    %3739 = vmatprep.subr.mxu0 0.0
    %3740 = vmatpush1.msra.mxu0 0.0
    %3741 = vmatprep.subr.mxu0 0.0
    %3742 = vmatpush1.msra.mxu0 %v73
    %3743 = vmatprep.subr.mxu0 0.0
    %3744 = vmatpush2.msra.mxu0 0.0
    %3745 = vmatprep.subr.mxu0 0.0
    %3746 = vmatpush2.msra.mxu0 0.0
    %3747 = vmatprep.subr.mxu0 0.0
    %3748 = vmatpush2.msra.mxu0 0.0
    %3749 = vmatprep.subr.mxu0 0.0
    %3750 = vmatpush2.msra.mxu0 0.0
    %3751 = vmatprep.subr.mxu0 0.0
    %3752 = vmatpush2.msra.mxu0 0.0
    %3753 = vmatprep.subr.mxu0 0.0
    %3754 = vmatpush2.msra.mxu0 0.0
    %3755 = vmatprep.subr.mxu0 0.0
    %3756 = vmatpush2.msra.mxu0 0.0
    %3757 = vmatprep.subr.mxu0 0.0
    %3758 = vmatpush2.msra.mxu0 0.0
    %3759 = vmatprep.subr.mxu0 0.0
    %3760 = vmatpush2.msra.mxu0 0.0
    %3761 = vmatprep.subr.mxu0 0.0
    %3762 = vmatpush2.msra.mxu0 0.0
    %3763 = vmatprep.subr.mxu0 0.0
    %3764 = vmatpush2.msra.mxu0 0.0
    %3765 = vmatprep.subr.mxu0 0.0
    %3766 = vmatpush2.msra.mxu0 0.0
    %3767 = vmatprep.subr.mxu0 0.0
    %3768 = vmatpush2.msra.mxu0 0.0
    %3769 = vmatprep.subr.mxu0 0.0
    %3770 = vmatpush2.msra.mxu0 0.0
    %3771 = vmatprep.subr.mxu0 0.0
    %3772 = vmatpush2.msra.mxu0 0.0
    %3773 = vmatprep.subr.mxu0 0.0
    %3774 = vmatpush2.msra.mxu0 0.0
    %3775 = vmatprep.mubr.f32.mxu0 0.0
    %3776 = vmatmul.mubr.f32.gmra.mxu0 %v3709
    %v3777 = vpop.f32.mrf.mxu0
    %v3778 = vadd.f32 0.0, %v3777
    %v3779 = vpop.f32.mrf.mxu0
    %3780 = vdwg.mxu0
    %v3782 = vsel %vm336, %v3556, 0
    %3784 = vmatprep.subr.mxu0 0.0
    %3785 = vmatpush1.msra.mxu0 0.0
    %3786 = vmatprep.subr.mxu0 0.0
    %3787 = vmatpush1.msra.mxu0 0.0
    %3788 = vmatprep.subr.mxu0 0.0
    %3789 = vmatpush1.msra.mxu0 0.0
    %3790 = vmatprep.subr.mxu0 0.0
    %3791 = vmatpush1.msra.mxu0 0.0
    %3792 = vmatprep.subr.mxu0 0.0
    %3793 = vmatpush1.msra.mxu0 0.0
    %3794 = vmatprep.subr.mxu0 0.0
    %3795 = vmatpush1.msra.mxu0 0.0
    %3796 = vmatprep.subr.mxu0 0.0
    %3797 = vmatpush1.msra.mxu0 0.0
    %3798 = vmatprep.subr.mxu0 0.0
    %3799 = vmatpush1.msra.mxu0 0.0
    %3800 = vmatprep.subr.mxu0 0.0
    %3801 = vmatpush1.msra.mxu0 0.0
    %3802 = vmatprep.subr.mxu0 0.0
    %3803 = vmatpush1.msra.mxu0 0.0
    %3804 = vmatprep.subr.mxu0 0.0
    %3805 = vmatpush1.msra.mxu0 0.0
    %3806 = vmatprep.subr.mxu0 0.0
    %3807 = vmatpush1.msra.mxu0 0.0
    %3808 = vmatprep.subr.mxu0 0.0
    %3809 = vmatpush1.msra.mxu0 0.0
    %3810 = vmatprep.subr.mxu0 0.0
    %3811 = vmatpush1.msra.mxu0 0.0
    %3812 = vmatprep.subr.mxu0 0.0
    %3813 = vmatpush1.msra.mxu0 0.0
    %3814 = vmatprep.subr.mxu0 0.0
    %3815 = vmatpush1.msra.mxu0 %v74
    %3816 = vmatprep.subr.mxu0 0.0
    %3817 = vmatpush2.msra.mxu0 0.0
    %3818 = vmatprep.subr.mxu0 0.0
    %3819 = vmatpush2.msra.mxu0 0.0
    %3820 = vmatprep.subr.mxu0 0.0
    %3821 = vmatpush2.msra.mxu0 0.0
    %3822 = vmatprep.subr.mxu0 0.0
    %3823 = vmatpush2.msra.mxu0 0.0
    %3824 = vmatprep.subr.mxu0 0.0
    %3825 = vmatpush2.msra.mxu0 0.0
    %3826 = vmatprep.subr.mxu0 0.0
    %3827 = vmatpush2.msra.mxu0 0.0
    %3828 = vmatprep.subr.mxu0 0.0
    %3829 = vmatpush2.msra.mxu0 0.0
    %3830 = vmatprep.subr.mxu0 0.0
    %3831 = vmatpush2.msra.mxu0 0.0
    %3832 = vmatprep.subr.mxu0 0.0
    %3833 = vmatpush2.msra.mxu0 0.0
    %3834 = vmatprep.subr.mxu0 0.0
    %3835 = vmatpush2.msra.mxu0 0.0
    %3836 = vmatprep.subr.mxu0 0.0
    %3837 = vmatpush2.msra.mxu0 0.0
    %3838 = vmatprep.subr.mxu0 0.0
    %3839 = vmatpush2.msra.mxu0 0.0
    %3840 = vmatprep.subr.mxu0 0.0
    %3841 = vmatpush2.msra.mxu0 0.0
    %3842 = vmatprep.subr.mxu0 0.0
    %3843 = vmatpush2.msra.mxu0 0.0
    %3844 = vmatprep.subr.mxu0 0.0
    %3845 = vmatpush2.msra.mxu0 0.0
    %3846 = vmatprep.subr.mxu0 0.0
    %3847 = vmatpush2.msra.mxu0 0.0
    %3848 = vmatprep.mubr.f32.mxu0 0.0
    %3849 = vmatmul.mubr.f32.gmra.mxu0 %v3782
    %v3850 = vpop.f32.mrf.mxu0
    %v3851 = vadd.f32 0.0, %v3850
    %v3852 = vpop.f32.mrf.mxu0
    %3853 = vdwg.mxu0
    %v3855 = vsel %vm336, %v3632, 0
    %3857 = vmatprep.subr.mxu0 0.0
    %3858 = vmatpush1.msra.mxu0 0.0
    %3859 = vmatprep.subr.mxu0 0.0
    %3860 = vmatpush1.msra.mxu0 0.0
    %3861 = vmatprep.subr.mxu0 0.0
    %3862 = vmatpush1.msra.mxu0 0.0
    %3863 = vmatprep.subr.mxu0 0.0
    %3864 = vmatpush1.msra.mxu0 0.0
    %3865 = vmatprep.subr.mxu0 0.0
    %3866 = vmatpush1.msra.mxu0 0.0
    %3867 = vmatprep.subr.mxu0 0.0
    %3868 = vmatpush1.msra.mxu0 0.0
    %3869 = vmatprep.subr.mxu0 0.0
    %3870 = vmatpush1.msra.mxu0 0.0
    %3871 = vmatprep.subr.mxu0 0.0
    %3872 = vmatpush1.msra.mxu0 0.0
    %3873 = vmatprep.subr.mxu0 0.0
    %3874 = vmatpush1.msra.mxu0 0.0
    %3875 = vmatprep.subr.mxu0 0.0
    %3876 = vmatpush1.msra.mxu0 0.0
    %3877 = vmatprep.subr.mxu0 0.0
    %3878 = vmatpush1.msra.mxu0 0.0
    %3879 = vmatprep.subr.mxu0 0.0
    %3880 = vmatpush1.msra.mxu0 0.0
    %3881 = vmatprep.subr.mxu0 0.0
    %3882 = vmatpush1.msra.mxu0 0.0
    %3883 = vmatprep.subr.mxu0 0.0
    %3884 = vmatpush1.msra.mxu0 0.0
    %3885 = vmatprep.subr.mxu0 0.0
    %3886 = vmatpush1.msra.mxu0 0.0
    %3887 = vmatprep.subr.mxu0 0.0
    %3888 = vmatpush1.msra.mxu0 %v75
    %3889 = vmatprep.subr.mxu0 0.0
    %3890 = vmatpush2.msra.mxu0 0.0
    %3891 = vmatprep.subr.mxu0 0.0
    %3892 = vmatpush2.msra.mxu0 0.0
    %3893 = vmatprep.subr.mxu0 0.0
    %3894 = vmatpush2.msra.mxu0 0.0
    %3895 = vmatprep.subr.mxu0 0.0
    %3896 = vmatpush2.msra.mxu0 0.0
    %3897 = vmatprep.subr.mxu0 0.0
    %3898 = vmatpush2.msra.mxu0 0.0
    %3899 = vmatprep.subr.mxu0 0.0
    %3900 = vmatpush2.msra.mxu0 0.0
    %3901 = vmatprep.subr.mxu0 0.0
    %3902 = vmatpush2.msra.mxu0 0.0
    %3903 = vmatprep.subr.mxu0 0.0
    %3904 = vmatpush2.msra.mxu0 0.0
    %3905 = vmatprep.subr.mxu0 0.0
    %3906 = vmatpush2.msra.mxu0 0.0
    %3907 = vmatprep.subr.mxu0 0.0
    %3908 = vmatpush2.msra.mxu0 0.0
    %3909 = vmatprep.subr.mxu0 0.0
    %3910 = vmatpush2.msra.mxu0 0.0
    %3911 = vmatprep.subr.mxu0 0.0
    %3912 = vmatpush2.msra.mxu0 0.0
    %3913 = vmatprep.subr.mxu0 0.0
    %3914 = vmatpush2.msra.mxu0 0.0
    %3915 = vmatprep.subr.mxu0 0.0
    %3916 = vmatpush2.msra.mxu0 0.0
    %3917 = vmatprep.subr.mxu0 0.0
    %3918 = vmatpush2.msra.mxu0 0.0
    %3919 = vmatprep.subr.mxu0 0.0
    %3920 = vmatpush2.msra.mxu0 0.0
    %3921 = vmatprep.mubr.f32.mxu0 0.0
    %3922 = vmatmul.mubr.f32.gmra.mxu0 %v3855
    %v3923 = vpop.f32.mrf.mxu0
    %v3924 = vadd.f32 0.0, %v3923
    %v3925 = vpop.f32.mrf.mxu0
    %3926 = vdwg.mxu0
    %v3927 = vsel %vm91, %v3705, 0.0
    %v3928 = vsel %vm91, %v3778, 0.0
    %v3929 = vadd.f32 %v3927, %v3928
    %v3930 = vsel %vm91, %v3851, 0.0
    %v3931 = vadd.f32 %v3929, %v3930
    %v3932 = vsel %vm91, %v3924, 0.0
    %v3933 = vadd.f32 %v3931, %v3932
    %v3934 = vadd.f32 %v2760, %v3933
    %v3935 = vsel %vm91, %v3934, 0.0
    %3936 = vadd.xlane.f32.xlu0 %v3935
    %v3937 = vpop.xlane.xlu0 %3936
    %v3938 = vmul.f32 %v3937, %v95
    %v3939 = vsub.f32 %v3934, %v3938
    %v3940 = vmul.f32 %v3939, %v3939
    %v3941 = vsel %vm91, %v3940, 0.0
    %3942 = vadd.xlane.f32.xlu0 %v3941
    %v3943 = vpop.xlane.xlu0 %3942
    %v3944 = vmul.f32 %v3943, %v95
    %v3945 = vadd.f32 %v3944, 1e-05
    %v3946 = vrsqrt.pop %v3945
    %v3947 = vmul.f32 %v3939, %v3946
    %v3948 = vmul.f32 %v3947, %v1289
    %v3949 = vadd.f32 %v3948, %v1294
    %v3951 = vsel %vm91, %v3949, 0
    %3953 = vmatprep.subr.mxu0 0.0
    %3954 = vmatpush1.msra.mxu0 0.0
    %3955 = vmatprep.subr.mxu0 0.0
    %3956 = vmatpush1.msra.mxu0 0.0
    %3957 = vmatprep.subr.mxu0 0.0
    %3958 = vmatpush1.msra.mxu0 0.0
    %3959 = vmatprep.subr.mxu0 0.0
    %3960 = vmatpush1.msra.mxu0 0.0
    %3961 = vmatprep.subr.mxu0 0.0
    %3962 = vmatpush1.msra.mxu0 0.0
    %3963 = vmatprep.subr.mxu0 0.0
    %3964 = vmatpush1.msra.mxu0 0.0
    %3965 = vmatprep.subr.mxu0 0.0
    %3966 = vmatpush1.msra.mxu0 0.0
    %3967 = vmatprep.subr.mxu0 0.0
    %3968 = vmatpush1.msra.mxu0 0.0
    %3969 = vmatprep.subr.mxu0 0.0
    %3970 = vmatpush1.msra.mxu0 0.0
    %3971 = vmatprep.subr.mxu0 0.0
    %3972 = vmatpush1.msra.mxu0 0.0
    %3973 = vmatprep.subr.mxu0 0.0
    %3974 = vmatpush1.msra.mxu0 0.0
    %3975 = vmatprep.subr.mxu0 0.0
    %3976 = vmatpush1.msra.mxu0 0.0
    %3977 = vmatprep.subr.mxu0 0.0
    %3978 = vmatpush1.msra.mxu0 %v1307
    %3979 = vmatprep.subr.mxu0 0.0
    %3980 = vmatpush1.msra.mxu0 %v1305
    %3981 = vmatprep.subr.mxu0 0.0
    %3982 = vmatpush1.msra.mxu0 %v1303
    %3983 = vmatprep.subr.mxu0 0.0
    %3984 = vmatpush1.msra.mxu0 %v1301
    %3985 = vmatprep.subr.mxu0 0.0
    %3986 = vmatpush2.msra.mxu0 0.0
    %3987 = vmatprep.subr.mxu0 0.0
    %3988 = vmatpush2.msra.mxu0 0.0
    %3989 = vmatprep.subr.mxu0 0.0
    %3990 = vmatpush2.msra.mxu0 0.0
    %3991 = vmatprep.subr.mxu0 0.0
    %3992 = vmatpush2.msra.mxu0 0.0
    %3993 = vmatprep.subr.mxu0 0.0
    %3994 = vmatpush2.msra.mxu0 0.0
    %3995 = vmatprep.subr.mxu0 0.0
    %3996 = vmatpush2.msra.mxu0 0.0
    %3997 = vmatprep.subr.mxu0 0.0
    %3998 = vmatpush2.msra.mxu0 0.0
    %3999 = vmatprep.subr.mxu0 0.0
    %4000 = vmatpush2.msra.mxu0 0.0
    %4001 = vmatprep.subr.mxu0 0.0
    %4002 = vmatpush2.msra.mxu0 0.0
    %4003 = vmatprep.subr.mxu0 0.0
    %4004 = vmatpush2.msra.mxu0 0.0
    %4005 = vmatprep.subr.mxu0 0.0
    %4006 = vmatpush2.msra.mxu0 0.0
    %4007 = vmatprep.subr.mxu0 0.0
    %4008 = vmatpush2.msra.mxu0 0.0
    %4009 = vmatprep.subr.mxu0 0.0
    %4010 = vmatpush2.msra.mxu0 0.0
    %4011 = vmatprep.subr.mxu0 0.0
    %4012 = vmatpush2.msra.mxu0 0.0
    %4013 = vmatprep.subr.mxu0 0.0
    %4014 = vmatpush2.msra.mxu0 0.0
    %4015 = vmatprep.subr.mxu0 0.0
    %4016 = vmatpush2.msra.mxu0 0.0
    %4017 = vmatprep.mubr.f32.mxu0 0.0
    %4018 = vmatmul.mubr.f32.gmra.mxu0 %v3951
    %v4019 = vpop.f32.mrf.mxu0
    %v4020 = vadd.f32 0.0, %v4019
    %v4021 = vpop.f32.mrf.mxu0
    %4022 = vdwg.mxu0
    %v4024 = vsel %vm91, %v2762, 0
    %v4027 = vsel %vm91, %v2763, 0
    %4029 = vmatprep.subr.mxu0 0.0
    %4030 = vmatpush1.msra.mxu0 0.0
    %4031 = vmatprep.subr.mxu0 0.0
    %4032 = vmatpush1.msra.mxu0 0.0
    %4033 = vmatprep.subr.mxu0 0.0
    %4034 = vmatpush1.msra.mxu0 0.0
    %4035 = vmatprep.subr.mxu0 0.0
    %4036 = vmatpush1.msra.mxu0 0.0
    %4037 = vmatprep.subr.mxu0 0.0
    %4038 = vmatpush1.msra.mxu0 0.0
    %4039 = vmatprep.subr.mxu0 0.0
    %4040 = vmatpush1.msra.mxu0 0.0
    %4041 = vmatprep.subr.mxu0 0.0
    %4042 = vmatpush1.msra.mxu0 0.0
    %4043 = vmatprep.subr.mxu0 0.0
    %4044 = vmatpush1.msra.mxu0 0.0
    %4045 = vmatprep.subr.mxu0 0.0
    %4046 = vmatpush1.msra.mxu0 0.0
    %4047 = vmatprep.subr.mxu0 0.0
    %4048 = vmatpush1.msra.mxu0 0.0
    %4049 = vmatprep.subr.mxu0 0.0
    %4050 = vmatpush1.msra.mxu0 0.0
    %4051 = vmatprep.subr.mxu0 0.0
    %4052 = vmatpush1.msra.mxu0 0.0
    %4053 = vmatprep.subr.mxu0 0.0
    %4054 = vmatpush1.msra.mxu0 %v71
    %4055 = vmatprep.subr.mxu0 0.0
    %4056 = vmatpush1.msra.mxu0 %v69
    %4057 = vmatprep.subr.mxu0 0.0
    %4058 = vmatpush1.msra.mxu0 %v67
    %4059 = vmatprep.subr.mxu0 0.0
    %4060 = vmatpush1.msra.mxu0 %v65
    %4061 = vmatprep.subr.mxu0 0.0
    %4062 = vmatpush2.msra.mxu0 0.0
    %4063 = vmatprep.subr.mxu0 0.0
    %4064 = vmatpush2.msra.mxu0 0.0
    %4065 = vmatprep.subr.mxu0 0.0
    %4066 = vmatpush2.msra.mxu0 0.0
    %4067 = vmatprep.subr.mxu0 0.0
    %4068 = vmatpush2.msra.mxu0 0.0
    %4069 = vmatprep.subr.mxu0 0.0
    %4070 = vmatpush2.msra.mxu0 0.0
    %4071 = vmatprep.subr.mxu0 0.0
    %4072 = vmatpush2.msra.mxu0 0.0
    %4073 = vmatprep.subr.mxu0 0.0
    %4074 = vmatpush2.msra.mxu0 0.0
    %4075 = vmatprep.subr.mxu0 0.0
    %4076 = vmatpush2.msra.mxu0 0.0
    %4077 = vmatprep.subr.mxu0 0.0
    %4078 = vmatpush2.msra.mxu0 0.0
    %4079 = vmatprep.subr.mxu0 0.0
    %4080 = vmatpush2.msra.mxu0 0.0
    %4081 = vmatprep.subr.mxu0 0.0
    %4082 = vmatpush2.msra.mxu0 0.0
    %4083 = vmatprep.subr.mxu0 0.0
    %4084 = vmatpush2.msra.mxu0 0.0
    %4085 = vmatprep.subr.mxu0 0.0
    %4086 = vmatpush2.msra.mxu0 0.0
    %4087 = vmatprep.subr.mxu0 0.0
    %4088 = vmatpush2.msra.mxu0 0.0
    %4089 = vmatprep.subr.mxu0 0.0
    %4090 = vmatpush2.msra.mxu0 0.0
    %4091 = vmatprep.subr.mxu0 0.0
    %4092 = vmatpush2.msra.mxu0 0.0
    %4093 = vmatprep.mubr.f32.mxu0 0.0
    %4094 = vmatmul.mubr.f32.gmra.mxu0 %v4024
    %v4095 = vpop.f32.mrf.mxu0
    %v4096 = vadd.f32 0.0, %v4095
    %v4097 = vpop.f32.mrf.mxu0
    %4098 = vmatprep.mubr.f32.mxu0 0.0
    %4099 = vmatmul.mubr.f32.gmra.mxu0 %v4027
    %v4100 = vpop.f32.mrf.mxu0
    %v4101 = vadd.f32 0.0, %v4100
    %v4102 = vpop.f32.mrf.mxu0
    %4103 = vdwg.mxu0
    %4105 = vrot.lane.b32.xlu0 %v4020, 120
    %v4106 = vpop.permute.xlu0 %4105
    %4107 = vrot.lane.b32.xlu0 %v4020, 112
    %v4108 = vpop.permute.xlu0 %4107
    %4109 = vrot.lane.b32.xlu0 %v4020, 104
    %v4110 = vpop.permute.xlu0 %4109
    %4113 = vrot.lane.b32.xlu0 %v4096, 120
    %v4114 = vpop.permute.xlu0 %4113
    %4115 = vrot.lane.b32.xlu0 %v4101, 120
    %v4116 = vpop.permute.xlu0 %4115
    %4119 = vrot.lane.b32.xlu0 %v4096, 112
    %v4120 = vpop.permute.xlu0 %4119
    %4121 = vrot.lane.b32.xlu0 %v4101, 112
    %v4122 = vpop.permute.xlu0 %4121
    %4125 = vrot.lane.b32.xlu0 %v4096, 104
    %v4126 = vpop.permute.xlu0 %4125
    %4127 = vrot.lane.b32.xlu0 %v4101, 104
    %v4128 = vpop.permute.xlu0 %4127
    %4131 = vxpose.xlu0.b32.start [1/16] %v4096, 128
    %4132 = vxpose.xlu0.b32.cont [2/16] %v4101, 128
    %4133 = vxpose.xlu0.b32.cont [3/16] 0.0, 128
    %4134 = vxpose.xlu0.b32.cont [4/16] 0.0, 128
    %4135 = vxpose.xlu0.b32.cont [5/16] 0.0, 128
    %4136 = vxpose.xlu0.b32.cont [6/16] 0.0, 128
    %4137 = vxpose.xlu0.b32.cont [7/16] 0.0, 128
    %4138 = vxpose.xlu0.b32.cont [8/16] 0.0, 128
    %4139 = vxpose.xlu0.b32.cont [9/16] 0.0, 128
    %4140 = vxpose.xlu0.b32.cont [10/16] 0.0, 128
    %4141 = vxpose.xlu0.b32.cont [11/16] 0.0, 128
    %4142 = vxpose.xlu0.b32.cont [12/16] 0.0, 128
    %4143 = vxpose.xlu0.b32.cont [13/16] 0.0, 128
    %4144 = vxpose.xlu0.b32.cont [14/16] 0.0, 128
    %4145 = vxpose.xlu0.b32.cont [15/16] 0.0, 128
    %4146 = vxpose.xlu0.b32.end [16/16] 0.0, 128
    %v4147 = vpop.trf.xlu0
    %v4148 = vpop.trf.xlu0
    %v4149 = vpop.trf.xlu0
    %v4150 = vpop.trf.xlu0
    %v4151 = vpop.trf.xlu0
    %v4152 = vpop.trf.xlu0
    %v4153 = vpop.trf.xlu0
    %v4154 = vpop.trf.xlu0
    %v4155 = vpop.trf.xlu0
    %v4156 = vpop.trf.xlu0
    %v4157 = vpop.trf.xlu0
    %v4158 = vpop.trf.xlu0
    %v4159 = vpop.trf.xlu0
    %v4160 = vpop.trf.xlu0
    %v4161 = vpop.trf.xlu0
    %v4162 = vpop.trf.xlu0
    %4163 = vxpose.xlu0.b32.start [1/16] %v4114, 128
    %4164 = vxpose.xlu0.b32.cont [2/16] %v4116, 128
    %4165 = vxpose.xlu0.b32.cont [3/16] 0.0, 128
    %4166 = vxpose.xlu0.b32.cont [4/16] 0.0, 128
    %4167 = vxpose.xlu0.b32.cont [5/16] 0.0, 128
    %4168 = vxpose.xlu0.b32.cont [6/16] 0.0, 128
    %4169 = vxpose.xlu0.b32.cont [7/16] 0.0, 128
    %4170 = vxpose.xlu0.b32.cont [8/16] 0.0, 128
    %4171 = vxpose.xlu0.b32.cont [9/16] 0.0, 128
    %4172 = vxpose.xlu0.b32.cont [10/16] 0.0, 128
    %4173 = vxpose.xlu0.b32.cont [11/16] 0.0, 128
    %4174 = vxpose.xlu0.b32.cont [12/16] 0.0, 128
    %4175 = vxpose.xlu0.b32.cont [13/16] 0.0, 128
    %4176 = vxpose.xlu0.b32.cont [14/16] 0.0, 128
    %4177 = vxpose.xlu0.b32.cont [15/16] 0.0, 128
    %4178 = vxpose.xlu0.b32.end [16/16] 0.0, 128
    %v4179 = vpop.trf.xlu0
    %v4180 = vpop.trf.xlu0
    %v4181 = vpop.trf.xlu0
    %v4182 = vpop.trf.xlu0
    %v4183 = vpop.trf.xlu0
    %v4184 = vpop.trf.xlu0
    %v4185 = vpop.trf.xlu0
    %v4186 = vpop.trf.xlu0
    %v4187 = vpop.trf.xlu0
    %v4188 = vpop.trf.xlu0
    %v4189 = vpop.trf.xlu0
    %v4190 = vpop.trf.xlu0
    %v4191 = vpop.trf.xlu0
    %v4192 = vpop.trf.xlu0
    %v4193 = vpop.trf.xlu0
    %v4194 = vpop.trf.xlu0
    %4195 = vxpose.xlu0.b32.start [1/16] %v4120, 128
    %4196 = vxpose.xlu0.b32.cont [2/16] %v4122, 128
    %4197 = vxpose.xlu0.b32.cont [3/16] 0.0, 128
    %4198 = vxpose.xlu0.b32.cont [4/16] 0.0, 128
    %4199 = vxpose.xlu0.b32.cont [5/16] 0.0, 128
    %4200 = vxpose.xlu0.b32.cont [6/16] 0.0, 128
    %4201 = vxpose.xlu0.b32.cont [7/16] 0.0, 128
    %4202 = vxpose.xlu0.b32.cont [8/16] 0.0, 128
    %4203 = vxpose.xlu0.b32.cont [9/16] 0.0, 128
    %4204 = vxpose.xlu0.b32.cont [10/16] 0.0, 128
    %4205 = vxpose.xlu0.b32.cont [11/16] 0.0, 128
    %4206 = vxpose.xlu0.b32.cont [12/16] 0.0, 128
    %4207 = vxpose.xlu0.b32.cont [13/16] 0.0, 128
    %4208 = vxpose.xlu0.b32.cont [14/16] 0.0, 128
    %4209 = vxpose.xlu0.b32.cont [15/16] 0.0, 128
    %4210 = vxpose.xlu0.b32.end [16/16] 0.0, 128
    %v4211 = vpop.trf.xlu0
    %v4212 = vpop.trf.xlu0
    %v4213 = vpop.trf.xlu0
    %v4214 = vpop.trf.xlu0
    %v4215 = vpop.trf.xlu0
    %v4216 = vpop.trf.xlu0
    %v4217 = vpop.trf.xlu0
    %v4218 = vpop.trf.xlu0
    %v4219 = vpop.trf.xlu0
    %v4220 = vpop.trf.xlu0
    %v4221 = vpop.trf.xlu0
    %v4222 = vpop.trf.xlu0
    %v4223 = vpop.trf.xlu0
    %v4224 = vpop.trf.xlu0
    %v4225 = vpop.trf.xlu0
    %v4226 = vpop.trf.xlu0
    %4227 = vxpose.xlu0.b32.start [1/16] %v4126, 128
    %4228 = vxpose.xlu0.b32.cont [2/16] %v4128, 128
    %4229 = vxpose.xlu0.b32.cont [3/16] 0.0, 128
    %4230 = vxpose.xlu0.b32.cont [4/16] 0.0, 128
    %4231 = vxpose.xlu0.b32.cont [5/16] 0.0, 128
    %4232 = vxpose.xlu0.b32.cont [6/16] 0.0, 128
    %4233 = vxpose.xlu0.b32.cont [7/16] 0.0, 128
    %4234 = vxpose.xlu0.b32.cont [8/16] 0.0, 128
    %4235 = vxpose.xlu0.b32.cont [9/16] 0.0, 128
    %4236 = vxpose.xlu0.b32.cont [10/16] 0.0, 128
    %4237 = vxpose.xlu0.b32.cont [11/16] 0.0, 128
    %4238 = vxpose.xlu0.b32.cont [12/16] 0.0, 128
    %4239 = vxpose.xlu0.b32.cont [13/16] 0.0, 128
    %4240 = vxpose.xlu0.b32.cont [14/16] 0.0, 128
    %4241 = vxpose.xlu0.b32.cont [15/16] 0.0, 128
    %4242 = vxpose.xlu0.b32.end [16/16] 0.0, 128
    %v4243 = vpop.trf.xlu0
    %v4244 = vpop.trf.xlu0
    %v4245 = vpop.trf.xlu0
    %v4246 = vpop.trf.xlu0
    %v4247 = vpop.trf.xlu0
    %v4248 = vpop.trf.xlu0
    %v4249 = vpop.trf.xlu0
    %v4250 = vpop.trf.xlu0
    %v4251 = vpop.trf.xlu0
    %v4252 = vpop.trf.xlu0
    %v4253 = vpop.trf.xlu0
    %v4254 = vpop.trf.xlu0
    %v4255 = vpop.trf.xlu0
    %v4256 = vpop.trf.xlu0
    %v4257 = vpop.trf.xlu0
    %v4258 = vpop.trf.xlu0
    %v4259 = vsel %vm336, %v4020, 0
    %4261 = vmatprep.subr.mxu0 0.0
    %4262 = vmatpush1.msra.mxu0 0.0
    %4263 = vmatprep.subr.mxu0 0.0
    %4264 = vmatpush1.msra.mxu0 0.0
    %4265 = vmatprep.subr.mxu0 0.0
    %4266 = vmatpush1.msra.mxu0 0.0
    %4267 = vmatprep.subr.mxu0 0.0
    %4268 = vmatpush1.msra.mxu0 0.0
    %4269 = vmatprep.subr.mxu0 0.0
    %4270 = vmatpush1.msra.mxu0 0.0
    %4271 = vmatprep.subr.mxu0 0.0
    %4272 = vmatpush1.msra.mxu0 0.0
    %4273 = vmatprep.subr.mxu0 0.0
    %4274 = vmatpush1.msra.mxu0 0.0
    %4275 = vmatprep.subr.mxu0 0.0
    %4276 = vmatpush1.msra.mxu0 0.0
    %4277 = vmatprep.subr.mxu0 0.0
    %4278 = vmatpush1.msra.mxu0 0.0
    %4279 = vmatprep.subr.mxu0 0.0
    %4280 = vmatpush1.msra.mxu0 0.0
    %4281 = vmatprep.subr.mxu0 0.0
    %4282 = vmatpush1.msra.mxu0 0.0
    %4283 = vmatprep.subr.mxu0 0.0
    %4284 = vmatpush1.msra.mxu0 0.0
    %4285 = vmatprep.subr.mxu0 0.0
    %4286 = vmatpush1.msra.mxu0 0.0
    %4287 = vmatprep.subr.mxu0 0.0
    %4288 = vmatpush1.msra.mxu0 0.0
    %4289 = vmatprep.subr.mxu0 0.0
    %4290 = vmatpush1.msra.mxu0 0.0
    %4291 = vmatprep.subr.mxu0 0.0
    %4292 = vmatpush1.msra.mxu0 %v4147
    %4293 = vmatprep.subr.mxu0 0.0
    %4294 = vmatpush2.msra.mxu0 0.0
    %4295 = vmatprep.subr.mxu0 0.0
    %4296 = vmatpush2.msra.mxu0 0.0
    %4297 = vmatprep.subr.mxu0 0.0
    %4298 = vmatpush2.msra.mxu0 0.0
    %4299 = vmatprep.subr.mxu0 0.0
    %4300 = vmatpush2.msra.mxu0 0.0
    %4301 = vmatprep.subr.mxu0 0.0
    %4302 = vmatpush2.msra.mxu0 0.0
    %4303 = vmatprep.subr.mxu0 0.0
    %4304 = vmatpush2.msra.mxu0 0.0
    %4305 = vmatprep.subr.mxu0 0.0
    %4306 = vmatpush2.msra.mxu0 0.0
    %4307 = vmatprep.subr.mxu0 0.0
    %4308 = vmatpush2.msra.mxu0 0.0
    %4309 = vmatprep.subr.mxu0 0.0
    %4310 = vmatpush2.msra.mxu0 0.0
    %4311 = vmatprep.subr.mxu0 0.0
    %4312 = vmatpush2.msra.mxu0 0.0
    %4313 = vmatprep.subr.mxu0 0.0
    %4314 = vmatpush2.msra.mxu0 0.0
    %4315 = vmatprep.subr.mxu0 0.0
    %4316 = vmatpush2.msra.mxu0 0.0
    %4317 = vmatprep.subr.mxu0 0.0
    %4318 = vmatpush2.msra.mxu0 0.0
    %4319 = vmatprep.subr.mxu0 0.0
    %4320 = vmatpush2.msra.mxu0 0.0
    %4321 = vmatprep.subr.mxu0 0.0
    %4322 = vmatpush2.msra.mxu0 0.0
    %4323 = vmatprep.subr.mxu0 0.0
    %4324 = vmatpush2.msra.mxu0 0.0
    %4325 = vmatprep.mubr.f32.mxu0 0.0
    %4326 = vmatmul.mubr.f32.gmra.mxu0 %v4259
    %v4327 = vpop.f32.mrf.mxu0
    %v4328 = vadd.f32 0.0, %v4327
    %v4329 = vpop.f32.mrf.mxu0
    %4330 = vdwg.mxu0
    %v4331 = vsel %vm336, %v4106, 0
    %4333 = vmatprep.subr.mxu0 0.0
    %4334 = vmatpush1.msra.mxu0 0.0
    %4335 = vmatprep.subr.mxu0 0.0
    %4336 = vmatpush1.msra.mxu0 0.0
    %4337 = vmatprep.subr.mxu0 0.0
    %4338 = vmatpush1.msra.mxu0 0.0
    %4339 = vmatprep.subr.mxu0 0.0
    %4340 = vmatpush1.msra.mxu0 0.0
    %4341 = vmatprep.subr.mxu0 0.0
    %4342 = vmatpush1.msra.mxu0 0.0
    %4343 = vmatprep.subr.mxu0 0.0
    %4344 = vmatpush1.msra.mxu0 0.0
    %4345 = vmatprep.subr.mxu0 0.0
    %4346 = vmatpush1.msra.mxu0 0.0
    %4347 = vmatprep.subr.mxu0 0.0
    %4348 = vmatpush1.msra.mxu0 0.0
    %4349 = vmatprep.subr.mxu0 0.0
    %4350 = vmatpush1.msra.mxu0 0.0
    %4351 = vmatprep.subr.mxu0 0.0
    %4352 = vmatpush1.msra.mxu0 0.0
    %4353 = vmatprep.subr.mxu0 0.0
    %4354 = vmatpush1.msra.mxu0 0.0
    %4355 = vmatprep.subr.mxu0 0.0
    %4356 = vmatpush1.msra.mxu0 0.0
    %4357 = vmatprep.subr.mxu0 0.0
    %4358 = vmatpush1.msra.mxu0 0.0
    %4359 = vmatprep.subr.mxu0 0.0
    %4360 = vmatpush1.msra.mxu0 0.0
    %4361 = vmatprep.subr.mxu0 0.0
    %4362 = vmatpush1.msra.mxu0 0.0
    %4363 = vmatprep.subr.mxu0 0.0
    %4364 = vmatpush1.msra.mxu0 %v4179
    %4365 = vmatprep.subr.mxu0 0.0
    %4366 = vmatpush2.msra.mxu0 0.0
    %4367 = vmatprep.subr.mxu0 0.0
    %4368 = vmatpush2.msra.mxu0 0.0
    %4369 = vmatprep.subr.mxu0 0.0
    %4370 = vmatpush2.msra.mxu0 0.0
    %4371 = vmatprep.subr.mxu0 0.0
    %4372 = vmatpush2.msra.mxu0 0.0
    %4373 = vmatprep.subr.mxu0 0.0
    %4374 = vmatpush2.msra.mxu0 0.0
    %4375 = vmatprep.subr.mxu0 0.0
    %4376 = vmatpush2.msra.mxu0 0.0
    %4377 = vmatprep.subr.mxu0 0.0
    %4378 = vmatpush2.msra.mxu0 0.0
    %4379 = vmatprep.subr.mxu0 0.0
    %4380 = vmatpush2.msra.mxu0 0.0
    %4381 = vmatprep.subr.mxu0 0.0
    %4382 = vmatpush2.msra.mxu0 0.0
    %4383 = vmatprep.subr.mxu0 0.0
    %4384 = vmatpush2.msra.mxu0 0.0
    %4385 = vmatprep.subr.mxu0 0.0
    %4386 = vmatpush2.msra.mxu0 0.0
    %4387 = vmatprep.subr.mxu0 0.0
    %4388 = vmatpush2.msra.mxu0 0.0
    %4389 = vmatprep.subr.mxu0 0.0
    %4390 = vmatpush2.msra.mxu0 0.0
    %4391 = vmatprep.subr.mxu0 0.0
    %4392 = vmatpush2.msra.mxu0 0.0
    %4393 = vmatprep.subr.mxu0 0.0
    %4394 = vmatpush2.msra.mxu0 0.0
    %4395 = vmatprep.subr.mxu0 0.0
    %4396 = vmatpush2.msra.mxu0 0.0
    %4397 = vmatprep.mubr.f32.mxu0 0.0
    %4398 = vmatmul.mubr.f32.gmra.mxu0 %v4331
    %v4399 = vpop.f32.mrf.mxu0
    %v4400 = vadd.f32 0.0, %v4399
    %v4401 = vpop.f32.mrf.mxu0
    %4402 = vdwg.mxu0
    %v4403 = vsel %vm336, %v4108, 0
    %4405 = vmatprep.subr.mxu0 0.0
    %4406 = vmatpush1.msra.mxu0 0.0
    %4407 = vmatprep.subr.mxu0 0.0
    %4408 = vmatpush1.msra.mxu0 0.0
    %4409 = vmatprep.subr.mxu0 0.0
    %4410 = vmatpush1.msra.mxu0 0.0
    %4411 = vmatprep.subr.mxu0 0.0
    %4412 = vmatpush1.msra.mxu0 0.0
    %4413 = vmatprep.subr.mxu0 0.0
    %4414 = vmatpush1.msra.mxu0 0.0
    %4415 = vmatprep.subr.mxu0 0.0
    %4416 = vmatpush1.msra.mxu0 0.0
    %4417 = vmatprep.subr.mxu0 0.0
    %4418 = vmatpush1.msra.mxu0 0.0
    %4419 = vmatprep.subr.mxu0 0.0
    %4420 = vmatpush1.msra.mxu0 0.0
    %4421 = vmatprep.subr.mxu0 0.0
    %4422 = vmatpush1.msra.mxu0 0.0
    %4423 = vmatprep.subr.mxu0 0.0
    %4424 = vmatpush1.msra.mxu0 0.0
    %4425 = vmatprep.subr.mxu0 0.0
    %4426 = vmatpush1.msra.mxu0 0.0
    %4427 = vmatprep.subr.mxu0 0.0
    %4428 = vmatpush1.msra.mxu0 0.0
    %4429 = vmatprep.subr.mxu0 0.0
    %4430 = vmatpush1.msra.mxu0 0.0
    %4431 = vmatprep.subr.mxu0 0.0
    %4432 = vmatpush1.msra.mxu0 0.0
    %4433 = vmatprep.subr.mxu0 0.0
    %4434 = vmatpush1.msra.mxu0 0.0
    %4435 = vmatprep.subr.mxu0 0.0
    %4436 = vmatpush1.msra.mxu0 %v4211
    %4437 = vmatprep.subr.mxu0 0.0
    %4438 = vmatpush2.msra.mxu0 0.0
    %4439 = vmatprep.subr.mxu0 0.0
    %4440 = vmatpush2.msra.mxu0 0.0
    %4441 = vmatprep.subr.mxu0 0.0
    %4442 = vmatpush2.msra.mxu0 0.0
    %4443 = vmatprep.subr.mxu0 0.0
    %4444 = vmatpush2.msra.mxu0 0.0
    %4445 = vmatprep.subr.mxu0 0.0
    %4446 = vmatpush2.msra.mxu0 0.0
    %4447 = vmatprep.subr.mxu0 0.0
    %4448 = vmatpush2.msra.mxu0 0.0
    %4449 = vmatprep.subr.mxu0 0.0
    %4450 = vmatpush2.msra.mxu0 0.0
    %4451 = vmatprep.subr.mxu0 0.0
    %4452 = vmatpush2.msra.mxu0 0.0
    %4453 = vmatprep.subr.mxu0 0.0
    %4454 = vmatpush2.msra.mxu0 0.0
    %4455 = vmatprep.subr.mxu0 0.0
    %4456 = vmatpush2.msra.mxu0 0.0
    %4457 = vmatprep.subr.mxu0 0.0
    %4458 = vmatpush2.msra.mxu0 0.0
    %4459 = vmatprep.subr.mxu0 0.0
    %4460 = vmatpush2.msra.mxu0 0.0
    %4461 = vmatprep.subr.mxu0 0.0
    %4462 = vmatpush2.msra.mxu0 0.0
    %4463 = vmatprep.subr.mxu0 0.0
    %4464 = vmatpush2.msra.mxu0 0.0
    %4465 = vmatprep.subr.mxu0 0.0
    %4466 = vmatpush2.msra.mxu0 0.0
    %4467 = vmatprep.subr.mxu0 0.0
    %4468 = vmatpush2.msra.mxu0 0.0
    %4469 = vmatprep.mubr.f32.mxu0 0.0
    %4470 = vmatmul.mubr.f32.gmra.mxu0 %v4403
    %v4471 = vpop.f32.mrf.mxu0
    %v4472 = vadd.f32 0.0, %v4471
    %v4473 = vpop.f32.mrf.mxu0
    %4474 = vdwg.mxu0
    %v4475 = vsel %vm336, %v4110, 0
    %4477 = vmatprep.subr.mxu0 0.0
    %4478 = vmatpush1.msra.mxu0 0.0
    %4479 = vmatprep.subr.mxu0 0.0
    %4480 = vmatpush1.msra.mxu0 0.0
    %4481 = vmatprep.subr.mxu0 0.0
    %4482 = vmatpush1.msra.mxu0 0.0
    %4483 = vmatprep.subr.mxu0 0.0
    %4484 = vmatpush1.msra.mxu0 0.0
    %4485 = vmatprep.subr.mxu0 0.0
    %4486 = vmatpush1.msra.mxu0 0.0
    %4487 = vmatprep.subr.mxu0 0.0
    %4488 = vmatpush1.msra.mxu0 0.0
    %4489 = vmatprep.subr.mxu0 0.0
    %4490 = vmatpush1.msra.mxu0 0.0
    %4491 = vmatprep.subr.mxu0 0.0
    %4492 = vmatpush1.msra.mxu0 0.0
    %4493 = vmatprep.subr.mxu0 0.0
    %4494 = vmatpush1.msra.mxu0 0.0
    %4495 = vmatprep.subr.mxu0 0.0
    %4496 = vmatpush1.msra.mxu0 0.0
    %4497 = vmatprep.subr.mxu0 0.0
    %4498 = vmatpush1.msra.mxu0 0.0
    %4499 = vmatprep.subr.mxu0 0.0
    %4500 = vmatpush1.msra.mxu0 0.0
    %4501 = vmatprep.subr.mxu0 0.0
    %4502 = vmatpush1.msra.mxu0 0.0
    %4503 = vmatprep.subr.mxu0 0.0
    %4504 = vmatpush1.msra.mxu0 0.0
    %4505 = vmatprep.subr.mxu0 0.0
    %4506 = vmatpush1.msra.mxu0 0.0
    %4507 = vmatprep.subr.mxu0 0.0
    %4508 = vmatpush1.msra.mxu0 %v4243
    %4509 = vmatprep.subr.mxu0 0.0
    %4510 = vmatpush2.msra.mxu0 0.0
    %4511 = vmatprep.subr.mxu0 0.0
    %4512 = vmatpush2.msra.mxu0 0.0
    %4513 = vmatprep.subr.mxu0 0.0
    %4514 = vmatpush2.msra.mxu0 0.0
    %4515 = vmatprep.subr.mxu0 0.0
    %4516 = vmatpush2.msra.mxu0 0.0
    %4517 = vmatprep.subr.mxu0 0.0
    %4518 = vmatpush2.msra.mxu0 0.0
    %4519 = vmatprep.subr.mxu0 0.0
    %4520 = vmatpush2.msra.mxu0 0.0
    %4521 = vmatprep.subr.mxu0 0.0
    %4522 = vmatpush2.msra.mxu0 0.0
    %4523 = vmatprep.subr.mxu0 0.0
    %4524 = vmatpush2.msra.mxu0 0.0
    %4525 = vmatprep.subr.mxu0 0.0
    %4526 = vmatpush2.msra.mxu0 0.0
    %4527 = vmatprep.subr.mxu0 0.0
    %4528 = vmatpush2.msra.mxu0 0.0
    %4529 = vmatprep.subr.mxu0 0.0
    %4530 = vmatpush2.msra.mxu0 0.0
    %4531 = vmatprep.subr.mxu0 0.0
    %4532 = vmatpush2.msra.mxu0 0.0
    %4533 = vmatprep.subr.mxu0 0.0
    %4534 = vmatpush2.msra.mxu0 0.0
    %4535 = vmatprep.subr.mxu0 0.0
    %4536 = vmatpush2.msra.mxu0 0.0
    %4537 = vmatprep.subr.mxu0 0.0
    %4538 = vmatpush2.msra.mxu0 0.0
    %4539 = vmatprep.subr.mxu0 0.0
    %4540 = vmatpush2.msra.mxu0 0.0
    %4541 = vmatprep.mubr.f32.mxu0 0.0
    %4542 = vmatmul.mubr.f32.gmra.mxu0 %v4475
    %v4543 = vpop.f32.mrf.mxu0
    %v4544 = vadd.f32 0.0, %v4543
    %v4545 = vpop.f32.mrf.mxu0
    %4546 = vdwg.mxu0
    %v4547 = vsel %vm1909, %v4328, -inf
    %4548 = vmax.xlane.f32.xlu0 %v4547
    %v4549 = vpop.xlane.xlu0 %4548
    %v4550 = vsel %vm1909, %v4400, -inf
    %4551 = vmax.xlane.f32.xlu0 %v4550
    %v4552 = vpop.xlane.xlu0 %4551
    %v4553 = vsel %vm1909, %v4472, -inf
    %4554 = vmax.xlane.f32.xlu0 %v4553
    %v4555 = vpop.xlane.xlu0 %4554
    %v4556 = vsel %vm1909, %v4544, -inf
    %4557 = vmax.xlane.f32.xlu0 %v4556
    %v4558 = vpop.xlane.xlu0 %4557
    %v4559 = vsub.f32 %v4328, %v4549
    %v4560 = vsub.f32 %v4400, %v4552
    %v4561 = vsub.f32 %v4472, %v4555
    %v4562 = vsub.f32 %v4544, %v4558
    %v4563 = vmul.f32 %v4559, 1.442695
    %v4564 = vpow.pop %v4563
    %v4565 = vmul.f32 %v4560, 1.442695
    %v4566 = vpow.pop %v4565
    %v4567 = vmul.f32 %v4561, 1.442695
    %v4568 = vpow.pop %v4567
    %v4569 = vmul.f32 %v4562, 1.442695
    %v4570 = vpow.pop %v4569
    %v4571 = vsel %vm1909, %v4564, 0.0
    %4572 = vadd.xlane.f32.xlu0 %v4571
    %v4573 = vpop.xlane.xlu0 %4572
    %v4574 = vsel %vm1909, %v4566, 0.0
    %4575 = vadd.xlane.f32.xlu0 %v4574
    %v4576 = vpop.xlane.xlu0 %4575
    %v4577 = vsel %vm1909, %v4568, 0.0
    %4578 = vadd.xlane.f32.xlu0 %v4577
    %v4579 = vpop.xlane.xlu0 %4578
    %v4580 = vsel %vm1909, %v4570, 0.0
    %4581 = vadd.xlane.f32.xlu0 %v4580
    %v4582 = vpop.xlane.xlu0 %4581
    %v4583 = vrcp.pop %v4573
    %v4584 = vrcp.pop %v4576
    %v4585 = vrcp.pop %v4579
    %v4586 = vrcp.pop %v4582
    %v4587 = vmul.f32 %v4564, %v4583
    %v4588 = vmul.f32 %v4566, %v4584
    %v4589 = vmul.f32 %v4568, %v4585
    %v4590 = vmul.f32 %v4570, %v4586
    %4591 = vrot.lane.b32.xlu0 %v4096, 96
    %v4592 = vpop.permute.xlu0 %4591
    %4593 = vrot.lane.b32.xlu0 %v4101, 96
    %v4594 = vpop.permute.xlu0 %4593
    %v4598 = vsel %vm1909, %v4587, 0
    %4600 = vmatprep.subr.mxu0 0.0
    %4601 = vmatpush1.msra.mxu0 0.0
    %4602 = vmatprep.subr.mxu0 0.0
    %4603 = vmatpush1.msra.mxu0 0.0
    %4604 = vmatprep.subr.mxu0 0.0
    %4605 = vmatpush1.msra.mxu0 0.0
    %4606 = vmatprep.subr.mxu0 0.0
    %4607 = vmatpush1.msra.mxu0 0.0
    %4608 = vmatprep.subr.mxu0 0.0
    %4609 = vmatpush1.msra.mxu0 0.0
    %4610 = vmatprep.subr.mxu0 0.0
    %4611 = vmatpush1.msra.mxu0 0.0
    %4612 = vmatprep.subr.mxu0 0.0
    %4613 = vmatpush1.msra.mxu0 0.0
    %4614 = vmatprep.subr.mxu0 0.0
    %4615 = vmatpush1.msra.mxu0 0.0
    %4616 = vmatprep.subr.mxu0 0.0
    %4617 = vmatpush1.msra.mxu0 0.0
    %4618 = vmatprep.subr.mxu0 0.0
    %4619 = vmatpush1.msra.mxu0 0.0
    %4620 = vmatprep.subr.mxu0 0.0
    %4621 = vmatpush1.msra.mxu0 0.0
    %4622 = vmatprep.subr.mxu0 0.0
    %4623 = vmatpush1.msra.mxu0 0.0
    %4624 = vmatprep.subr.mxu0 0.0
    %4625 = vmatpush1.msra.mxu0 0.0
    %4626 = vmatprep.subr.mxu0 0.0
    %4627 = vmatpush1.msra.mxu0 0.0
    %4628 = vmatprep.subr.mxu0 0.0
    %4629 = vmatpush1.msra.mxu0 %v4594
    %4630 = vmatprep.subr.mxu0 0.0
    %4631 = vmatpush1.msra.mxu0 %v4592
    %4632 = vmatprep.subr.mxu0 0.0
    %4633 = vmatpush2.msra.mxu0 0.0
    %4634 = vmatprep.subr.mxu0 0.0
    %4635 = vmatpush2.msra.mxu0 0.0
    %4636 = vmatprep.subr.mxu0 0.0
    %4637 = vmatpush2.msra.mxu0 0.0
    %4638 = vmatprep.subr.mxu0 0.0
    %4639 = vmatpush2.msra.mxu0 0.0
    %4640 = vmatprep.subr.mxu0 0.0
    %4641 = vmatpush2.msra.mxu0 0.0
    %4642 = vmatprep.subr.mxu0 0.0
    %4643 = vmatpush2.msra.mxu0 0.0
    %4644 = vmatprep.subr.mxu0 0.0
    %4645 = vmatpush2.msra.mxu0 0.0
    %4646 = vmatprep.subr.mxu0 0.0
    %4647 = vmatpush2.msra.mxu0 0.0
    %4648 = vmatprep.subr.mxu0 0.0
    %4649 = vmatpush2.msra.mxu0 0.0
    %4650 = vmatprep.subr.mxu0 0.0
    %4651 = vmatpush2.msra.mxu0 0.0
    %4652 = vmatprep.subr.mxu0 0.0
    %4653 = vmatpush2.msra.mxu0 0.0
    %4654 = vmatprep.subr.mxu0 0.0
    %4655 = vmatpush2.msra.mxu0 0.0
    %4656 = vmatprep.subr.mxu0 0.0
    %4657 = vmatpush2.msra.mxu0 0.0
    %4658 = vmatprep.subr.mxu0 0.0
    %4659 = vmatpush2.msra.mxu0 0.0
    %4660 = vmatprep.subr.mxu0 0.0
    %4661 = vmatpush2.msra.mxu0 0.0
    %4662 = vmatprep.subr.mxu0 0.0
    %4663 = vmatpush2.msra.mxu0 0.0
    %4664 = vmatprep.mubr.f32.mxu0 0.0
    %4665 = vmatmul.mubr.f32.gmra.mxu0 %v4598
    %v4666 = vpop.f32.mrf.mxu0
    %v4667 = vadd.f32 0.0, %v4666
    %v4668 = vpop.f32.mrf.mxu0
    %4669 = vdwg.mxu0
    %4670 = vrot.lane.b32.xlu0 %v4114, 96
    %v4671 = vpop.permute.xlu0 %4670
    %4672 = vrot.lane.b32.xlu0 %v4116, 96
    %v4673 = vpop.permute.xlu0 %4672
    %v4677 = vsel %vm1909, %v4588, 0
    %4679 = vmatprep.subr.mxu0 0.0
    %4680 = vmatpush1.msra.mxu0 0.0
    %4681 = vmatprep.subr.mxu0 0.0
    %4682 = vmatpush1.msra.mxu0 0.0
    %4683 = vmatprep.subr.mxu0 0.0
    %4684 = vmatpush1.msra.mxu0 0.0
    %4685 = vmatprep.subr.mxu0 0.0
    %4686 = vmatpush1.msra.mxu0 0.0
    %4687 = vmatprep.subr.mxu0 0.0
    %4688 = vmatpush1.msra.mxu0 0.0
    %4689 = vmatprep.subr.mxu0 0.0
    %4690 = vmatpush1.msra.mxu0 0.0
    %4691 = vmatprep.subr.mxu0 0.0
    %4692 = vmatpush1.msra.mxu0 0.0
    %4693 = vmatprep.subr.mxu0 0.0
    %4694 = vmatpush1.msra.mxu0 0.0
    %4695 = vmatprep.subr.mxu0 0.0
    %4696 = vmatpush1.msra.mxu0 0.0
    %4697 = vmatprep.subr.mxu0 0.0
    %4698 = vmatpush1.msra.mxu0 0.0
    %4699 = vmatprep.subr.mxu0 0.0
    %4700 = vmatpush1.msra.mxu0 0.0
    %4701 = vmatprep.subr.mxu0 0.0
    %4702 = vmatpush1.msra.mxu0 0.0
    %4703 = vmatprep.subr.mxu0 0.0
    %4704 = vmatpush1.msra.mxu0 0.0
    %4705 = vmatprep.subr.mxu0 0.0
    %4706 = vmatpush1.msra.mxu0 0.0
    %4707 = vmatprep.subr.mxu0 0.0
    %4708 = vmatpush1.msra.mxu0 %v4673
    %4709 = vmatprep.subr.mxu0 0.0
    %4710 = vmatpush1.msra.mxu0 %v4671
    %4711 = vmatprep.subr.mxu0 0.0
    %4712 = vmatpush2.msra.mxu0 0.0
    %4713 = vmatprep.subr.mxu0 0.0
    %4714 = vmatpush2.msra.mxu0 0.0
    %4715 = vmatprep.subr.mxu0 0.0
    %4716 = vmatpush2.msra.mxu0 0.0
    %4717 = vmatprep.subr.mxu0 0.0
    %4718 = vmatpush2.msra.mxu0 0.0
    %4719 = vmatprep.subr.mxu0 0.0
    %4720 = vmatpush2.msra.mxu0 0.0
    %4721 = vmatprep.subr.mxu0 0.0
    %4722 = vmatpush2.msra.mxu0 0.0
    %4723 = vmatprep.subr.mxu0 0.0
    %4724 = vmatpush2.msra.mxu0 0.0
    %4725 = vmatprep.subr.mxu0 0.0
    %4726 = vmatpush2.msra.mxu0 0.0
    %4727 = vmatprep.subr.mxu0 0.0
    %4728 = vmatpush2.msra.mxu0 0.0
    %4729 = vmatprep.subr.mxu0 0.0
    %4730 = vmatpush2.msra.mxu0 0.0
    %4731 = vmatprep.subr.mxu0 0.0
    %4732 = vmatpush2.msra.mxu0 0.0
    %4733 = vmatprep.subr.mxu0 0.0
    %4734 = vmatpush2.msra.mxu0 0.0
    %4735 = vmatprep.subr.mxu0 0.0
    %4736 = vmatpush2.msra.mxu0 0.0
    %4737 = vmatprep.subr.mxu0 0.0
    %4738 = vmatpush2.msra.mxu0 0.0
    %4739 = vmatprep.subr.mxu0 0.0
    %4740 = vmatpush2.msra.mxu0 0.0
    %4741 = vmatprep.subr.mxu0 0.0
    %4742 = vmatpush2.msra.mxu0 0.0
    %4743 = vmatprep.mubr.f32.mxu0 0.0
    %4744 = vmatmul.mubr.f32.gmra.mxu0 %v4677
    %v4745 = vpop.f32.mrf.mxu0
    %v4746 = vadd.f32 0.0, %v4745
    %v4747 = vpop.f32.mrf.mxu0
    %4748 = vdwg.mxu0
    %4749 = vrot.lane.b32.xlu0 %v4120, 96
    %v4750 = vpop.permute.xlu0 %4749
    %4751 = vrot.lane.b32.xlu0 %v4122, 96
    %v4752 = vpop.permute.xlu0 %4751
    %v4756 = vsel %vm1909, %v4589, 0
    %4758 = vmatprep.subr.mxu0 0.0
    %4759 = vmatpush1.msra.mxu0 0.0
    %4760 = vmatprep.subr.mxu0 0.0
    %4761 = vmatpush1.msra.mxu0 0.0
    %4762 = vmatprep.subr.mxu0 0.0
    %4763 = vmatpush1.msra.mxu0 0.0
    %4764 = vmatprep.subr.mxu0 0.0
    %4765 = vmatpush1.msra.mxu0 0.0
    %4766 = vmatprep.subr.mxu0 0.0
    %4767 = vmatpush1.msra.mxu0 0.0
    %4768 = vmatprep.subr.mxu0 0.0
    %4769 = vmatpush1.msra.mxu0 0.0
    %4770 = vmatprep.subr.mxu0 0.0
    %4771 = vmatpush1.msra.mxu0 0.0
    %4772 = vmatprep.subr.mxu0 0.0
    %4773 = vmatpush1.msra.mxu0 0.0
    %4774 = vmatprep.subr.mxu0 0.0
    %4775 = vmatpush1.msra.mxu0 0.0
    %4776 = vmatprep.subr.mxu0 0.0
    %4777 = vmatpush1.msra.mxu0 0.0
    %4778 = vmatprep.subr.mxu0 0.0
    %4779 = vmatpush1.msra.mxu0 0.0
    %4780 = vmatprep.subr.mxu0 0.0
    %4781 = vmatpush1.msra.mxu0 0.0
    %4782 = vmatprep.subr.mxu0 0.0
    %4783 = vmatpush1.msra.mxu0 0.0
    %4784 = vmatprep.subr.mxu0 0.0
    %4785 = vmatpush1.msra.mxu0 0.0
    %4786 = vmatprep.subr.mxu0 0.0
    %4787 = vmatpush1.msra.mxu0 %v4752
    %4788 = vmatprep.subr.mxu0 0.0
    %4789 = vmatpush1.msra.mxu0 %v4750
    %4790 = vmatprep.subr.mxu0 0.0
    %4791 = vmatpush2.msra.mxu0 0.0
    %4792 = vmatprep.subr.mxu0 0.0
    %4793 = vmatpush2.msra.mxu0 0.0
    %4794 = vmatprep.subr.mxu0 0.0
    %4795 = vmatpush2.msra.mxu0 0.0
    %4796 = vmatprep.subr.mxu0 0.0
    %4797 = vmatpush2.msra.mxu0 0.0
    %4798 = vmatprep.subr.mxu0 0.0
    %4799 = vmatpush2.msra.mxu0 0.0
    %4800 = vmatprep.subr.mxu0 0.0
    %4801 = vmatpush2.msra.mxu0 0.0
    %4802 = vmatprep.subr.mxu0 0.0
    %4803 = vmatpush2.msra.mxu0 0.0
    %4804 = vmatprep.subr.mxu0 0.0
    %4805 = vmatpush2.msra.mxu0 0.0
    %4806 = vmatprep.subr.mxu0 0.0
    %4807 = vmatpush2.msra.mxu0 0.0
    %4808 = vmatprep.subr.mxu0 0.0
    %4809 = vmatpush2.msra.mxu0 0.0
    %4810 = vmatprep.subr.mxu0 0.0
    %4811 = vmatpush2.msra.mxu0 0.0
    %4812 = vmatprep.subr.mxu0 0.0
    %4813 = vmatpush2.msra.mxu0 0.0
    %4814 = vmatprep.subr.mxu0 0.0
    %4815 = vmatpush2.msra.mxu0 0.0
    %4816 = vmatprep.subr.mxu0 0.0
    %4817 = vmatpush2.msra.mxu0 0.0
    %4818 = vmatprep.subr.mxu0 0.0
    %4819 = vmatpush2.msra.mxu0 0.0
    %4820 = vmatprep.subr.mxu0 0.0
    %4821 = vmatpush2.msra.mxu0 0.0
    %4822 = vmatprep.mubr.f32.mxu0 0.0
    %4823 = vmatmul.mubr.f32.gmra.mxu0 %v4756
    %v4824 = vpop.f32.mrf.mxu0
    %v4825 = vadd.f32 0.0, %v4824
    %v4826 = vpop.f32.mrf.mxu0
    %4827 = vdwg.mxu0
    %4828 = vrot.lane.b32.xlu0 %v4126, 96
    %v4829 = vpop.permute.xlu0 %4828
    %4830 = vrot.lane.b32.xlu0 %v4128, 96
    %v4831 = vpop.permute.xlu0 %4830
    %v4835 = vsel %vm1909, %v4590, 0
    %4837 = vmatprep.subr.mxu0 0.0
    %4838 = vmatpush1.msra.mxu0 0.0
    %4839 = vmatprep.subr.mxu0 0.0
    %4840 = vmatpush1.msra.mxu0 0.0
    %4841 = vmatprep.subr.mxu0 0.0
    %4842 = vmatpush1.msra.mxu0 0.0
    %4843 = vmatprep.subr.mxu0 0.0
    %4844 = vmatpush1.msra.mxu0 0.0
    %4845 = vmatprep.subr.mxu0 0.0
    %4846 = vmatpush1.msra.mxu0 0.0
    %4847 = vmatprep.subr.mxu0 0.0
    %4848 = vmatpush1.msra.mxu0 0.0
    %4849 = vmatprep.subr.mxu0 0.0
    %4850 = vmatpush1.msra.mxu0 0.0
    %4851 = vmatprep.subr.mxu0 0.0
    %4852 = vmatpush1.msra.mxu0 0.0
    %4853 = vmatprep.subr.mxu0 0.0
    %4854 = vmatpush1.msra.mxu0 0.0
    %4855 = vmatprep.subr.mxu0 0.0
    %4856 = vmatpush1.msra.mxu0 0.0
    %4857 = vmatprep.subr.mxu0 0.0
    %4858 = vmatpush1.msra.mxu0 0.0
    %4859 = vmatprep.subr.mxu0 0.0
    %4860 = vmatpush1.msra.mxu0 0.0
    %4861 = vmatprep.subr.mxu0 0.0
    %4862 = vmatpush1.msra.mxu0 0.0
    %4863 = vmatprep.subr.mxu0 0.0
    %4864 = vmatpush1.msra.mxu0 0.0
    %4865 = vmatprep.subr.mxu0 0.0
    %4866 = vmatpush1.msra.mxu0 %v4831
    %4867 = vmatprep.subr.mxu0 0.0
    %4868 = vmatpush1.msra.mxu0 %v4829
    %4869 = vmatprep.subr.mxu0 0.0
    %4870 = vmatpush2.msra.mxu0 0.0
    %4871 = vmatprep.subr.mxu0 0.0
    %4872 = vmatpush2.msra.mxu0 0.0
    %4873 = vmatprep.subr.mxu0 0.0
    %4874 = vmatpush2.msra.mxu0 0.0
    %4875 = vmatprep.subr.mxu0 0.0
    %4876 = vmatpush2.msra.mxu0 0.0
    %4877 = vmatprep.subr.mxu0 0.0
    %4878 = vmatpush2.msra.mxu0 0.0
    %4879 = vmatprep.subr.mxu0 0.0
    %4880 = vmatpush2.msra.mxu0 0.0
    %4881 = vmatprep.subr.mxu0 0.0
    %4882 = vmatpush2.msra.mxu0 0.0
    %4883 = vmatprep.subr.mxu0 0.0
    %4884 = vmatpush2.msra.mxu0 0.0
    %4885 = vmatprep.subr.mxu0 0.0
    %4886 = vmatpush2.msra.mxu0 0.0
    %4887 = vmatprep.subr.mxu0 0.0
    %4888 = vmatpush2.msra.mxu0 0.0
    %4889 = vmatprep.subr.mxu0 0.0
    %4890 = vmatpush2.msra.mxu0 0.0
    %4891 = vmatprep.subr.mxu0 0.0
    %4892 = vmatpush2.msra.mxu0 0.0
    %4893 = vmatprep.subr.mxu0 0.0
    %4894 = vmatpush2.msra.mxu0 0.0
    %4895 = vmatprep.subr.mxu0 0.0
    %4896 = vmatpush2.msra.mxu0 0.0
    %4897 = vmatprep.subr.mxu0 0.0
    %4898 = vmatpush2.msra.mxu0 0.0
    %4899 = vmatprep.subr.mxu0 0.0
    %4900 = vmatpush2.msra.mxu0 0.0
    %4901 = vmatprep.mubr.f32.mxu0 0.0
    %4902 = vmatmul.mubr.f32.gmra.mxu0 %v4835
    %v4903 = vpop.f32.mrf.mxu0
    %v4904 = vadd.f32 0.0, %v4903
    %v4905 = vpop.f32.mrf.mxu0
    %4906 = vdwg.mxu0
    %v4908 = vsel %vm336, %v4667, 0
    %4910 = vmatprep.subr.mxu0 0.0
    %4911 = vmatpush1.msra.mxu0 0.0
    %4912 = vmatprep.subr.mxu0 0.0
    %4913 = vmatpush1.msra.mxu0 0.0
    %4914 = vmatprep.subr.mxu0 0.0
    %4915 = vmatpush1.msra.mxu0 0.0
    %4916 = vmatprep.subr.mxu0 0.0
    %4917 = vmatpush1.msra.mxu0 0.0
    %4918 = vmatprep.subr.mxu0 0.0
    %4919 = vmatpush1.msra.mxu0 0.0
    %4920 = vmatprep.subr.mxu0 0.0
    %4921 = vmatpush1.msra.mxu0 0.0
    %4922 = vmatprep.subr.mxu0 0.0
    %4923 = vmatpush1.msra.mxu0 0.0
    %4924 = vmatprep.subr.mxu0 0.0
    %4925 = vmatpush1.msra.mxu0 0.0
    %4926 = vmatprep.subr.mxu0 0.0
    %4927 = vmatpush1.msra.mxu0 0.0
    %4928 = vmatprep.subr.mxu0 0.0
    %4929 = vmatpush1.msra.mxu0 0.0
    %4930 = vmatprep.subr.mxu0 0.0
    %4931 = vmatpush1.msra.mxu0 0.0
    %4932 = vmatprep.subr.mxu0 0.0
    %4933 = vmatpush1.msra.mxu0 0.0
    %4934 = vmatprep.subr.mxu0 0.0
    %4935 = vmatpush1.msra.mxu0 0.0
    %4936 = vmatprep.subr.mxu0 0.0
    %4937 = vmatpush1.msra.mxu0 0.0
    %4938 = vmatprep.subr.mxu0 0.0
    %4939 = vmatpush1.msra.mxu0 0.0
    %4940 = vmatprep.subr.mxu0 0.0
    %4941 = vmatpush1.msra.mxu0 %v76
    %4942 = vmatprep.subr.mxu0 0.0
    %4943 = vmatpush2.msra.mxu0 0.0
    %4944 = vmatprep.subr.mxu0 0.0
    %4945 = vmatpush2.msra.mxu0 0.0
    %4946 = vmatprep.subr.mxu0 0.0
    %4947 = vmatpush2.msra.mxu0 0.0
    %4948 = vmatprep.subr.mxu0 0.0
    %4949 = vmatpush2.msra.mxu0 0.0
    %4950 = vmatprep.subr.mxu0 0.0
    %4951 = vmatpush2.msra.mxu0 0.0
    %4952 = vmatprep.subr.mxu0 0.0
    %4953 = vmatpush2.msra.mxu0 0.0
    %4954 = vmatprep.subr.mxu0 0.0
    %4955 = vmatpush2.msra.mxu0 0.0
    %4956 = vmatprep.subr.mxu0 0.0
    %4957 = vmatpush2.msra.mxu0 0.0
    %4958 = vmatprep.subr.mxu0 0.0
    %4959 = vmatpush2.msra.mxu0 0.0
    %4960 = vmatprep.subr.mxu0 0.0
    %4961 = vmatpush2.msra.mxu0 0.0
    %4962 = vmatprep.subr.mxu0 0.0
    %4963 = vmatpush2.msra.mxu0 0.0
    %4964 = vmatprep.subr.mxu0 0.0
    %4965 = vmatpush2.msra.mxu0 0.0
    %4966 = vmatprep.subr.mxu0 0.0
    %4967 = vmatpush2.msra.mxu0 0.0
    %4968 = vmatprep.subr.mxu0 0.0
    %4969 = vmatpush2.msra.mxu0 0.0
    %4970 = vmatprep.subr.mxu0 0.0
    %4971 = vmatpush2.msra.mxu0 0.0
    %4972 = vmatprep.subr.mxu0 0.0
    %4973 = vmatpush2.msra.mxu0 0.0
    %4974 = vmatprep.mubr.f32.mxu0 0.0
    %4975 = vmatmul.mubr.f32.gmra.mxu0 %v4908
    %v4976 = vpop.f32.mrf.mxu0
    %v4977 = vadd.f32 0.0, %v4976
    %v4978 = vpop.f32.mrf.mxu0
    %4979 = vdwg.mxu0
    %v4981 = vsel %vm336, %v4746, 0
    %4983 = vmatprep.subr.mxu0 0.0
    %4984 = vmatpush1.msra.mxu0 0.0
    %4985 = vmatprep.subr.mxu0 0.0
    %4986 = vmatpush1.msra.mxu0 0.0
    %4987 = vmatprep.subr.mxu0 0.0
    %4988 = vmatpush1.msra.mxu0 0.0
    %4989 = vmatprep.subr.mxu0 0.0
    %4990 = vmatpush1.msra.mxu0 0.0
    %4991 = vmatprep.subr.mxu0 0.0
    %4992 = vmatpush1.msra.mxu0 0.0
    %4993 = vmatprep.subr.mxu0 0.0
    %4994 = vmatpush1.msra.mxu0 0.0
    %4995 = vmatprep.subr.mxu0 0.0
    %4996 = vmatpush1.msra.mxu0 0.0
    %4997 = vmatprep.subr.mxu0 0.0
    %4998 = vmatpush1.msra.mxu0 0.0
    %4999 = vmatprep.subr.mxu0 0.0
    %5000 = vmatpush1.msra.mxu0 0.0
    %5001 = vmatprep.subr.mxu0 0.0
    %5002 = vmatpush1.msra.mxu0 0.0
    %5003 = vmatprep.subr.mxu0 0.0
    %5004 = vmatpush1.msra.mxu0 0.0
    %5005 = vmatprep.subr.mxu0 0.0
    %5006 = vmatpush1.msra.mxu0 0.0
    %5007 = vmatprep.subr.mxu0 0.0
    %5008 = vmatpush1.msra.mxu0 0.0
    %5009 = vmatprep.subr.mxu0 0.0
    %5010 = vmatpush1.msra.mxu0 0.0
    %5011 = vmatprep.subr.mxu0 0.0
    %5012 = vmatpush1.msra.mxu0 0.0
    %5013 = vmatprep.subr.mxu0 0.0
    %5014 = vmatpush1.msra.mxu0 %v77
    %5015 = vmatprep.subr.mxu0 0.0
    %5016 = vmatpush2.msra.mxu0 0.0
    %5017 = vmatprep.subr.mxu0 0.0
    %5018 = vmatpush2.msra.mxu0 0.0
    %5019 = vmatprep.subr.mxu0 0.0
    %5020 = vmatpush2.msra.mxu0 0.0
    %5021 = vmatprep.subr.mxu0 0.0
    %5022 = vmatpush2.msra.mxu0 0.0
    %5023 = vmatprep.subr.mxu0 0.0
    %5024 = vmatpush2.msra.mxu0 0.0
    %5025 = vmatprep.subr.mxu0 0.0
    %5026 = vmatpush2.msra.mxu0 0.0
    %5027 = vmatprep.subr.mxu0 0.0
    %5028 = vmatpush2.msra.mxu0 0.0
    %5029 = vmatprep.subr.mxu0 0.0
    %5030 = vmatpush2.msra.mxu0 0.0
    %5031 = vmatprep.subr.mxu0 0.0
    %5032 = vmatpush2.msra.mxu0 0.0
    %5033 = vmatprep.subr.mxu0 0.0
    %5034 = vmatpush2.msra.mxu0 0.0
    %5035 = vmatprep.subr.mxu0 0.0
    %5036 = vmatpush2.msra.mxu0 0.0
    %5037 = vmatprep.subr.mxu0 0.0
    %5038 = vmatpush2.msra.mxu0 0.0
    %5039 = vmatprep.subr.mxu0 0.0
    %5040 = vmatpush2.msra.mxu0 0.0
    %5041 = vmatprep.subr.mxu0 0.0
    %5042 = vmatpush2.msra.mxu0 0.0
    %5043 = vmatprep.subr.mxu0 0.0
    %5044 = vmatpush2.msra.mxu0 0.0
    %5045 = vmatprep.subr.mxu0 0.0
    %5046 = vmatpush2.msra.mxu0 0.0
    %5047 = vmatprep.mubr.f32.mxu0 0.0
    %5048 = vmatmul.mubr.f32.gmra.mxu0 %v4981
    %v5049 = vpop.f32.mrf.mxu0
    %v5050 = vadd.f32 0.0, %v5049
    %v5051 = vpop.f32.mrf.mxu0
    %5052 = vdwg.mxu0
    %v5054 = vsel %vm336, %v4825, 0
    %5056 = vmatprep.subr.mxu0 0.0
    %5057 = vmatpush1.msra.mxu0 0.0
    %5058 = vmatprep.subr.mxu0 0.0
    %5059 = vmatpush1.msra.mxu0 0.0
    %5060 = vmatprep.subr.mxu0 0.0
    %5061 = vmatpush1.msra.mxu0 0.0
    %5062 = vmatprep.subr.mxu0 0.0
    %5063 = vmatpush1.msra.mxu0 0.0
    %5064 = vmatprep.subr.mxu0 0.0
    %5065 = vmatpush1.msra.mxu0 0.0
    %5066 = vmatprep.subr.mxu0 0.0
    %5067 = vmatpush1.msra.mxu0 0.0
    %5068 = vmatprep.subr.mxu0 0.0
    %5069 = vmatpush1.msra.mxu0 0.0
    %5070 = vmatprep.subr.mxu0 0.0
    %5071 = vmatpush1.msra.mxu0 0.0
    %5072 = vmatprep.subr.mxu0 0.0
    %5073 = vmatpush1.msra.mxu0 0.0
    %5074 = vmatprep.subr.mxu0 0.0
    %5075 = vmatpush1.msra.mxu0 0.0
    %5076 = vmatprep.subr.mxu0 0.0
    %5077 = vmatpush1.msra.mxu0 0.0
    %5078 = vmatprep.subr.mxu0 0.0
    %5079 = vmatpush1.msra.mxu0 0.0
    %5080 = vmatprep.subr.mxu0 0.0
    %5081 = vmatpush1.msra.mxu0 0.0
    %5082 = vmatprep.subr.mxu0 0.0
    %5083 = vmatpush1.msra.mxu0 0.0
    %5084 = vmatprep.subr.mxu0 0.0
    %5085 = vmatpush1.msra.mxu0 0.0
    %5086 = vmatprep.subr.mxu0 0.0
    %5087 = vmatpush1.msra.mxu0 %v78
    %5088 = vmatprep.subr.mxu0 0.0
    %5089 = vmatpush2.msra.mxu0 0.0
    %5090 = vmatprep.subr.mxu0 0.0
    %5091 = vmatpush2.msra.mxu0 0.0
    %5092 = vmatprep.subr.mxu0 0.0
    %5093 = vmatpush2.msra.mxu0 0.0
    %5094 = vmatprep.subr.mxu0 0.0
    %5095 = vmatpush2.msra.mxu0 0.0
    %5096 = vmatprep.subr.mxu0 0.0
    %5097 = vmatpush2.msra.mxu0 0.0
    %5098 = vmatprep.subr.mxu0 0.0
    %5099 = vmatpush2.msra.mxu0 0.0
    %5100 = vmatprep.subr.mxu0 0.0
    %5101 = vmatpush2.msra.mxu0 0.0
    %5102 = vmatprep.subr.mxu0 0.0
    %5103 = vmatpush2.msra.mxu0 0.0
    %5104 = vmatprep.subr.mxu0 0.0
    %5105 = vmatpush2.msra.mxu0 0.0
    %5106 = vmatprep.subr.mxu0 0.0
    %5107 = vmatpush2.msra.mxu0 0.0
    %5108 = vmatprep.subr.mxu0 0.0
    %5109 = vmatpush2.msra.mxu0 0.0
    %5110 = vmatprep.subr.mxu0 0.0
    %5111 = vmatpush2.msra.mxu0 0.0
    %5112 = vmatprep.subr.mxu0 0.0
    %5113 = vmatpush2.msra.mxu0 0.0
    %5114 = vmatprep.subr.mxu0 0.0
    %5115 = vmatpush2.msra.mxu0 0.0
    %5116 = vmatprep.subr.mxu0 0.0
    %5117 = vmatpush2.msra.mxu0 0.0
    %5118 = vmatprep.subr.mxu0 0.0
    %5119 = vmatpush2.msra.mxu0 0.0
    %5120 = vmatprep.mubr.f32.mxu0 0.0
    %5121 = vmatmul.mubr.f32.gmra.mxu0 %v5054
    %v5122 = vpop.f32.mrf.mxu0
    %v5123 = vadd.f32 0.0, %v5122
    %v5124 = vpop.f32.mrf.mxu0
    %5125 = vdwg.mxu0
    %v5127 = vsel %vm336, %v4904, 0
    %5129 = vmatprep.subr.mxu0 0.0
    %5130 = vmatpush1.msra.mxu0 0.0
    %5131 = vmatprep.subr.mxu0 0.0
    %5132 = vmatpush1.msra.mxu0 0.0
    %5133 = vmatprep.subr.mxu0 0.0
    %5134 = vmatpush1.msra.mxu0 0.0
    %5135 = vmatprep.subr.mxu0 0.0
    %5136 = vmatpush1.msra.mxu0 0.0
    %5137 = vmatprep.subr.mxu0 0.0
    %5138 = vmatpush1.msra.mxu0 0.0
    %5139 = vmatprep.subr.mxu0 0.0
    %5140 = vmatpush1.msra.mxu0 0.0
    %5141 = vmatprep.subr.mxu0 0.0
    %5142 = vmatpush1.msra.mxu0 0.0
    %5143 = vmatprep.subr.mxu0 0.0
    %5144 = vmatpush1.msra.mxu0 0.0
    %5145 = vmatprep.subr.mxu0 0.0
    %5146 = vmatpush1.msra.mxu0 0.0
    %5147 = vmatprep.subr.mxu0 0.0
    %5148 = vmatpush1.msra.mxu0 0.0
    %5149 = vmatprep.subr.mxu0 0.0
    %5150 = vmatpush1.msra.mxu0 0.0
    %5151 = vmatprep.subr.mxu0 0.0
    %5152 = vmatpush1.msra.mxu0 0.0
    %5153 = vmatprep.subr.mxu0 0.0
    %5154 = vmatpush1.msra.mxu0 0.0
    %5155 = vmatprep.subr.mxu0 0.0
    %5156 = vmatpush1.msra.mxu0 0.0
    %5157 = vmatprep.subr.mxu0 0.0
    %5158 = vmatpush1.msra.mxu0 0.0
    %5159 = vmatprep.subr.mxu0 0.0
    %5160 = vmatpush1.msra.mxu0 %v79
    %5161 = vmatprep.subr.mxu0 0.0
    %5162 = vmatpush2.msra.mxu0 0.0
    %5163 = vmatprep.subr.mxu0 0.0
    %5164 = vmatpush2.msra.mxu0 0.0
    %5165 = vmatprep.subr.mxu0 0.0
    %5166 = vmatpush2.msra.mxu0 0.0
    %5167 = vmatprep.subr.mxu0 0.0
    %5168 = vmatpush2.msra.mxu0 0.0
    %5169 = vmatprep.subr.mxu0 0.0
    %5170 = vmatpush2.msra.mxu0 0.0
    %5171 = vmatprep.subr.mxu0 0.0
    %5172 = vmatpush2.msra.mxu0 0.0
    %5173 = vmatprep.subr.mxu0 0.0
    %5174 = vmatpush2.msra.mxu0 0.0
    %5175 = vmatprep.subr.mxu0 0.0
    %5176 = vmatpush2.msra.mxu0 0.0
    %5177 = vmatprep.subr.mxu0 0.0
    %5178 = vmatpush2.msra.mxu0 0.0
    %5179 = vmatprep.subr.mxu0 0.0
    %5180 = vmatpush2.msra.mxu0 0.0
    %5181 = vmatprep.subr.mxu0 0.0
    %5182 = vmatpush2.msra.mxu0 0.0
    %5183 = vmatprep.subr.mxu0 0.0
    %5184 = vmatpush2.msra.mxu0 0.0
    %5185 = vmatprep.subr.mxu0 0.0
    %5186 = vmatpush2.msra.mxu0 0.0
    %5187 = vmatprep.subr.mxu0 0.0
    %5188 = vmatpush2.msra.mxu0 0.0
    %5189 = vmatprep.subr.mxu0 0.0
    %5190 = vmatpush2.msra.mxu0 0.0
    %5191 = vmatprep.subr.mxu0 0.0
    %5192 = vmatpush2.msra.mxu0 0.0
    %5193 = vmatprep.mubr.f32.mxu0 0.0
    %5194 = vmatmul.mubr.f32.gmra.mxu0 %v5127
    %v5195 = vpop.f32.mrf.mxu0
    %v5196 = vadd.f32 0.0, %v5195
    %v5197 = vpop.f32.mrf.mxu0
    %5198 = vdwg.mxu0
    %v5199 = vsel %vm91, %v4977, 0.0
    %v5200 = vsel %vm91, %v5050, 0.0
    %v5201 = vadd.f32 %v5199, %v5200
    %v5202 = vsel %vm91, %v5123, 0.0
    %v5203 = vadd.f32 %v5201, %v5202
    %v5204 = vsel %vm91, %v5196, 0.0
    %v5205 = vadd.f32 %v5203, %v5204
    %v5206 = vadd.f32 %v3934, %v5205
    %v5207 = vsel %vm91, %v5206, 0.0
    %5208 = vadd.xlane.f32.xlu0 %v5207
    %v5209 = vpop.xlane.xlu0 %5208
    %v5210 = vmul.f32 %v5209, %v95
    %v5211 = vsub.f32 %v5206, %v5210
    %v5212 = vmul.f32 %v5211, %v5211
    %v5213 = vsel %vm91, %v5212, 0.0
    %5214 = vadd.xlane.f32.xlu0 %v5213
    %v5215 = vpop.xlane.xlu0 %5214
    %v5216 = vmul.f32 %v5215, %v95
    %v5217 = vadd.f32 %v5216, 1e-05
    %v5218 = vrsqrt.pop %v5217
    %v5219 = vmul.f32 %v5211, %v5218
    %v5220 = vmul.f32 %v5219, %v2586
    %v5221 = vadd.f32 %v5220, %v2591
    %v5223 = vsel %vm91, %v5221, 0
    %5225 = vmatprep.subr.mxu0 0.0
    %5226 = vmatpush1.msra.mxu0 0.0
    %5227 = vmatprep.subr.mxu0 0.0
    %5228 = vmatpush1.msra.mxu0 0.0
    %5229 = vmatprep.subr.mxu0 0.0
    %5230 = vmatpush1.msra.mxu0 0.0
    %5231 = vmatprep.subr.mxu0 0.0
    %5232 = vmatpush1.msra.mxu0 0.0
    %5233 = vmatprep.subr.mxu0 0.0
    %5234 = vmatpush1.msra.mxu0 0.0
    %5235 = vmatprep.subr.mxu0 0.0
    %5236 = vmatpush1.msra.mxu0 0.0
    %5237 = vmatprep.subr.mxu0 0.0
    %5238 = vmatpush1.msra.mxu0 0.0
    %5239 = vmatprep.subr.mxu0 0.0
    %5240 = vmatpush1.msra.mxu0 0.0
    %5241 = vmatprep.subr.mxu0 0.0
    %5242 = vmatpush1.msra.mxu0 0.0
    %5243 = vmatprep.subr.mxu0 0.0
    %5244 = vmatpush1.msra.mxu0 0.0
    %5245 = vmatprep.subr.mxu0 0.0
    %5246 = vmatpush1.msra.mxu0 0.0
    %5247 = vmatprep.subr.mxu0 0.0
    %5248 = vmatpush1.msra.mxu0 0.0
    %5249 = vmatprep.subr.mxu0 0.0
    %5250 = vmatpush1.msra.mxu0 %v2604
    %5251 = vmatprep.subr.mxu0 0.0
    %5252 = vmatpush1.msra.mxu0 %v2602
    %5253 = vmatprep.subr.mxu0 0.0
    %5254 = vmatpush1.msra.mxu0 %v2600
    %5255 = vmatprep.subr.mxu0 0.0
    %5256 = vmatpush1.msra.mxu0 %v2598
    %5257 = vmatprep.subr.mxu0 0.0
    %5258 = vmatpush2.msra.mxu0 0.0
    %5259 = vmatprep.subr.mxu0 0.0
    %5260 = vmatpush2.msra.mxu0 0.0
    %5261 = vmatprep.subr.mxu0 0.0
    %5262 = vmatpush2.msra.mxu0 0.0
    %5263 = vmatprep.subr.mxu0 0.0
    %5264 = vmatpush2.msra.mxu0 0.0
    %5265 = vmatprep.subr.mxu0 0.0
    %5266 = vmatpush2.msra.mxu0 0.0
    %5267 = vmatprep.subr.mxu0 0.0
    %5268 = vmatpush2.msra.mxu0 0.0
    %5269 = vmatprep.subr.mxu0 0.0
    %5270 = vmatpush2.msra.mxu0 0.0
    %5271 = vmatprep.subr.mxu0 0.0
    %5272 = vmatpush2.msra.mxu0 0.0
    %5273 = vmatprep.subr.mxu0 0.0
    %5274 = vmatpush2.msra.mxu0 0.0
    %5275 = vmatprep.subr.mxu0 0.0
    %5276 = vmatpush2.msra.mxu0 0.0
    %5277 = vmatprep.subr.mxu0 0.0
    %5278 = vmatpush2.msra.mxu0 0.0
    %5279 = vmatprep.subr.mxu0 0.0
    %5280 = vmatpush2.msra.mxu0 0.0
    %5281 = vmatprep.subr.mxu0 0.0
    %5282 = vmatpush2.msra.mxu0 0.0
    %5283 = vmatprep.subr.mxu0 0.0
    %5284 = vmatpush2.msra.mxu0 0.0
    %5285 = vmatprep.subr.mxu0 0.0
    %5286 = vmatpush2.msra.mxu0 0.0
    %5287 = vmatprep.subr.mxu0 0.0
    %5288 = vmatpush2.msra.mxu0 0.0
    %5289 = vmatprep.mubr.f32.mxu0 0.0
    %5290 = vmatmul.mubr.f32.gmra.mxu0 %v5223
    %v5291 = vpop.f32.mrf.mxu0
    %v5292 = vadd.f32 0.0, %v5291
    %v5293 = vpop.f32.mrf.mxu0
    %5294 = vdwg.mxu0
    %v5295 = vmax.f32 %v5292, 0.0
    %v5297 = vsel %vm2683, %v5295, 0
    %5299 = vmatprep.subr.mxu0 0.0
    %5300 = vmatpush1.msra.mxu0 0.0
    %5301 = vmatprep.subr.mxu0 0.0
    %5302 = vmatpush1.msra.mxu0 0.0
    %5303 = vmatprep.subr.mxu0 0.0
    %5304 = vmatpush1.msra.mxu0 0.0
    %5305 = vmatprep.subr.mxu0 0.0
    %5306 = vmatpush1.msra.mxu0 0.0
    %5307 = vmatprep.subr.mxu0 0.0
    %5308 = vmatpush1.msra.mxu0 0.0
    %5309 = vmatprep.subr.mxu0 0.0
    %5310 = vmatpush1.msra.mxu0 0.0
    %5311 = vmatprep.subr.mxu0 0.0
    %5312 = vmatpush1.msra.mxu0 0.0
    %5313 = vmatprep.subr.mxu0 0.0
    %5314 = vmatpush1.msra.mxu0 0.0
    %5315 = vmatprep.subr.mxu0 0.0
    %5316 = vmatpush1.msra.mxu0 %v87
    %5317 = vmatprep.subr.mxu0 0.0
    %5318 = vmatpush1.msra.mxu0 %v86
    %5319 = vmatprep.subr.mxu0 0.0
    %5320 = vmatpush1.msra.mxu0 %v85
    %5321 = vmatprep.subr.mxu0 0.0
    %5322 = vmatpush1.msra.mxu0 %v84
    %5323 = vmatprep.subr.mxu0 0.0
    %5324 = vmatpush1.msra.mxu0 %v83
    %5325 = vmatprep.subr.mxu0 0.0
    %5326 = vmatpush1.msra.mxu0 %v82
    %5327 = vmatprep.subr.mxu0 0.0
    %5328 = vmatpush1.msra.mxu0 %v81
    %5329 = vmatprep.subr.mxu0 0.0
    %5330 = vmatpush1.msra.mxu0 %v80
    %5331 = vmatprep.subr.mxu0 0.0
    %5332 = vmatpush2.msra.mxu0 0.0
    %5333 = vmatprep.subr.mxu0 0.0
    %5334 = vmatpush2.msra.mxu0 0.0
    %5335 = vmatprep.subr.mxu0 0.0
    %5336 = vmatpush2.msra.mxu0 0.0
    %5337 = vmatprep.subr.mxu0 0.0
    %5338 = vmatpush2.msra.mxu0 0.0
    %5339 = vmatprep.subr.mxu0 0.0
    %5340 = vmatpush2.msra.mxu0 0.0
    %5341 = vmatprep.subr.mxu0 0.0
    %5342 = vmatpush2.msra.mxu0 0.0
    %5343 = vmatprep.subr.mxu0 0.0
    %5344 = vmatpush2.msra.mxu0 0.0
    %5345 = vmatprep.subr.mxu0 0.0
    %5346 = vmatpush2.msra.mxu0 0.0
    %5347 = vmatprep.subr.mxu0 0.0
    %5348 = vmatpush2.msra.mxu0 0.0
    %5349 = vmatprep.subr.mxu0 0.0
    %5350 = vmatpush2.msra.mxu0 0.0
    %5351 = vmatprep.subr.mxu0 0.0
    %5352 = vmatpush2.msra.mxu0 0.0
    %5353 = vmatprep.subr.mxu0 0.0
    %5354 = vmatpush2.msra.mxu0 0.0
    %5355 = vmatprep.subr.mxu0 0.0
    %5356 = vmatpush2.msra.mxu0 0.0
    %5357 = vmatprep.subr.mxu0 0.0
    %5358 = vmatpush2.msra.mxu0 0.0
    %5359 = vmatprep.subr.mxu0 0.0
    %5360 = vmatpush2.msra.mxu0 0.0
    %5361 = vmatprep.subr.mxu0 0.0
    %5362 = vmatpush2.msra.mxu0 0.0
    %5363 = vmatprep.mubr.f32.mxu0 0.0
    %5364 = vmatmul.mubr.f32.gmra.mxu0 %v5297
    %v5365 = vpop.f32.mrf.mxu0
    %v5366 = vadd.f32 0.0, %v5365
    %v5367 = vpop.f32.mrf.mxu0
    %5368 = vdwg.mxu0
    %v5369 = vadd.f32 %v5206, %v5366
    %s5370 = scalar_lea.vmem [#allocation8], 8
    %5371 = vst.msk [vmem:[%s5370] sm:$0xff] %vm91, %v5369
    // Predicated region
    $region38: #{tpu_custom_call.1} parent=1 // pred_check
      _
    $region39: #{tpu_custom_call.1} parent=1 // pred_check_branch
      %5373 = sbr.rel (0) target = $region41
    $region40: #{tpu_custom_call.1} parent=1 // pred_region
      %s5375 = ssub.s32 256, 256
      %5376 = vsyncadd [#allocation4], %s5375
      %s5377 = sshll.u32 [#allocation8], 4
      %s5378 = int_to_ptr.vmem [resolvable:$true] %s5377
      %5383 = dma.vmem_to_hbm [thread:$0]  %s5378, 256, %s6, [#allocation4], 128, 128, 8
    $region41: #{tpu_custom_call.1} parent=1 // pred_fallthru
      _
    // Predicated region
    $region42: #{tpu_custom_call.1} parent=1 // pred_check
      _
    $region43: #{tpu_custom_call.1} parent=1 // pred_check_branch
      %5385 = sbr.rel (0) target = $region45
    $region44: #{tpu_custom_call.1} parent=1 // pred_region
      %5386 = dma.done [#allocation4], 256
    $region45: #{tpu_custom_call.1} parent=1 // pred_fallthru
      _
    %5387 = vsyncpa [#allocation3], 1
    %5388 = vsyncpa [#allocation6], 1
    %5389 = vsyncpa [#allocation4], 1

</llo_original>
